<compile_context>
chip_gen: v5e
topology: v5e:2x2
jax: 0.10.0
libtpu: 0.0.40
codegen_flags: <defaults>
</compile_context>

<pallas_src>
import jax
import jax.numpy as jnp
from jax.experimental import pallas as pl
from jax.experimental.pallas import tpu as pltpu

IN_HW = 20     # input spatial size of vmap / agentTask (implied by "m20x20stack")
OUT_HW = 100   # hard-coded interpolate target size in the module
SCALE = OUT_HW // IN_HW  # 5 -> nearest src index = dst // 5


def _fuse_kernel(atraj_ref, vmap_ref, task_ref, out_ref):
    # atraj_ref : (TB, C3, 100, 100)   high-res trajectory channels (pass-through)
    # vmap_ref  : (TB, Cv*20, 20)      vmap channels, rows stacked per channel
    # task_ref  : (TB, Ct*20, 20)      agentTask channels, rows stacked per channel
    # out_ref   : (TB, C3+Cv+Ct, 100, 100)
    tb = atraj_ref.shape[0]
    c3 = atraj_ref.shape[1]
    cv = vmap_ref.shape[1] // IN_HW
    ct = task_ref.shape[1] // IN_HW

    # --- atraj pass-through: one bulk block copy (no per-channel loop). ---
    out_ref[:, :c3] = atraj_ref[...]

    # --- 0/1 nearest-neighbour selection matrices, built once from 2-D iotas. ---
    # rw[s, w] = (w // SCALE == s)   -> lane (W) upsample:    y = x @ rw
    # rh[h, s] = (h // SCALE == s)   -> sublane (H) upsample: z = rh @ y
    w_dst = jax.lax.broadcasted_iota(jnp.int32, (IN_HW, OUT_HW), 1)
    w_src = jax.lax.broadcasted_iota(jnp.int32, (IN_HW, OUT_HW), 0) * SCALE
    rw = ((w_dst >= w_src) & (w_dst < w_src + SCALE)).astype(jnp.float32)

    h_dst = jax.lax.broadcasted_iota(jnp.int32, (OUT_HW, IN_HW), 0)
    h_src = jax.lax.broadcasted_iota(jnp.int32, (OUT_HW, IN_HW), 1) * SCALE
    rh = ((h_dst >= h_src) & (h_dst < h_src + SCALE)).astype(jnp.float32)

    hi = jax.lax.Precision.HIGHEST  # keep f32 pixels exact on bf16-native MXUs

    # Small static loops (tb is capped in the wrapper, channel counts are tiny) so
    # the LLO scheduler sees a flat, fully unrolled trace of plain 2-D matmuls and
    # one bulk (100, 100) store per channel.
    for x_ref, n_ch, ch_off in ((vmap_ref, cv, c3), (task_ref, ct, c3 + cv)):
        for bb in range(tb):
            x2 = x_ref[bb].astype(jnp.float32)                    # (n_ch*20, 20)
            # W (lane) direction for ALL channels of this sample in one matmul.
            y = jnp.dot(x2, rw, precision=hi,
                        preferred_element_type=jnp.float32)       # (n_ch*20, 100)
            for c in range(n_ch):
                yc = y[c * IN_HW:(c + 1) * IN_HW, :]              # (20, 100)
                # H (sublane) direction as a second 0/1 matmul (MXU is idle), then
                # a single bulk store of the whole (100, 100) channel image.
                zc = jnp.dot(rh, yc, precision=hi,
                             preferred_element_type=jnp.float32)  # (100, 100)
                out_ref[bb, ch_off + c] = zc.astype(out_ref.dtype)


def _padded_plane_bytes(rows, cols, itemsize):
    """VMEM footprint of a (rows, cols) tile: sublanes pad to 8, lanes to 128."""
    sub = -(-rows // 8) * 8
    lane = -(-cols // 128) * 128
    return sub * lane * itemsize


def _device_vmem_and_cores():
    """Best-effort device query; conservative fallbacks if unavailable."""
    vmem_cap = 64 * 1024 * 1024
    try:
        info = pltpu.get_tpu_info()
        vmem_cap = int(info.vmem_capacity_bytes)
    except Exception:
        pass
    num_cores = 1
    try:
        dev = jax.devices()[0]
        for attr in ("num_cores", "core_count", "cores_per_chip"):
            v = getattr(dev, attr, None)
            if isinstance(v, int) and v > 0:
                num_cores = v
                break
    except Exception:
        pass
    return vmem_cap, max(1, num_cores)


def _choose_tb(n, per_sample_bytes, block_budget_bytes, num_cores, max_tb=8):
    """Largest divisor of n whose double-buffered blocks fit the padded-VMEM budget,
    preferring >= 2 grid steps per TensorCore (pipelining / megacore split)."""
    divisors = [d for d in range(1, n + 1) if n % d == 0]
    fits = [d for d in divisors
            if d <= max_tb and 2 * d * per_sample_bytes <= block_budget_bytes]
    if not fits:
        return 1
    target_steps = 2 * num_cores
    good = [d for d in fits if (n // d) >= target_steps and (n // d) % num_cores == 0]
    if good:
        return max(good)
    good = [d for d in fits if (n // d) % num_cores == 0]
    if good:
        return max(good)
    return max(fits)


def features2task_tensors(vmap_img, agent_task, atraj, aparms):
    """Pallas implementation of Features2TaskTensors.forward."""
    del aparms  # dropped by the torch forward
    n, c3, oh, ow = atraj.shape
    assert (oh, ow) == (OUT_HW, OUT_HW)
    nv, cv, hv, wv = vmap_img.shape
    nt, ct, ht, wt = agent_task.shape
    assert nv == n and nt == n
    assert (hv, wv) == (IN_HW, IN_HW) and (ht, wt) == (IN_HW, IN_HW)
    ctot = c3 + cv + ct

    # Free dimension-merge reshapes (done in XLA, outside the kernel): each sample
    # becomes a clean 2-D matmul LHS (C*20, 20).  Last two block dims equal the
    # full array dims, so any batch tile TB satisfies the (8, 128) BlockSpec rule.
    vmap2 = vmap_img.reshape(n, cv * IN_HW, IN_HW)
    task2 = agent_task.reshape(n, ct * IN_HW, IN_HW)

    out_isz = jnp.dtype(atraj.dtype).itemsize
    vm_isz = jnp.dtype(vmap_img.dtype).itemsize
    tk_isz = jnp.dtype(agent_task.dtype).itemsize

    # Padding-aware per-sample VMEM block bytes (single buffer; x2 for pipelining).
    plane_hi = _padded_plane_bytes(OUT_HW, OUT_HW, out_isz)
    per_sample_bytes = (c3 * plane_hi                                  # atraj in
                        + ctot * plane_hi                              # output
                        + _padded_plane_bytes(cv * IN_HW, IN_HW, vm_isz)
                        + _padded_plane_bytes(ct * IN_HW, IN_HW, tk_isz))

    vmem_cap, num_cores = _device_vmem_and_cores()
    # Scoped VMEM limit: 3/4 of physical, capped at 96 MiB (v5e/v6e: 96 MiB,
    # v7x: 48 MiB of its 64 MiB/TC).
    vmem_limit = min(96 * 1024 * 1024, (3 * vmem_cap) // 4)
    headroom = 4 * 1024 * 1024  # selection matrices, intermediates, compiler scratch
    block_budget = max(vmem_limit - headroom, 8 * 1024 * 1024)

    tb = _choose_tb(n, per_sample_bytes, block_budget, num_cores)
    grid = (n // tb,)

    cost = pl.CostEstimate(
        flops=2 * n * (cv + ct) * IN_HW * OUT_HW * (IN_HW + OUT_HW),
        transcendentals=0,
        bytes_accessed=(n * c3 * OUT_HW * OUT_HW * out_isz            # atraj read
                        + n * cv * IN_HW * IN_HW * vm_isz             # vmap read
                        + n * ct * IN_HW * IN_HW * tk_isz             # task read
                        + n * ctot * OUT_HW * OUT_HW * out_isz))      # output write

    out = pl.pallas_call(
        _fuse_kernel,
        out_shape=jax.ShapeDtypeStruct((n, ctot, OUT_HW, OUT_HW), atraj.dtype),
        grid_spec=pltpu.PrefetchScalarGridSpec(
            num_scalar_prefetch=0,
            grid=grid,
            in_specs=[
                pl.BlockSpec((tb, c3, OUT_HW, OUT_HW), lambda b: (b, 0, 0, 0)),
                pl.BlockSpec((tb, cv * IN_HW, IN_HW), lambda b: (b, 0, 0)),
                pl.BlockSpec((tb, ct * IN_HW, IN_HW), lambda b: (b, 0, 0)),
            ],
            out_specs=pl.BlockSpec((tb, ctot, OUT_HW, OUT_HW),
                                   lambda b: (b, 0, 0, 0)),
        ),
        compiler_params=pltpu.CompilerParams(
            dimension_semantics=("parallel",),
            vmem_limit_bytes=int(vmem_limit),
        ),
        cost_estimate=cost,
    )(atraj, vmap2, task2)

    return out, atraj


if __name__ == "__main__":
    key = jax.random.PRNGKey(0)
    k1, k2, k3, k4 = jax.random.split(key, 4)

    N, C_VMAP, C_TASK, C_TRAJ, N_PARMS = 4, 1, 2, 3, 4
    vmap_img = jax.random.normal(k1, (N, C_VMAP, IN_HW, IN_HW), jnp.float32)
    agent_task = jax.random.normal(k2, (N, C_TASK, IN_HW, IN_HW), jnp.float32)
    atraj = jax.random.normal(k3, (N, C_TRAJ, OUT_HW, OUT_HW), jnp.float32)
    aparms = jax.random.normal(k4, (N, N_PARMS), jnp.float32)

    out, traj = jax.jit(features2task_tensors)(vmap_img, agent_task, atraj, aparms)
    out = jax.block_until_ready(out)
    traj = jax.block_until_ready(traj)

    # Pure-JAX reference: channel concat + nearest-neighbour upsample + concat.
    stack_ref = jnp.concatenate([vmap_img, agent_task], axis=1)
    up_ref = jnp.repeat(jnp.repeat(stack_ref, SCALE, axis=2), SCALE, axis=3)
    expected = jnp.concatenate([atraj, up_ref], axis=1)

    assert out.shape == (N, C_TRAJ + C_VMAP + C_TASK, OUT_HW, OUT_HW)
    assert out.dtype == atraj.dtype
    assert jnp.array_equal(out[:, :C_TRAJ], atraj), "atraj channels must pass through exactly"
    assert jnp.allclose(out, expected, atol=1e-6), "mismatch vs reference"
    assert jnp.array_equal(traj, atraj), "second output must be atraj unchanged"
    print("KERNEL_OK")
</pallas_src>

<mosaic_0001>
module attributes {stable_mosaic.version = 11 : i64} {
  func.func @_fuse_kernel(%arg0: i32, %arg1: memref<2x3x100x100xf32, #tpu.memory_space<vmem>>, %arg2: memref<2x20x20xf32, #tpu.memory_space<vmem>>, %arg3: memref<2x40x20xf32, #tpu.memory_space<vmem>>, %arg4: memref<2x6x100x100xf32, #tpu.memory_space<vmem>>) attributes {dimension_semantics = [#tpu.dimension_semantics<parallel>], iteration_bounds = array<i64: 2>, scalar_prefetch = 0 : i64, scratch_operands = 0 : i64, tpu.core_type = #tpu.core_type<tc>, window_params = [{transform_indices = @transform_0, window_bounds = array<i64: 2, 3, 100, 100>}, {transform_indices = @transform_1, window_bounds = array<i64: 2, 20, 20>}, {transform_indices = @transform_2, window_bounds = array<i64: 2, 40, 20>}, {transform_indices = @transform_3, window_bounds = array<i64: 2, 6, 100, 100>}]} {
    %c0 = arith.constant 0 : index
    %c0_0 = arith.constant 0 : index
    %c0_1 = arith.constant 0 : index
    %c0_2 = arith.constant 0 : index
    %0 = vector.load %arg1[%c0, %c0_0, %c0_1, %c0_2] : memref<2x3x100x100xf32, #tpu.memory_space<vmem>>, vector<2x3x100x100xf32>
    %c0_3 = arith.constant 0 : index
    %c0_4 = arith.constant 0 : index
    %c0_5 = arith.constant 0 : index
    %c0_6 = arith.constant 0 : index
    %1 = vector.load %arg4[%c0_3, %c0_4, %c0_5, %c0_6] : memref<2x6x100x100xf32, #tpu.memory_space<vmem>>, vector<2x3x100x100xf32>
    tpu.vector_store %arg4[%c0_3, %c0_4, %c0_5, %c0_6], %0 {strides = array<i32>} : memref<2x6x100x100xf32, #tpu.memory_space<vmem>>, vector<2x3x100x100xf32>,
    %2 = tpu.iota {dimensions = array<i32: 1>} : vector<20x100xi32>
    %3 = tpu.iota {dimensions = array<i32: 0>} : vector<20x100xi32>
    %c5_i32 = arith.constant 5 : i32
    %4 = vector.broadcast %c5_i32 : i32 to vector<20x100xi32>
    %5 = arith.muli %3, %4 : vector<20x100xi32>
    %6 = arith.cmpi sge, %2, %5 : vector<20x100xi32>
    %c5_i32_7 = arith.constant 5 : i32
    %7 = vector.broadcast %c5_i32_7 : i32 to vector<20x100xi32>
    %8 = arith.addi %5, %7 : vector<20x100xi32>
    %9 = arith.cmpi slt, %2, %8 : vector<20x100xi32>
    %10 = arith.andi %6, %9 : vector<20x100xi1>
    %11 = arith.extui %10 : vector<20x100xi1> to vector<20x100xi32>
    %12 = arith.sitofp %11 : vector<20x100xi32> to vector<20x100xf32>
    %13 = tpu.iota {dimensions = array<i32: 0>} : vector<100x20xi32>
    %14 = tpu.iota {dimensions = array<i32: 1>} : vector<100x20xi32>
    %c5_i32_8 = arith.constant 5 : i32
    %15 = vector.broadcast %c5_i32_8 : i32 to vector<100x20xi32>
    %16 = arith.muli %14, %15 : vector<100x20xi32>
    %17 = arith.cmpi sge, %13, %16 : vector<100x20xi32>
    %c5_i32_9 = arith.constant 5 : i32
    %18 = vector.broadcast %c5_i32_9 : i32 to vector<100x20xi32>
    %19 = arith.addi %16, %18 : vector<100x20xi32>
    %20 = arith.cmpi slt, %13, %19 : vector<100x20xi32>
    %21 = arith.andi %17, %20 : vector<100x20xi1>
    %22 = arith.extui %21 : vector<100x20xi1> to vector<100x20xi32>
    %23 = arith.sitofp %22 : vector<100x20xi32> to vector<100x20xf32>
    %c0_10 = arith.constant 0 : index
    %c0_11 = arith.constant 0 : index
    %c0_12 = arith.constant 0 : index
    %24 = vector.load %arg2[%c0_10, %c0_11, %c0_12] : memref<2x20x20xf32, #tpu.memory_space<vmem>>, vector<1x20x20xf32>
    %25 = vector.shape_cast %24 : vector<1x20x20xf32> to vector<20x20xf32>
    %cst = arith.constant dense<0.000000e+00> : vector<20x100xf32>
    %26 = tpu.matmul %25, %12, %cst {dimension_numbers = #tpu.dot_dimension_numbers<[1], [0], [0], [1], [0, 0, 1, 1], [], []>, precision = #tpu.contract_precision<fp32>} : vector<20x20xf32>, vector<20x100xf32>, vector<20x100xf32> -> vector<20x100xf32>
    %cst_13 = arith.constant dense<0.000000e+00> : vector<100x100xf32>
    %27 = tpu.matmul %23, %26, %cst_13 {dimension_numbers = #tpu.dot_dimension_numbers<[1], [0], [0], [1], [0, 0, 1, 1], [], []>, precision = #tpu.contract_precision<fp32>} : vector<100x20xf32>, vector<20x100xf32>, vector<100x100xf32> -> vector<100x100xf32>
    %c0_14 = arith.constant 0 : index
    %c3 = arith.constant 3 : index
    %c0_15 = arith.constant 0 : index
    %c0_16 = arith.constant 0 : index
    %28 = vector.load %arg4[%c0_14, %c3, %c0_15, %c0_16] : memref<2x6x100x100xf32, #tpu.memory_space<vmem>>, vector<1x1x100x100xf32>
    %29 = vector.shape_cast %28 : vector<1x1x100x100xf32> to vector<100x100xf32>
    %30 = vector.shape_cast %27 : vector<100x100xf32> to vector<1x1x100x100xf32>
    tpu.vector_store %arg4[%c0_14, %c3, %c0_15, %c0_16], %30 {strides = array<i32>} : memref<2x6x100x100xf32, #tpu.memory_space<vmem>>, vector<1x1x100x100xf32>,
    %c1 = arith.constant 1 : index
    %c0_17 = arith.constant 0 : index
    %c0_18 = arith.constant 0 : index
    %31 = vector.load %arg2[%c1, %c0_17, %c0_18] : memref<2x20x20xf32, #tpu.memory_space<vmem>>, vector<1x20x20xf32>
    %32 = vector.shape_cast %31 : vector<1x20x20xf32> to vector<20x20xf32>
    %cst_19 = arith.constant dense<0.000000e+00> : vector<20x100xf32>
    %33 = tpu.matmul %32, %12, %cst_19 {dimension_numbers = #tpu.dot_dimension_numbers<[1], [0], [0], [1], [0, 0, 1, 1], [], []>, precision = #tpu.contract_precision<fp32>} : vector<20x20xf32>, vector<20x100xf32>, vector<20x100xf32> -> vector<20x100xf32>
    %cst_20 = arith.constant dense<0.000000e+00> : vector<100x100xf32>
    %34 = tpu.matmul %23, %33, %cst_20 {dimension_numbers = #tpu.dot_dimension_numbers<[1], [0], [0], [1], [0, 0, 1, 1], [], []>, precision = #tpu.contract_precision<fp32>} : vector<100x20xf32>, vector<20x100xf32>, vector<100x100xf32> -> vector<100x100xf32>
    %c1_21 = arith.constant 1 : index
    %c3_22 = arith.constant 3 : index
    %c0_23 = arith.constant 0 : index
    %c0_24 = arith.constant 0 : index
    %35 = vector.load %arg4[%c1_21, %c3_22, %c0_23, %c0_24] : memref<2x6x100x100xf32, #tpu.memory_space<vmem>>, vector<1x1x100x100xf32>
    %36 = vector.shape_cast %35 : vector<1x1x100x100xf32> to vector<100x100xf32>
    %37 = vector.shape_cast %34 : vector<100x100xf32> to vector<1x1x100x100xf32>
    tpu.vector_store %arg4[%c1_21, %c3_22, %c0_23, %c0_24], %37 {strides = array<i32>} : memref<2x6x100x100xf32, #tpu.memory_space<vmem>>, vector<1x1x100x100xf32>,
    %c0_25 = arith.constant 0 : index
    %c0_26 = arith.constant 0 : index
    %c0_27 = arith.constant 0 : index
    %38 = vector.load %arg3[%c0_25, %c0_26, %c0_27] : memref<2x40x20xf32, #tpu.memory_space<vmem>>, vector<1x40x20xf32>
    %39 = vector.shape_cast %38 : vector<1x40x20xf32> to vector<40x20xf32>
    %cst_28 = arith.constant dense<0.000000e+00> : vector<40x100xf32>
    %40 = tpu.matmul %39, %12, %cst_28 {dimension_numbers = #tpu.dot_dimension_numbers<[1], [0], [0], [1], [0, 0, 1, 1], [], []>, precision = #tpu.contract_precision<fp32>} : vector<40x20xf32>, vector<20x100xf32>, vector<40x100xf32> -> vector<40x100xf32>
    %41 = vector.extract_strided_slice %40 {offsets = [0, 0], sizes = [20, 100], strides = [1, 1]} : vector<40x100xf32> to vector<20x100xf32>
    %cst_29 = arith.constant dense<0.000000e+00> : vector<100x100xf32>
    %42 = tpu.matmul %23, %41, %cst_29 {dimension_numbers = #tpu.dot_dimension_numbers<[1], [0], [0], [1], [0, 0, 1, 1], [], []>, precision = #tpu.contract_precision<fp32>} : vector<100x20xf32>, vector<20x100xf32>, vector<100x100xf32> -> vector<100x100xf32>
    %c0_30 = arith.constant 0 : index
    %c4 = arith.constant 4 : index
    %c0_31 = arith.constant 0 : index
    %c0_32 = arith.constant 0 : index
    %43 = vector.load %arg4[%c0_30, %c4, %c0_31, %c0_32] : memref<2x6x100x100xf32, #tpu.memory_space<vmem>>, vector<1x1x100x100xf32>
    %44 = vector.shape_cast %43 : vector<1x1x100x100xf32> to vector<100x100xf32>
    %45 = vector.shape_cast %42 : vector<100x100xf32> to vector<1x1x100x100xf32>
    tpu.vector_store %arg4[%c0_30, %c4, %c0_31, %c0_32], %45 {strides = array<i32>} : memref<2x6x100x100xf32, #tpu.memory_space<vmem>>, vector<1x1x100x100xf32>,
    %46 = vector.extract_strided_slice %40 {offsets = [20, 0], sizes = [20, 100], strides = [1, 1]} : vector<40x100xf32> to vector<20x100xf32>
    %cst_33 = arith.constant dense<0.000000e+00> : vector<100x100xf32>
    %47 = tpu.matmul %23, %46, %cst_33 {dimension_numbers = #tpu.dot_dimension_numbers<[1], [0], [0], [1], [0, 0, 1, 1], [], []>, precision = #tpu.contract_precision<fp32>} : vector<100x20xf32>, vector<20x100xf32>, vector<100x100xf32> -> vector<100x100xf32>
    %c0_34 = arith.constant 0 : index
    %c5 = arith.constant 5 : index
    %c0_35 = arith.constant 0 : index
    %c0_36 = arith.constant 0 : index
    %48 = vector.load %arg4[%c0_34, %c5, %c0_35, %c0_36] : memref<2x6x100x100xf32, #tpu.memory_space<vmem>>, vector<1x1x100x100xf32>
    %49 = vector.shape_cast %48 : vector<1x1x100x100xf32> to vector<100x100xf32>
    %50 = vector.shape_cast %47 : vector<100x100xf32> to vector<1x1x100x100xf32>
    tpu.vector_store %arg4[%c0_34, %c5, %c0_35, %c0_36], %50 {strides = array<i32>} : memref<2x6x100x100xf32, #tpu.memory_space<vmem>>, vector<1x1x100x100xf32>,
    %c1_37 = arith.constant 1 : index
    %c0_38 = arith.constant 0 : index
    %c0_39 = arith.constant 0 : index
    %51 = vector.load %arg3[%c1_37, %c0_38, %c0_39] : memref<2x40x20xf32, #tpu.memory_space<vmem>>, vector<1x40x20xf32>
    %52 = vector.shape_cast %51 : vector<1x40x20xf32> to vector<40x20xf32>
    %cst_40 = arith.constant dense<0.000000e+00> : vector<40x100xf32>
    %53 = tpu.matmul %52, %12, %cst_40 {dimension_numbers = #tpu.dot_dimension_numbers<[1], [0], [0], [1], [0, 0, 1, 1], [], []>, precision = #tpu.contract_precision<fp32>} : vector<40x20xf32>, vector<20x100xf32>, vector<40x100xf32> -> vector<40x100xf32>
    %54 = vector.extract_strided_slice %53 {offsets = [0, 0], sizes = [20, 100], strides = [1, 1]} : vector<40x100xf32> to vector<20x100xf32>
    %cst_41 = arith.constant dense<0.000000e+00> : vector<100x100xf32>
    %55 = tpu.matmul %23, %54, %cst_41 {dimension_numbers = #tpu.dot_dimension_numbers<[1], [0], [0], [1], [0, 0, 1, 1], [], []>, precision = #tpu.contract_precision<fp32>} : vector<100x20xf32>, vector<20x100xf32>, vector<100x100xf32> -> vector<100x100xf32>
    %c1_42 = arith.constant 1 : index
    %c4_43 = arith.constant 4 : index
    %c0_44 = arith.constant 0 : index
    %c0_45 = arith.constant 0 : index
    %56 = vector.load %arg4[%c1_42, %c4_43, %c0_44, %c0_45] : memref<2x6x100x100xf32, #tpu.memory_space<vmem>>, vector<1x1x100x100xf32>
    %57 = vector.shape_cast %56 : vector<1x1x100x100xf32> to vector<100x100xf32>
    %58 = vector.shape_cast %55 : vector<100x100xf32> to vector<1x1x100x100xf32>
    tpu.vector_store %arg4[%c1_42, %c4_43, %c0_44, %c0_45], %58 {strides = array<i32>} : memref<2x6x100x100xf32, #tpu.memory_space<vmem>>, vector<1x1x100x100xf32>,
    %59 = vector.extract_strided_slice %53 {offsets = [20, 0], sizes = [20, 100], strides = [1, 1]} : vector<40x100xf32> to vector<20x100xf32>
    %cst_46 = arith.constant dense<0.000000e+00> : vector<100x100xf32>
    %60 = tpu.matmul %23, %59, %cst_46 {dimension_numbers = #tpu.dot_dimension_numbers<[1], [0], [0], [1], [0, 0, 1, 1], [], []>, precision = #tpu.contract_precision<fp32>} : vector<100x20xf32>, vector<20x100xf32>, vector<100x100xf32> -> vector<100x100xf32>
    %c1_47 = arith.constant 1 : index
    %c5_48 = arith.constant 5 : index
    %c0_49 = arith.constant 0 : index
    %c0_50 = arith.constant 0 : index
    %61 = vector.load %arg4[%c1_47, %c5_48, %c0_49, %c0_50] : memref<2x6x100x100xf32, #tpu.memory_space<vmem>>, vector<1x1x100x100xf32>
    %62 = vector.shape_cast %61 : vector<1x1x100x100xf32> to vector<100x100xf32>
    %63 = vector.shape_cast %60 : vector<100x100xf32> to vector<1x1x100x100xf32>
    tpu.vector_store %arg4[%c1_47, %c5_48, %c0_49, %c0_50], %63 {strides = array<i32>} : memref<2x6x100x100xf32, #tpu.memory_space<vmem>>, vector<1x1x100x100xf32>,
    return
  }
  func.func @transform_0(%arg0: i32) -> (i32, i32, i32, i32) {
    %c0_i32 = arith.constant 0 : i32
    %c0_i32_0 = arith.constant 0 : i32
    %c0_i32_1 = arith.constant 0 : i32
    %c0_i32_2 = arith.constant 0 : i32
    return %arg0, %c0_i32, %c0_i32_0, %c0_i32_1 : i32, i32, i32, i32
  }
  func.func @transform_1(%arg0: i32) -> (i32, i32, i32) {
    %c0_i32 = arith.constant 0 : i32
    %c0_i32_0 = arith.constant 0 : i32
    %c0_i32_1 = arith.constant 0 : i32
    return %arg0, %c0_i32, %c0_i32_0 : i32, i32, i32
  }
  func.func @transform_2(%arg0: i32) -> (i32, i32, i32) {
    %c0_i32 = arith.constant 0 : i32
    %c0_i32_0 = arith.constant 0 : i32
    %c0_i32_1 = arith.constant 0 : i32
    return %arg0, %c0_i32, %c0_i32_0 : i32, i32, i32
  }
  func.func @transform_3(%arg0: i32) -> (i32, i32, i32, i32) {
    %c0_i32 = arith.constant 0 : i32
    %c0_i32_0 = arith.constant 0 : i32
    %c0_i32_1 = arith.constant 0 : i32
    %c0_i32_2 = arith.constant 0 : i32
    return %arg0, %c0_i32, %c0_i32_0, %c0_i32_1 : i32, i32, i32, i32
  }
}

</mosaic_0001>

<llo_original>
// kernel: features2task_tensors.1
$region0: #{features2task_tensors.1}
  #allocation0 [shape = 'u32[]', space=smem, size = 0x4, offset = 0x4, fixed_abs, tag = 'smem constant byte address 0x4 - core index']
  #allocation1 [shape = 'u32[72,128]{1,0:T(1,128)}', space=vmem, size = 0x9000, scoped, tag = 'internal scratch']
  %s0 = inlined_call_operand.vmem [shape: f32[4,3,100,100], index: 0, kind: input, shape index: {}]
  %s1 = inlined_call_operand.vmem [shape: f32[4,20,20], index: 1, kind: input, shape index: {}]
  %s2 = inlined_call_operand.vmem [shape: f32[4,40,20], index: 2, kind: input, shape index: {}]
  %s3 = inlined_call_operand.vmem [shape: f32[4,6,100,100], index: 3, kind: output, shape index: {}]
  %s4 = sld [smem:[#allocation0]]
  $region45: #{features2task_tensors.1} parent=0
    _
  %s6 = ssub.s32 1, %s4
  %s7 = scalar_select 0, %s6, %s4
  loop: start=0, step=1, limit=4
  $region2: #{features2task_tensors.1} parent=0 // loop_pre_header
    _
  $region3: #{features2task_tensors.1} parent=0 // loop_header
    %s9 = sphi 0, %s13
    %p10 = scmp.ge.s32.totalorder %s9, 4
    %s19 = sphi 0, %s21
    %s22 = sphi 0, %s19
    %s23 = sphi 0, %s22
    %s39 = sphi 0, %s23
    %s45 = sphi 0, %s47
    %s48 = sphi 0, %s45
    %s49 = sphi 0, %s48
    %s65 = sphi 0, %s49
    %s71 = sphi 0, %s73
    %s74 = sphi 0, %s71
    %s75 = sphi 0, %s74
    %s91 = sphi 0, %s75
    %s97 = sphi 0, %s99
    %s100 = sphi 0, %s97
    %s101 = sphi 0, %s100
    %s117 = sphi 0, %s101
  $region4: #{features2task_tensors.1} parent=0 // loop_header_branch
    %12 = sbr.rel (%p10) target = $region8
  $region5: #{features2task_tensors.1} parent=0 // loop_body
    %s14 = ssub.s32 %s9, 1
    %s15 = ssub.s32 %s9, 2
    %s16 = sadd.s32 %s9, 1
    %s17 = ssub.s32 %s9, %s16
    %p18 = scmp.eq.s32.totalorder %s17, 0
    %s20 = sadd.s32 %s19, 1
    %s21 = scalar_select %p18, %s19, %s20
    %p24 = pneg %p18
    %p25 = scmp.eq.s32.totalorder %s9, 1
    %p26 = por %p24, %p25
    %p27 = scmp.ne.s32.totalorder %s19, %s22
    %p28 = scmp.eq.s32.totalorder %s9, 0
    %p29 = por %p27, %p28
    %p30 = scmp.ne.s32.totalorder %s19, %s22
    %p31 = scmp.eq.s32.totalorder %s14, 1
    %p32 = por %p30, %p31
    %p33 = scmp.ne.s32.totalorder %s22, %s23
    %p34 = scmp.eq.s32.totalorder %s14, 0
    %p35 = por %p33, %p34
    %p36 = scmp.ne.s32.totalorder %s22, %s23
    %p37 = scmp.eq.s32.totalorder %s15, 1
    %p38 = por %p36, %p37
    %p40 = scmp.ne.s32.totalorder %s23, %s39
    %p41 = scmp.eq.s32.totalorder %s15, 0
    %p42 = por %p40, %p41
    %s43 = ssub.s32 %s9, %s16
    %p44 = scmp.eq.s32.totalorder %s43, 0
    %s46 = sadd.s32 %s45, 1
    %s47 = scalar_select %p44, %s45, %s46
    %p50 = pneg %p44
    %p51 = scmp.eq.s32.totalorder %s9, 1
    %p52 = por %p50, %p51
    %p53 = scmp.ne.s32.totalorder %s45, %s48
    %p54 = scmp.eq.s32.totalorder %s9, 0
    %p55 = por %p53, %p54
    %p56 = scmp.ne.s32.totalorder %s45, %s48
    %p57 = scmp.eq.s32.totalorder %s14, 1
    %p58 = por %p56, %p57
    %p59 = scmp.ne.s32.totalorder %s48, %s49
    %p60 = scmp.eq.s32.totalorder %s14, 0
    %p61 = por %p59, %p60
    %p62 = scmp.ne.s32.totalorder %s48, %s49
    %p63 = scmp.eq.s32.totalorder %s15, 1
    %p64 = por %p62, %p63
    %p66 = scmp.ne.s32.totalorder %s49, %s65
    %p67 = scmp.eq.s32.totalorder %s15, 0
    %p68 = por %p66, %p67
    %s69 = ssub.s32 %s9, %s16
    %p70 = scmp.eq.s32.totalorder %s69, 0
    %s72 = sadd.s32 %s71, 1
    %s73 = scalar_select %p70, %s71, %s72
    %p76 = pneg %p70
    %p77 = scmp.eq.s32.totalorder %s9, 1
    %p78 = por %p76, %p77
    %p79 = scmp.ne.s32.totalorder %s71, %s74
    %p80 = scmp.eq.s32.totalorder %s9, 0
    %p81 = por %p79, %p80
    %p82 = scmp.ne.s32.totalorder %s71, %s74
    %p83 = scmp.eq.s32.totalorder %s14, 1
    %p84 = por %p82, %p83
    %p85 = scmp.ne.s32.totalorder %s74, %s75
    %p86 = scmp.eq.s32.totalorder %s14, 0
    %p87 = por %p85, %p86
    %p88 = scmp.ne.s32.totalorder %s74, %s75
    %p89 = scmp.eq.s32.totalorder %s15, 1
    %p90 = por %p88, %p89
    %p92 = scmp.ne.s32.totalorder %s75, %s91
    %p93 = scmp.eq.s32.totalorder %s15, 0
    %p94 = por %p92, %p93
    %s95 = ssub.s32 %s9, %s16
    %p96 = scmp.eq.s32.totalorder %s95, 0
    %s98 = sadd.s32 %s97, 1
    %s99 = scalar_select %p96, %s97, %s98
    %p102 = pneg %p96
    %p103 = scmp.eq.s32.totalorder %s9, 1
    %p104 = por %p102, %p103
    %p105 = scmp.ne.s32.totalorder %s97, %s100
    %p106 = scmp.eq.s32.totalorder %s9, 0
    %p107 = por %p105, %p106
    %p108 = scmp.ne.s32.totalorder %s97, %s100
    %p109 = scmp.eq.s32.totalorder %s14, 1
    %p110 = por %p108, %p109
    %p111 = scmp.ne.s32.totalorder %s100, %s101
    %p112 = scmp.eq.s32.totalorder %s14, 0
    %p113 = por %p111, %p112
    %p114 = scmp.ne.s32.totalorder %s100, %s101
    %p115 = scmp.eq.s32.totalorder %s15, 1
    %p116 = por %p114, %p115
    %p118 = scmp.ne.s32.totalorder %s101, %s117
    %p119 = scmp.eq.s32.totalorder %s15, 0
    %p120 = por %p118, %p119
    %p121 = scmp.le.s32.totalorder 1, %s9
    %p122 = scmp.lt.s32.totalorder %s9, 3
    %p123 = pnand %p121, %p122
    %p124 = pneg %p123
    // Predicated region
    $region9: #{features2task_tensors.1} parent=5 // pred_check
      _
    $region10: #{features2task_tensors.1} parent=5 // pred_check_branch
      %126 = sbr.rel (%p123) target = $region12
    $region11: #{features2task_tensors.1} parent=5 // pred_region
      %s127 = ssub.s32 %s9, 1
    $region12: #{features2task_tensors.1} parent=5 // pred_fallthru
      _
    %p128 = scmp.lt.s32.totalorder %s9, 2
    // Predicated region
    $region13: #{features2task_tensors.1} parent=5 // pred_check
      %p129 = pneg %p128
    $region14: #{features2task_tensors.1} parent=5 // pred_check_branch
      %131 = sbr.rel (%p129) target = $region16
    $region15: #{features2task_tensors.1} parent=5 // pred_region
      // Predicated region
      $region17: #{features2task_tensors.1} parent=15 // pred_check
        %p132 = pneg %p29
      $region18: #{features2task_tensors.1} parent=15 // pred_check_branch
        %134 = sbr.rel (%p132) target = $region20
      $region19: #{features2task_tensors.1} parent=15 // pred_region
        %s135 = smul.u32 2, %s9
        %p136 = scmp.lt.s32.totalorder %s135, 3
        %s137 = scalar_select %p136, %s135, 3
        %s138 = smul.addr %s137, 39
        %s139 = smul.addr %s138, 8
        %s140 = scalar_lea.vmem %s0, %s139
        %s141 = smul.u32 2, %s9
      $region20: #{features2task_tensors.1} parent=15 // pred_fallthru
        _
      // Predicated region
      $region21: #{features2task_tensors.1} parent=15 // pred_check
        %p142 = pneg %p55
      $region22: #{features2task_tensors.1} parent=15 // pred_check_branch
        %144 = sbr.rel (%p142) target = $region24
      $region23: #{features2task_tensors.1} parent=15 // pred_region
        %s145 = smul.u32 2, %s9
        %p146 = scmp.lt.s32.totalorder %s145, 3
        %s147 = scalar_select %p146, %s145, 3
        %s148 = smul.addr %s147, 3
        %s149 = smul.addr %s148, 8
        %s150 = scalar_lea.vmem %s1, %s149
        %s151 = smul.u32 2, %s9
      $region24: #{features2task_tensors.1} parent=15 // pred_fallthru
        _
      // Predicated region
      $region25: #{features2task_tensors.1} parent=15 // pred_check
        %p152 = pneg %p81
      $region26: #{features2task_tensors.1} parent=15 // pred_check_branch
        %154 = sbr.rel (%p152) target = $region28
      $region27: #{features2task_tensors.1} parent=15 // pred_region
        %s155 = smul.u32 2, %s9
        %p156 = scmp.lt.s32.totalorder %s155, 3
        %s157 = scalar_select %p156, %s155, 3
        %s158 = smul.addr %s157, 5
        %s159 = smul.addr %s158, 8
        %s160 = scalar_lea.vmem %s2, %s159
        %s161 = smul.u32 2, %s9
      $region28: #{features2task_tensors.1} parent=15 // pred_fallthru
        _
    $region16: #{features2task_tensors.1} parent=5 // pred_fallthru
      _
    %p162 = scmp.le.s32.totalorder 1, %s9
    %p163 = scmp.lt.s32.totalorder %s9, 3
    %p164 = pnand %p162, %p163
    %p165 = pneg %p164
    // Predicated region
    $region29: #{features2task_tensors.1} parent=5 // pred_check
      _
    $region30: #{features2task_tensors.1} parent=5 // pred_check_branch
      %167 = sbr.rel (%p164) target = $region32
    $region31: #{features2task_tensors.1} parent=5 // pred_region
      %s168 = ssub.s32 %s9, 1
      %s169 = smul.u32 2, %s14
      %p170 = scmp.lt.s32.totalorder %s169, 3
      %s171 = scalar_select %p170, %s169, 3
      %s172 = smul.addr %s171, 39
      %s173 = smul.addr %s172, 8
      %s174 = scalar_lea.vmem %s0, %s173
      %p175 = pneg %p35
      %p176 = pneg %p32
      %s177 = smul.u32 2, %s14
      %p178 = scmp.lt.s32.totalorder %s177, 3
      %s179 = scalar_select %p178, %s177, 3
      %s180 = smul.addr %s179, 3
      %s181 = smul.addr %s180, 8
      %s182 = scalar_lea.vmem %s1, %s181
      %p183 = pneg %p61
      %p184 = pneg %p58
      %s185 = smul.u32 2, %s14
      %p186 = scmp.lt.s32.totalorder %s185, 3
      %s187 = scalar_select %p186, %s185, 3
      %s188 = smul.addr %s187, 5
      %s189 = smul.addr %s188, 8
      %s190 = scalar_lea.vmem %s2, %s189
      %p191 = pneg %p87
      %p192 = pneg %p84
      %p193 = pneg %p113
      %p194 = pneg %p110
      %s195 = smul.u32 2, %s14
      %p196 = scmp.lt.s32.totalorder %s195, 3
      %s197 = scalar_select %p196, %s195, 3
      %s198 = smul.addr %s197, 78
      %s199 = smul.addr %s198, 8
      %s200 = scalar_lea.vmem %s3, %s199
      %s201 = smul.u32 2, %s14
      %p202 = scmp.lt.s32.totalorder %s201, 3
      %s203 = scalar_select %p202, %s201, 3
      %s204 = smul.addr %s203, 39
      %s205 = smul.addr %s204, 8
      %s206 = scalar_lea.vmem %s0, %s205
      %s207 = smul.u32 2, %s14
      %s208 = smul.u32 2, %s14
      %p209 = scmp.lt.s32.totalorder %s208, 3
      %s210 = scalar_select %p209, %s208, 3
      %s211 = smul.addr %s210, 3
      %s212 = smul.addr %s211, 8
      %s213 = scalar_lea.vmem %s1, %s212
      %s214 = smul.u32 2, %s14
      %s215 = smul.u32 2, %s14
      %p216 = scmp.lt.s32.totalorder %s215, 3
      %s217 = scalar_select %p216, %s215, 3
      %s218 = smul.addr %s217, 5
      %s219 = smul.addr %s218, 8
      %s220 = scalar_lea.vmem %s2, %s219
      %s221 = smul.u32 2, %s14
      %s222 = smul.u32 2, %s14
      %p223 = scmp.lt.s32.totalorder %s222, 3
      %s224 = scalar_select %p223, %s222, 3
      %s225 = smul.addr %s224, 78
      %s226 = smul.addr %s225, 8
      %s227 = scalar_lea.vmem %s3, %s226
      %s228 = smul.u32 2, %s14
      %v229 = vld [vmem:[%s206] sm:$0xff]
      %v230 = vld [vmem:[%s206 + $0x8] sm:$0xff]
      %v231 = vld [vmem:[%s206 + $0x10] sm:$0xff]
      %v232 = vld [vmem:[%s206 + $0x18] sm:$0xff]
      %v233 = vld [vmem:[%s206 + $0x20] sm:$0xff]
      %v234 = vld [vmem:[%s206 + $0x28] sm:$0xff]
      %v235 = vld [vmem:[%s206 + $0x30] sm:$0xff]
      %v236 = vld [vmem:[%s206 + $0x38] sm:$0xff]
      %v237 = vld [vmem:[%s206 + $0x40] sm:$0xff]
      %v238 = vld [vmem:[%s206 + $0x48] sm:$0xff]
      %v239 = vld [vmem:[%s206 + $0x50] sm:$0xff]
      %v240 = vld [vmem:[%s206 + $0x58] sm:$0xff]
      %v241 = vld [vmem:[%s206 + $0x60] sm:$0xf]
      %v242 = vld [vmem:[%s206 + $0x68] sm:$0xff]
      %v243 = vld [vmem:[%s206 + $0x70] sm:$0xff]
      %v244 = vld [vmem:[%s206 + $0x78] sm:$0xff]
      %v245 = vld [vmem:[%s206 + $0x80] sm:$0xff]
      %v246 = vld [vmem:[%s206 + $0x88] sm:$0xff]
      %v247 = vld [vmem:[%s206 + $0x90] sm:$0xff]
      %v248 = vld [vmem:[%s206 + $0x98] sm:$0xff]
      %v249 = vld [vmem:[%s206 + $0xa0] sm:$0xff]
      %v250 = vld [vmem:[%s206 + $0xa8] sm:$0xff]
      %v251 = vld [vmem:[%s206 + $0xb0] sm:$0xff]
      %v252 = vld [vmem:[%s206 + $0xb8] sm:$0xff]
      %v253 = vld [vmem:[%s206 + $0xc0] sm:$0xff]
      %v254 = vld [vmem:[%s206 + $0xc8] sm:$0xf]
      %v255 = vld [vmem:[%s206 + $0xd0] sm:$0xff]
      %v256 = vld [vmem:[%s206 + $0xd8] sm:$0xff]
      %v257 = vld [vmem:[%s206 + $0xe0] sm:$0xff]
      %v258 = vld [vmem:[%s206 + $0xe8] sm:$0xff]
      %v259 = vld [vmem:[%s206 + $0xf0] sm:$0xff]
      %v260 = vld [vmem:[%s206 + $0xf8] sm:$0xff]
      %v261 = vld [vmem:[%s206 + $0x100] sm:$0xff]
      %v262 = vld [vmem:[%s206 + $0x108] sm:$0xff]
      %v263 = vld [vmem:[%s206 + $0x110] sm:$0xff]
      %v264 = vld [vmem:[%s206 + $0x118] sm:$0xff]
      %v265 = vld [vmem:[%s206 + $0x120] sm:$0xff]
      %v266 = vld [vmem:[%s206 + $0x128] sm:$0xff]
      %v267 = vld [vmem:[%s206 + $0x130] sm:$0xf]
      %v268 = vld [vmem:[%s206 + $0x138] sm:$0xff]
      %v269 = vld [vmem:[%s206 + $0x140] sm:$0xff]
      %v270 = vld [vmem:[%s206 + $0x148] sm:$0xff]
      %v271 = vld [vmem:[%s206 + $0x150] sm:$0xff]
      %v272 = vld [vmem:[%s206 + $0x158] sm:$0xff]
      %v273 = vld [vmem:[%s206 + $0x160] sm:$0xff]
      %v274 = vld [vmem:[%s206 + $0x168] sm:$0xff]
      %v275 = vld [vmem:[%s206 + $0x170] sm:$0xff]
      %v276 = vld [vmem:[%s206 + $0x178] sm:$0xff]
      %v277 = vld [vmem:[%s206 + $0x180] sm:$0xff]
      %v278 = vld [vmem:[%s206 + $0x188] sm:$0xff]
      %v279 = vld [vmem:[%s206 + $0x190] sm:$0xff]
      %v280 = vld [vmem:[%s206 + $0x198] sm:$0xf]
      %v281 = vld [vmem:[%s206 + $0x1a0] sm:$0xff]
      %v282 = vld [vmem:[%s206 + $0x1a8] sm:$0xff]
      %v283 = vld [vmem:[%s206 + $0x1b0] sm:$0xff]
      %v284 = vld [vmem:[%s206 + $0x1b8] sm:$0xff]
      %v285 = vld [vmem:[%s206 + $0x1c0] sm:$0xff]
      %v286 = vld [vmem:[%s206 + $0x1c8] sm:$0xff]
      %v287 = vld [vmem:[%s206 + $0x1d0] sm:$0xff]
      %v288 = vld [vmem:[%s206 + $0x1d8] sm:$0xff]
      %v289 = vld [vmem:[%s206 + $0x1e0] sm:$0xff]
      %v290 = vld [vmem:[%s206 + $0x1e8] sm:$0xff]
      %v291 = vld [vmem:[%s206 + $0x1f0] sm:$0xff]
      %v292 = vld [vmem:[%s206 + $0x1f8] sm:$0xff]
      %v293 = vld [vmem:[%s206 + $0x200] sm:$0xf]
      %v294 = vld [vmem:[%s206 + $0x208] sm:$0xff]
      %v295 = vld [vmem:[%s206 + $0x210] sm:$0xff]
      %v296 = vld [vmem:[%s206 + $0x218] sm:$0xff]
      %v297 = vld [vmem:[%s206 + $0x220] sm:$0xff]
      %v298 = vld [vmem:[%s206 + $0x228] sm:$0xff]
      %v299 = vld [vmem:[%s206 + $0x230] sm:$0xff]
      %v300 = vld [vmem:[%s206 + $0x238] sm:$0xff]
      %v301 = vld [vmem:[%s206 + $0x240] sm:$0xff]
      %v302 = vld [vmem:[%s206 + $0x248] sm:$0xff]
      %v303 = vld [vmem:[%s206 + $0x250] sm:$0xff]
      %v304 = vld [vmem:[%s206 + $0x258] sm:$0xff]
      %v305 = vld [vmem:[%s206 + $0x260] sm:$0xff]
      %v306 = vld [vmem:[%s206 + $0x268] sm:$0xf]
      %vm307 = vcmask 818176
      %308 = vst.msk [vmem:[%s227] sm:$0xff] %vm307, %v229
      %309 = vst.msk [vmem:[%s227 + $0x8] sm:$0xff] %vm307, %v230
      %310 = vst.msk [vmem:[%s227 + $0x10] sm:$0xff] %vm307, %v231
      %311 = vst.msk [vmem:[%s227 + $0x18] sm:$0xff] %vm307, %v232
      %312 = vst.msk [vmem:[%s227 + $0x20] sm:$0xff] %vm307, %v233
      %313 = vst.msk [vmem:[%s227 + $0x28] sm:$0xff] %vm307, %v234
      %314 = vst.msk [vmem:[%s227 + $0x30] sm:$0xff] %vm307, %v235
      %315 = vst.msk [vmem:[%s227 + $0x38] sm:$0xff] %vm307, %v236
      %316 = vst.msk [vmem:[%s227 + $0x40] sm:$0xff] %vm307, %v237
      %317 = vst.msk [vmem:[%s227 + $0x48] sm:$0xff] %vm307, %v238
      %318 = vst.msk [vmem:[%s227 + $0x50] sm:$0xff] %vm307, %v239
      %319 = vst.msk [vmem:[%s227 + $0x58] sm:$0xff] %vm307, %v240
      %vm320 = vcmask 814080
      %321 = vst.msk [vmem:[%s227 + $0x60] sm:$0xf] %vm320, %v241
      %322 = vst.msk [vmem:[%s227 + $0x68] sm:$0xff] %vm307, %v242
      %323 = vst.msk [vmem:[%s227 + $0x70] sm:$0xff] %vm307, %v243
      %324 = vst.msk [vmem:[%s227 + $0x78] sm:$0xff] %vm307, %v244
      %325 = vst.msk [vmem:[%s227 + $0x80] sm:$0xff] %vm307, %v245
      %326 = vst.msk [vmem:[%s227 + $0x88] sm:$0xff] %vm307, %v246
      %327 = vst.msk [vmem:[%s227 + $0x90] sm:$0xff] %vm307, %v247
      %328 = vst.msk [vmem:[%s227 + $0x98] sm:$0xff] %vm307, %v248
      %329 = vst.msk [vmem:[%s227 + $0xa0] sm:$0xff] %vm307, %v249
      %330 = vst.msk [vmem:[%s227 + $0xa8] sm:$0xff] %vm307, %v250
      %331 = vst.msk [vmem:[%s227 + $0xb0] sm:$0xff] %vm307, %v251
      %332 = vst.msk [vmem:[%s227 + $0xb8] sm:$0xff] %vm307, %v252
      %333 = vst.msk [vmem:[%s227 + $0xc0] sm:$0xff] %vm307, %v253
      %334 = vst.msk [vmem:[%s227 + $0xc8] sm:$0xf] %vm320, %v254
      %335 = vst.msk [vmem:[%s227 + $0xd0] sm:$0xff] %vm307, %v255
      %336 = vst.msk [vmem:[%s227 + $0xd8] sm:$0xff] %vm307, %v256
      %337 = vst.msk [vmem:[%s227 + $0xe0] sm:$0xff] %vm307, %v257
      %338 = vst.msk [vmem:[%s227 + $0xe8] sm:$0xff] %vm307, %v258
      %339 = vst.msk [vmem:[%s227 + $0xf0] sm:$0xff] %vm307, %v259
      %340 = vst.msk [vmem:[%s227 + $0xf8] sm:$0xff] %vm307, %v260
      %341 = vst.msk [vmem:[%s227 + $0x100] sm:$0xff] %vm307, %v261
      %342 = vst.msk [vmem:[%s227 + $0x108] sm:$0xff] %vm307, %v262
      %343 = vst.msk [vmem:[%s227 + $0x110] sm:$0xff] %vm307, %v263
      %344 = vst.msk [vmem:[%s227 + $0x118] sm:$0xff] %vm307, %v264
      %345 = vst.msk [vmem:[%s227 + $0x120] sm:$0xff] %vm307, %v265
      %346 = vst.msk [vmem:[%s227 + $0x128] sm:$0xff] %vm307, %v266
      %347 = vst.msk [vmem:[%s227 + $0x130] sm:$0xf] %vm320, %v267
      %348 = vst.msk [vmem:[%s227 + $0x270] sm:$0xff] %vm307, %v268
      %349 = vst.msk [vmem:[%s227 + $0x278] sm:$0xff] %vm307, %v269
      %350 = vst.msk [vmem:[%s227 + $0x280] sm:$0xff] %vm307, %v270
      %351 = vst.msk [vmem:[%s227 + $0x288] sm:$0xff] %vm307, %v271
      %352 = vst.msk [vmem:[%s227 + $0x290] sm:$0xff] %vm307, %v272
      %353 = vst.msk [vmem:[%s227 + $0x298] sm:$0xff] %vm307, %v273
      %354 = vst.msk [vmem:[%s227 + $0x2a0] sm:$0xff] %vm307, %v274
      %355 = vst.msk [vmem:[%s227 + $0x2a8] sm:$0xff] %vm307, %v275
      %356 = vst.msk [vmem:[%s227 + $0x2b0] sm:$0xff] %vm307, %v276
      %357 = vst.msk [vmem:[%s227 + $0x2b8] sm:$0xff] %vm307, %v277
      %358 = vst.msk [vmem:[%s227 + $0x2c0] sm:$0xff] %vm307, %v278
      %359 = vst.msk [vmem:[%s227 + $0x2c8] sm:$0xff] %vm307, %v279
      %360 = vst.msk [vmem:[%s227 + $0x2d0] sm:$0xf] %vm320, %v280
      %361 = vst.msk [vmem:[%s227 + $0x2d8] sm:$0xff] %vm307, %v281
      %362 = vst.msk [vmem:[%s227 + $0x2e0] sm:$0xff] %vm307, %v282
      %363 = vst.msk [vmem:[%s227 + $0x2e8] sm:$0xff] %vm307, %v283
      %364 = vst.msk [vmem:[%s227 + $0x2f0] sm:$0xff] %vm307, %v284
      %365 = vst.msk [vmem:[%s227 + $0x2f8] sm:$0xff] %vm307, %v285
      %366 = vst.msk [vmem:[%s227 + $0x300] sm:$0xff] %vm307, %v286
      %367 = vst.msk [vmem:[%s227 + $0x308] sm:$0xff] %vm307, %v287
      %368 = vst.msk [vmem:[%s227 + $0x310] sm:$0xff] %vm307, %v288
      %369 = vst.msk [vmem:[%s227 + $0x318] sm:$0xff] %vm307, %v289
      %370 = vst.msk [vmem:[%s227 + $0x320] sm:$0xff] %vm307, %v290
      %371 = vst.msk [vmem:[%s227 + $0x328] sm:$0xff] %vm307, %v291
      %372 = vst.msk [vmem:[%s227 + $0x330] sm:$0xff] %vm307, %v292
      %373 = vst.msk [vmem:[%s227 + $0x338] sm:$0xf] %vm320, %v293
      %374 = vst.msk [vmem:[%s227 + $0x340] sm:$0xff] %vm307, %v294
      %375 = vst.msk [vmem:[%s227 + $0x348] sm:$0xff] %vm307, %v295
      %376 = vst.msk [vmem:[%s227 + $0x350] sm:$0xff] %vm307, %v296
      %377 = vst.msk [vmem:[%s227 + $0x358] sm:$0xff] %vm307, %v297
      %378 = vst.msk [vmem:[%s227 + $0x360] sm:$0xff] %vm307, %v298
      %379 = vst.msk [vmem:[%s227 + $0x368] sm:$0xff] %vm307, %v299
      %380 = vst.msk [vmem:[%s227 + $0x370] sm:$0xff] %vm307, %v300
      %381 = vst.msk [vmem:[%s227 + $0x378] sm:$0xff] %vm307, %v301
      %382 = vst.msk [vmem:[%s227 + $0x380] sm:$0xff] %vm307, %v302
      %383 = vst.msk [vmem:[%s227 + $0x388] sm:$0xff] %vm307, %v303
      %384 = vst.msk [vmem:[%s227 + $0x390] sm:$0xff] %vm307, %v304
      %385 = vst.msk [vmem:[%s227 + $0x398] sm:$0xff] %vm307, %v305
      %386 = vst.msk [vmem:[%s227 + $0x3a0] sm:$0xf] %vm320, %v306
      %v387 = vlaneseq
      %v388 = vand.u32 %v387, 127
      %v389 = vlaneseq
      %v390 = vshrl.u32 %v389, 7
      %v391 = vadd.s32 %v390, 8
      %v392 = vadd.s32 %v390, 16
      %v393 = vmul.u32 %v390, 5
      %v394 = vmul.u32 %v391, 5
      %v395 = vmul.u32 %v392, 5
      %vm396 = vcmp.ge.s32.totalorder %v388, %v393
      %vm397 = vcmp.ge.s32.totalorder %v388, %v394
      %vm398 = vcmp.ge.s32.totalorder %v388, %v395
      %v399 = vadd.s32 %v393, 5
      %v400 = vadd.s32 %v394, 5
      %v401 = vadd.s32 %v395, 5
      %vm402 = vcmp.lt.s32.totalorder %v388, %v399
      %vm403 = vcmp.lt.s32.totalorder %v388, %v400
      %vm404 = vcmp.lt.s32.totalorder %v388, %v401
      %vm405 = vmand %vm396, %vm402
      %vm406 = vmand %vm397, %vm403
      %vm407 = vmand %vm398, %vm404
      %v408 = vsel %vm405, 1, 0
      %v409 = vsel %vm406, 1, 0
      %v410 = vsel %vm407, 1, 0
      %v411 = vcvt.s32.f32 %v408
      %v412 = vcvt.s32.f32 %v409
      %v413 = vcvt.s32.f32 %v410
      %v414 = vadd.s32 %v390, 24
      %v415 = vadd.s32 %v390, 32
      %v416 = vadd.s32 %v390, 40
      %v417 = vadd.s32 %v390, 48
      %v418 = vadd.s32 %v390, 56
      %v419 = vadd.s32 %v390, 64
      %v420 = vadd.s32 %v390, 72
      %v421 = vadd.s32 %v390, 80
      %v422 = vadd.s32 %v390, 88
      %v423 = vadd.s32 %v390, 96
      %v424 = vmul.u32 %v388, 5
      %vm425 = vcmp.ge.s32.totalorder %v390, %v424
      %vm426 = vcmp.ge.s32.totalorder %v391, %v424
      %vm427 = vcmp.ge.s32.totalorder %v392, %v424
      %vm428 = vcmp.ge.s32.totalorder %v414, %v424
      %vm429 = vcmp.ge.s32.totalorder %v415, %v424
      %vm430 = vcmp.ge.s32.totalorder %v416, %v424
      %vm431 = vcmp.ge.s32.totalorder %v417, %v424
      %vm432 = vcmp.ge.s32.totalorder %v418, %v424
      %vm433 = vcmp.ge.s32.totalorder %v419, %v424
      %vm434 = vcmp.ge.s32.totalorder %v420, %v424
      %vm435 = vcmp.ge.s32.totalorder %v421, %v424
      %vm436 = vcmp.ge.s32.totalorder %v422, %v424
      %vm437 = vcmp.ge.s32.totalorder %v423, %v424
      %v438 = vadd.s32 %v424, 5
      %vm439 = vcmp.lt.s32.totalorder %v390, %v438
      %vm440 = vcmp.lt.s32.totalorder %v391, %v438
      %vm441 = vcmp.lt.s32.totalorder %v392, %v438
      %vm442 = vcmp.lt.s32.totalorder %v414, %v438
      %vm443 = vcmp.lt.s32.totalorder %v415, %v438
      %vm444 = vcmp.lt.s32.totalorder %v416, %v438
      %vm445 = vcmp.lt.s32.totalorder %v417, %v438
      %vm446 = vcmp.lt.s32.totalorder %v418, %v438
      %vm447 = vcmp.lt.s32.totalorder %v419, %v438
      %vm448 = vcmp.lt.s32.totalorder %v420, %v438
      %vm449 = vcmp.lt.s32.totalorder %v421, %v438
      %vm450 = vcmp.lt.s32.totalorder %v422, %v438
      %vm451 = vcmp.lt.s32.totalorder %v423, %v438
      %vm452 = vmand %vm425, %vm439
      %vm453 = vmand %vm426, %vm440
      %vm454 = vmand %vm427, %vm441
      %vm455 = vmand %vm428, %vm442
      %vm456 = vmand %vm429, %vm443
      %vm457 = vmand %vm430, %vm444
      %vm458 = vmand %vm431, %vm445
      %vm459 = vmand %vm432, %vm446
      %vm460 = vmand %vm433, %vm447
      %vm461 = vmand %vm434, %vm448
      %vm462 = vmand %vm435, %vm449
      %vm463 = vmand %vm436, %vm450
      %vm464 = vmand %vm437, %vm451
      %v465 = vsel %vm452, 1, 0
      %v466 = vsel %vm453, 1, 0
      %v467 = vsel %vm454, 1, 0
      %v468 = vsel %vm455, 1, 0
      %v469 = vsel %vm456, 1, 0
      %v470 = vsel %vm457, 1, 0
      %v471 = vsel %vm458, 1, 0
      %v472 = vsel %vm459, 1, 0
      %v473 = vsel %vm460, 1, 0
      %v474 = vsel %vm461, 1, 0
      %v475 = vsel %vm462, 1, 0
      %v476 = vsel %vm463, 1, 0
      %v477 = vsel %vm464, 1, 0
      %v478 = vcvt.s32.f32 %v465
      %v479 = vcvt.s32.f32 %v466
      %v480 = vcvt.s32.f32 %v467
      %v481 = vcvt.s32.f32 %v468
      %v482 = vcvt.s32.f32 %v469
      %v483 = vcvt.s32.f32 %v470
      %v484 = vcvt.s32.f32 %v471
      %v485 = vcvt.s32.f32 %v472
      %v486 = vcvt.s32.f32 %v473
      %v487 = vcvt.s32.f32 %v474
      %v488 = vcvt.s32.f32 %v475
      %v489 = vcvt.s32.f32 %v476
      %v490 = vcvt.s32.f32 %v477
      %v491 = vld [vmem:[%s213] sm:$0xff]
      %v492 = vld [vmem:[%s213 + $0x8] sm:$0xff]
      %v493 = vld [vmem:[%s213 + $0x10] sm:$0xf]
      %vm494 = vcmask 162816
      %v496 = vsel %vm494, %v491, 0
      %v499 = vsel %vm494, %v492, 0
      %v502 = vsel %vm494, %v493, 0
      %vm504 = vcmask 1043456
      %v506 = vsel %vm504, %v413, 0
      %508 = vmatpush.msra.mxu0 0.0
      %509 = vmatpush.msra.mxu0 0.0
      %510 = vmatpush.msra.mxu0 0.0
      %511 = vmatpush.msra.mxu0 0.0
      %512 = vmatpush.msra.mxu0 0.0
      %513 = vmatpush.msra.mxu0 0.0
      %514 = vmatpush.msra.mxu0 0.0
      %515 = vmatpush.msra.mxu0 0.0
      %516 = vmatpush.msra.mxu0 0.0
      %517 = vmatpush.msra.mxu0 0.0
      %518 = vmatpush.msra.mxu0 0.0
      %519 = vmatpush.msra.mxu0 0.0
      %520 = vmatpush.msra.mxu0 0.0
      %v521 = vand.u32 %v506, 4294901760
      %522 = vmatpush.msra.mxu0 %v521
      %v523 = vand.u32 %v412, 4294901760
      %524 = vmatpush.msra.mxu0 %v523
      %v525 = vand.u32 %v411, 4294901760
      %526 = vmatpush.msra.mxu0 %v525
      %v527 = vand.u32 %v496, 4294901760
      %v528 = vsub.f32 %v496, %v527
      %v529 = vand.u32 %v528, 4294901760
      %v530 = vsub.f32 %v528, %v529
      %v531 = vand.u32 %v530, 4294901760
      %532 = vmatmul.f32.gmra.mxu0 %v531
      %v533 = vpop.f32.mrf.mxu0
      %v534 = vadd.f32 0.0, %v533
      %v535 = vand.u32 %v499, 4294901760
      %v536 = vsub.f32 %v499, %v535
      %v537 = vand.u32 %v536, 4294901760
      %v538 = vsub.f32 %v536, %v537
      %v539 = vand.u32 %v538, 4294901760
      %540 = vmatmul.f32.gmra.mxu0 %v539
      %v541 = vpop.f32.mrf.mxu0
      %v542 = vadd.f32 0.0, %v541
      %v543 = vand.u32 %v502, 4294901760
      %v544 = vsub.f32 %v502, %v543
      %v545 = vand.u32 %v544, 4294901760
      %v546 = vsub.f32 %v544, %v545
      %v547 = vand.u32 %v546, 4294901760
      %548 = vmatmul.f32.gmra.mxu0 %v547
      %v549 = vpop.f32.mrf.mxu0
      %v550 = vadd.f32 0.0, %v549
      %551 = vdwg.mxu0
      %552 = vmatpush.msra.mxu0 0.0
      %553 = vmatpush.msra.mxu0 0.0
      %554 = vmatpush.msra.mxu0 0.0
      %555 = vmatpush.msra.mxu0 0.0
      %556 = vmatpush.msra.mxu0 0.0
      %557 = vmatpush.msra.mxu0 0.0
      %558 = vmatpush.msra.mxu0 0.0
      %559 = vmatpush.msra.mxu0 0.0
      %560 = vmatpush.msra.mxu0 0.0
      %561 = vmatpush.msra.mxu0 0.0
      %562 = vmatpush.msra.mxu0 0.0
      %563 = vmatpush.msra.mxu0 0.0
      %564 = vmatpush.msra.mxu0 0.0
      %v565 = vand.u32 %v506, 4294901760
      %v566 = vsub.f32 %v506, %v565
      %v567 = vand.u32 %v566, 4294901760
      %v568 = vsub.f32 %v566, %v567
      %v569 = vand.u32 %v568, 4294901760
      %570 = vmatpush.msra.mxu0 %v569
      %v571 = vand.u32 %v412, 4294901760
      %v572 = vsub.f32 %v412, %v571
      %v573 = vand.u32 %v572, 4294901760
      %v574 = vsub.f32 %v572, %v573
      %v575 = vand.u32 %v574, 4294901760
      %576 = vmatpush.msra.mxu0 %v575
      %v577 = vand.u32 %v411, 4294901760
      %v578 = vsub.f32 %v411, %v577
      %v579 = vand.u32 %v578, 4294901760
      %v580 = vsub.f32 %v578, %v579
      %v581 = vand.u32 %v580, 4294901760
      %582 = vmatpush.msra.mxu0 %v581
      %v583 = vand.u32 %v496, 4294901760
      %584 = vmatmul.f32.gmra.mxu0 %v583
      %v585 = vpop.f32.mrf.mxu0
      %v586 = vadd.f32 %v534, %v585
      %v587 = vand.u32 %v499, 4294901760
      %588 = vmatmul.f32.gmra.mxu0 %v587
      %v589 = vpop.f32.mrf.mxu0
      %v590 = vadd.f32 %v542, %v589
      %v591 = vand.u32 %v502, 4294901760
      %592 = vmatmul.f32.gmra.mxu0 %v591
      %v593 = vpop.f32.mrf.mxu0
      %v594 = vadd.f32 %v550, %v593
      %595 = vdwg.mxu0
      %596 = vmatpush.msra.mxu0 0.0
      %597 = vmatpush.msra.mxu0 0.0
      %598 = vmatpush.msra.mxu0 0.0
      %599 = vmatpush.msra.mxu0 0.0
      %600 = vmatpush.msra.mxu0 0.0
      %601 = vmatpush.msra.mxu0 0.0
      %602 = vmatpush.msra.mxu0 0.0
      %603 = vmatpush.msra.mxu0 0.0
      %604 = vmatpush.msra.mxu0 0.0
      %605 = vmatpush.msra.mxu0 0.0
      %606 = vmatpush.msra.mxu0 0.0
      %607 = vmatpush.msra.mxu0 0.0
      %608 = vmatpush.msra.mxu0 0.0
      %v609 = vand.u32 %v506, 4294901760
      %v610 = vsub.f32 %v506, %v609
      %611 = vmatpush.msra.mxu0 %v610
      %v612 = vand.u32 %v412, 4294901760
      %v613 = vsub.f32 %v412, %v612
      %614 = vmatpush.msra.mxu0 %v613
      %v615 = vand.u32 %v411, 4294901760
      %v616 = vsub.f32 %v411, %v615
      %617 = vmatpush.msra.mxu0 %v616
      %v618 = vand.u32 %v496, 4294901760
      %v619 = vsub.f32 %v496, %v618
      %620 = vmatmul.f32.gmra.mxu0 %v619
      %v621 = vpop.f32.mrf.mxu0
      %v622 = vadd.f32 %v586, %v621
      %v623 = vand.u32 %v499, 4294901760
      %v624 = vsub.f32 %v499, %v623
      %625 = vmatmul.f32.gmra.mxu0 %v624
      %v626 = vpop.f32.mrf.mxu0
      %v627 = vadd.f32 %v590, %v626
      %v628 = vand.u32 %v502, 4294901760
      %v629 = vsub.f32 %v502, %v628
      %630 = vmatmul.f32.gmra.mxu0 %v629
      %v631 = vpop.f32.mrf.mxu0
      %v632 = vadd.f32 %v594, %v631
      %633 = vdwg.mxu0
      %634 = vmatpush.msra.mxu0 0.0
      %635 = vmatpush.msra.mxu0 0.0
      %636 = vmatpush.msra.mxu0 0.0
      %637 = vmatpush.msra.mxu0 0.0
      %638 = vmatpush.msra.mxu0 0.0
      %639 = vmatpush.msra.mxu0 0.0
      %640 = vmatpush.msra.mxu0 0.0
      %641 = vmatpush.msra.mxu0 0.0
      %642 = vmatpush.msra.mxu0 0.0
      %643 = vmatpush.msra.mxu0 0.0
      %644 = vmatpush.msra.mxu0 0.0
      %645 = vmatpush.msra.mxu0 0.0
      %646 = vmatpush.msra.mxu0 0.0
      %v647 = vand.u32 %v506, 4294901760
      %648 = vmatpush.msra.mxu0 %v647
      %v649 = vand.u32 %v412, 4294901760
      %650 = vmatpush.msra.mxu0 %v649
      %v651 = vand.u32 %v411, 4294901760
      %652 = vmatpush.msra.mxu0 %v651
      %v653 = vand.u32 %v496, 4294901760
      %v654 = vsub.f32 %v496, %v653
      %v655 = vand.u32 %v654, 4294901760
      %656 = vmatmul.f32.gmra.mxu0 %v655
      %v657 = vpop.f32.mrf.mxu0
      %v658 = vadd.f32 %v622, %v657
      %v659 = vand.u32 %v499, 4294901760
      %v660 = vsub.f32 %v499, %v659
      %v661 = vand.u32 %v660, 4294901760
      %662 = vmatmul.f32.gmra.mxu0 %v661
      %v663 = vpop.f32.mrf.mxu0
      %v664 = vadd.f32 %v627, %v663
      %v665 = vand.u32 %v502, 4294901760
      %v666 = vsub.f32 %v502, %v665
      %v667 = vand.u32 %v666, 4294901760
      %668 = vmatmul.f32.gmra.mxu0 %v667
      %v669 = vpop.f32.mrf.mxu0
      %v670 = vadd.f32 %v632, %v669
      %671 = vdwg.mxu0
      %672 = vmatpush.msra.mxu0 0.0
      %673 = vmatpush.msra.mxu0 0.0
      %674 = vmatpush.msra.mxu0 0.0
      %675 = vmatpush.msra.mxu0 0.0
      %676 = vmatpush.msra.mxu0 0.0
      %677 = vmatpush.msra.mxu0 0.0
      %678 = vmatpush.msra.mxu0 0.0
      %679 = vmatpush.msra.mxu0 0.0
      %680 = vmatpush.msra.mxu0 0.0
      %681 = vmatpush.msra.mxu0 0.0
      %682 = vmatpush.msra.mxu0 0.0
      %683 = vmatpush.msra.mxu0 0.0
      %684 = vmatpush.msra.mxu0 0.0
      %v685 = vand.u32 %v506, 4294901760
      %v686 = vsub.f32 %v506, %v685
      %v687 = vand.u32 %v686, 4294901760
      %688 = vmatpush.msra.mxu0 %v687
      %v689 = vand.u32 %v412, 4294901760
      %v690 = vsub.f32 %v412, %v689
      %v691 = vand.u32 %v690, 4294901760
      %692 = vmatpush.msra.mxu0 %v691
      %v693 = vand.u32 %v411, 4294901760
      %v694 = vsub.f32 %v411, %v693
      %v695 = vand.u32 %v694, 4294901760
      %696 = vmatpush.msra.mxu0 %v695
      %v697 = vand.u32 %v496, 4294901760
      %698 = vmatmul.f32.gmra.mxu0 %v697
      %v699 = vpop.f32.mrf.mxu0
      %v700 = vadd.f32 %v658, %v699
      %v701 = vand.u32 %v499, 4294901760
      %702 = vmatmul.f32.gmra.mxu0 %v701
      %v703 = vpop.f32.mrf.mxu0
      %v704 = vadd.f32 %v664, %v703
      %v705 = vand.u32 %v502, 4294901760
      %706 = vmatmul.f32.gmra.mxu0 %v705
      %v707 = vpop.f32.mrf.mxu0
      %v708 = vadd.f32 %v670, %v707
      %709 = vdwg.mxu0
      %710 = vmatpush.msra.mxu0 0.0
      %711 = vmatpush.msra.mxu0 0.0
      %712 = vmatpush.msra.mxu0 0.0
      %713 = vmatpush.msra.mxu0 0.0
      %714 = vmatpush.msra.mxu0 0.0
      %715 = vmatpush.msra.mxu0 0.0
      %716 = vmatpush.msra.mxu0 0.0
      %717 = vmatpush.msra.mxu0 0.0
      %718 = vmatpush.msra.mxu0 0.0
      %719 = vmatpush.msra.mxu0 0.0
      %720 = vmatpush.msra.mxu0 0.0
      %721 = vmatpush.msra.mxu0 0.0
      %722 = vmatpush.msra.mxu0 0.0
      %v723 = vand.u32 %v506, 4294901760
      %724 = vmatpush.msra.mxu0 %v723
      %v725 = vand.u32 %v412, 4294901760
      %726 = vmatpush.msra.mxu0 %v725
      %v727 = vand.u32 %v411, 4294901760
      %728 = vmatpush.msra.mxu0 %v727
      %v729 = vand.u32 %v496, 4294901760
      %730 = vmatmul.f32.gmra.mxu0 %v729
      %v731 = vpop.f32.mrf.mxu0
      %v732 = vadd.f32 %v700, %v731
      %v733 = vand.u32 %v499, 4294901760
      %734 = vmatmul.f32.gmra.mxu0 %v733
      %v735 = vpop.f32.mrf.mxu0
      %v736 = vadd.f32 %v704, %v735
      %v737 = vand.u32 %v502, 4294901760
      %738 = vmatmul.f32.gmra.mxu0 %v737
      %v739 = vpop.f32.mrf.mxu0
      %v740 = vadd.f32 %v708, %v739
      %741 = vdwg.mxu0
      %v743 = vsel %vm494, %v478, 0
      %v746 = vsel %vm494, %v479, 0
      %v749 = vsel %vm494, %v480, 0
      %v752 = vsel %vm494, %v481, 0
      %v755 = vsel %vm494, %v482, 0
      %v758 = vsel %vm494, %v483, 0
      %v761 = vsel %vm494, %v484, 0
      %v764 = vsel %vm494, %v485, 0
      %v767 = vsel %vm494, %v486, 0
      %v770 = vsel %vm494, %v487, 0
      %v773 = vsel %vm494, %v488, 0
      %v776 = vsel %vm494, %v489, 0
      %v779 = vsel %vm494, %v490, 0
      %v782 = vsel %vm504, %v740, 0
      %784 = vmatpush.msra.mxu0 0.0
      %785 = vmatpush.msra.mxu0 0.0
      %786 = vmatpush.msra.mxu0 0.0
      %787 = vmatpush.msra.mxu0 0.0
      %788 = vmatpush.msra.mxu0 0.0
      %789 = vmatpush.msra.mxu0 0.0
      %790 = vmatpush.msra.mxu0 0.0
      %791 = vmatpush.msra.mxu0 0.0
      %792 = vmatpush.msra.mxu0 0.0
      %793 = vmatpush.msra.mxu0 0.0
      %794 = vmatpush.msra.mxu0 0.0
      %795 = vmatpush.msra.mxu0 0.0
      %796 = vmatpush.msra.mxu0 0.0
      %v797 = vand.u32 %v782, 4294901760
      %798 = vmatpush.msra.mxu0 %v797
      %v799 = vand.u32 %v736, 4294901760
      %800 = vmatpush.msra.mxu0 %v799
      %v801 = vand.u32 %v732, 4294901760
      %802 = vmatpush.msra.mxu0 %v801
      %v803 = vand.u32 %v743, 4294901760
      %v804 = vsub.f32 %v743, %v803
      %v805 = vand.u32 %v804, 4294901760
      %v806 = vsub.f32 %v804, %v805
      %v807 = vand.u32 %v806, 4294901760
      %808 = vmatmul.f32.gmra.mxu0 %v807
      %v809 = vpop.f32.mrf.mxu0
      %v810 = vadd.f32 0.0, %v809
      %v811 = vand.u32 %v746, 4294901760
      %v812 = vsub.f32 %v746, %v811
      %v813 = vand.u32 %v812, 4294901760
      %v814 = vsub.f32 %v812, %v813
      %v815 = vand.u32 %v814, 4294901760
      %816 = vmatmul.f32.gmra.mxu0 %v815
      %v817 = vpop.f32.mrf.mxu0
      %v818 = vadd.f32 0.0, %v817
      %v819 = vand.u32 %v749, 4294901760
      %v820 = vsub.f32 %v749, %v819
      %v821 = vand.u32 %v820, 4294901760
      %v822 = vsub.f32 %v820, %v821
      %v823 = vand.u32 %v822, 4294901760
      %824 = vmatmul.f32.gmra.mxu0 %v823
      %v825 = vpop.f32.mrf.mxu0
      %v826 = vadd.f32 0.0, %v825
      %v827 = vand.u32 %v752, 4294901760
      %v828 = vsub.f32 %v752, %v827
      %v829 = vand.u32 %v828, 4294901760
      %v830 = vsub.f32 %v828, %v829
      %v831 = vand.u32 %v830, 4294901760
      %832 = vmatmul.f32.gmra.mxu0 %v831
      %v833 = vpop.f32.mrf.mxu0
      %v834 = vadd.f32 0.0, %v833
      %v835 = vand.u32 %v755, 4294901760
      %v836 = vsub.f32 %v755, %v835
      %v837 = vand.u32 %v836, 4294901760
      %v838 = vsub.f32 %v836, %v837
      %v839 = vand.u32 %v838, 4294901760
      %840 = vmatmul.f32.gmra.mxu0 %v839
      %v841 = vpop.f32.mrf.mxu0
      %v842 = vadd.f32 0.0, %v841
      %v843 = vand.u32 %v758, 4294901760
      %v844 = vsub.f32 %v758, %v843
      %v845 = vand.u32 %v844, 4294901760
      %v846 = vsub.f32 %v844, %v845
      %v847 = vand.u32 %v846, 4294901760
      %848 = vmatmul.f32.gmra.mxu0 %v847
      %v849 = vpop.f32.mrf.mxu0
      %v850 = vadd.f32 0.0, %v849
      %v851 = vand.u32 %v761, 4294901760
      %v852 = vsub.f32 %v761, %v851
      %v853 = vand.u32 %v852, 4294901760
      %v854 = vsub.f32 %v852, %v853
      %v855 = vand.u32 %v854, 4294901760
      %856 = vmatmul.f32.gmra.mxu0 %v855
      %v857 = vpop.f32.mrf.mxu0
      %v858 = vadd.f32 0.0, %v857
      %v859 = vand.u32 %v764, 4294901760
      %v860 = vsub.f32 %v764, %v859
      %v861 = vand.u32 %v860, 4294901760
      %v862 = vsub.f32 %v860, %v861
      %v863 = vand.u32 %v862, 4294901760
      %864 = vmatmul.f32.gmra.mxu0 %v863
      %v865 = vpop.f32.mrf.mxu0
      %v866 = vadd.f32 0.0, %v865
      %v867 = vand.u32 %v767, 4294901760
      %v868 = vsub.f32 %v767, %v867
      %v869 = vand.u32 %v868, 4294901760
      %v870 = vsub.f32 %v868, %v869
      %v871 = vand.u32 %v870, 4294901760
      %872 = vmatmul.f32.gmra.mxu0 %v871
      %v873 = vpop.f32.mrf.mxu0
      %v874 = vadd.f32 0.0, %v873
      %v875 = vand.u32 %v770, 4294901760
      %v876 = vsub.f32 %v770, %v875
      %v877 = vand.u32 %v876, 4294901760
      %v878 = vsub.f32 %v876, %v877
      %v879 = vand.u32 %v878, 4294901760
      %880 = vmatmul.f32.gmra.mxu0 %v879
      %v881 = vpop.f32.mrf.mxu0
      %v882 = vadd.f32 0.0, %v881
      %v883 = vand.u32 %v773, 4294901760
      %v884 = vsub.f32 %v773, %v883
      %v885 = vand.u32 %v884, 4294901760
      %v886 = vsub.f32 %v884, %v885
      %v887 = vand.u32 %v886, 4294901760
      %888 = vmatmul.f32.gmra.mxu0 %v887
      %v889 = vpop.f32.mrf.mxu0
      %v890 = vadd.f32 0.0, %v889
      %v891 = vand.u32 %v776, 4294901760
      %v892 = vsub.f32 %v776, %v891
      %v893 = vand.u32 %v892, 4294901760
      %v894 = vsub.f32 %v892, %v893
      %v895 = vand.u32 %v894, 4294901760
      %896 = vmatmul.f32.gmra.mxu0 %v895
      %v897 = vpop.f32.mrf.mxu0
      %v898 = vadd.f32 0.0, %v897
      %v899 = vand.u32 %v779, 4294901760
      %v900 = vsub.f32 %v779, %v899
      %v901 = vand.u32 %v900, 4294901760
      %v902 = vsub.f32 %v900, %v901
      %v903 = vand.u32 %v902, 4294901760
      %904 = vmatmul.f32.gmra.mxu0 %v903
      %v905 = vpop.f32.mrf.mxu0
      %v906 = vadd.f32 0.0, %v905
      %907 = vdwg.mxu0
      %908 = vmatpush.msra.mxu0 0.0
      %909 = vmatpush.msra.mxu0 0.0
      %910 = vmatpush.msra.mxu0 0.0
      %911 = vmatpush.msra.mxu0 0.0
      %912 = vmatpush.msra.mxu0 0.0
      %913 = vmatpush.msra.mxu0 0.0
      %914 = vmatpush.msra.mxu0 0.0
      %915 = vmatpush.msra.mxu0 0.0
      %916 = vmatpush.msra.mxu0 0.0
      %917 = vmatpush.msra.mxu0 0.0
      %918 = vmatpush.msra.mxu0 0.0
      %919 = vmatpush.msra.mxu0 0.0
      %920 = vmatpush.msra.mxu0 0.0
      %v921 = vand.u32 %v782, 4294901760
      %v922 = vsub.f32 %v782, %v921
      %v923 = vand.u32 %v922, 4294901760
      %v924 = vsub.f32 %v922, %v923
      %v925 = vand.u32 %v924, 4294901760
      %926 = vmatpush.msra.mxu0 %v925
      %v927 = vand.u32 %v736, 4294901760
      %v928 = vsub.f32 %v736, %v927
      %v929 = vand.u32 %v928, 4294901760
      %v930 = vsub.f32 %v928, %v929
      %v931 = vand.u32 %v930, 4294901760
      %932 = vmatpush.msra.mxu0 %v931
      %v933 = vand.u32 %v732, 4294901760
      %v934 = vsub.f32 %v732, %v933
      %v935 = vand.u32 %v934, 4294901760
      %v936 = vsub.f32 %v934, %v935
      %v937 = vand.u32 %v936, 4294901760
      %938 = vmatpush.msra.mxu0 %v937
      %v939 = vand.u32 %v743, 4294901760
      %940 = vmatmul.f32.gmra.mxu0 %v939
      %v941 = vpop.f32.mrf.mxu0
      %v942 = vadd.f32 %v810, %v941
      %v943 = vand.u32 %v746, 4294901760
      %944 = vmatmul.f32.gmra.mxu0 %v943
      %v945 = vpop.f32.mrf.mxu0
      %v946 = vadd.f32 %v818, %v945
      %v947 = vand.u32 %v749, 4294901760
      %948 = vmatmul.f32.gmra.mxu0 %v947
      %v949 = vpop.f32.mrf.mxu0
      %v950 = vadd.f32 %v826, %v949
      %v951 = vand.u32 %v752, 4294901760
      %952 = vmatmul.f32.gmra.mxu0 %v951
      %v953 = vpop.f32.mrf.mxu0
      %v954 = vadd.f32 %v834, %v953
      %v955 = vand.u32 %v755, 4294901760
      %956 = vmatmul.f32.gmra.mxu0 %v955
      %v957 = vpop.f32.mrf.mxu0
      %v958 = vadd.f32 %v842, %v957
      %v959 = vand.u32 %v758, 4294901760
      %960 = vmatmul.f32.gmra.mxu0 %v959
      %v961 = vpop.f32.mrf.mxu0
      %v962 = vadd.f32 %v850, %v961
      %v963 = vand.u32 %v761, 4294901760
      %964 = vmatmul.f32.gmra.mxu0 %v963
      %v965 = vpop.f32.mrf.mxu0
      %v966 = vadd.f32 %v858, %v965
      %v967 = vand.u32 %v764, 4294901760
      %968 = vmatmul.f32.gmra.mxu0 %v967
      %v969 = vpop.f32.mrf.mxu0
      %v970 = vadd.f32 %v866, %v969
      %v971 = vand.u32 %v767, 4294901760
      %972 = vmatmul.f32.gmra.mxu0 %v971
      %v973 = vpop.f32.mrf.mxu0
      %v974 = vadd.f32 %v874, %v973
      %v975 = vand.u32 %v770, 4294901760
      %976 = vmatmul.f32.gmra.mxu0 %v975
      %v977 = vpop.f32.mrf.mxu0
      %v978 = vadd.f32 %v882, %v977
      %v979 = vand.u32 %v773, 4294901760
      %980 = vmatmul.f32.gmra.mxu0 %v979
      %v981 = vpop.f32.mrf.mxu0
      %v982 = vadd.f32 %v890, %v981
      %v983 = vand.u32 %v776, 4294901760
      %984 = vmatmul.f32.gmra.mxu0 %v983
      %v985 = vpop.f32.mrf.mxu0
      %v986 = vadd.f32 %v898, %v985
      %v987 = vand.u32 %v779, 4294901760
      %988 = vmatmul.f32.gmra.mxu0 %v987
      %v989 = vpop.f32.mrf.mxu0
      %v990 = vadd.f32 %v906, %v989
      %991 = vdwg.mxu0
      %992 = vmatpush.msra.mxu0 0.0
      %993 = vmatpush.msra.mxu0 0.0
      %994 = vmatpush.msra.mxu0 0.0
      %995 = vmatpush.msra.mxu0 0.0
      %996 = vmatpush.msra.mxu0 0.0
      %997 = vmatpush.msra.mxu0 0.0
      %998 = vmatpush.msra.mxu0 0.0
      %999 = vmatpush.msra.mxu0 0.0
      %1000 = vmatpush.msra.mxu0 0.0
      %1001 = vmatpush.msra.mxu0 0.0
      %1002 = vmatpush.msra.mxu0 0.0
      %1003 = vmatpush.msra.mxu0 0.0
      %1004 = vmatpush.msra.mxu0 0.0
      %v1005 = vand.u32 %v782, 4294901760
      %v1006 = vsub.f32 %v782, %v1005
      %1007 = vmatpush.msra.mxu0 %v1006
      %v1008 = vand.u32 %v736, 4294901760
      %v1009 = vsub.f32 %v736, %v1008
      %1010 = vmatpush.msra.mxu0 %v1009
      %v1011 = vand.u32 %v732, 4294901760
      %v1012 = vsub.f32 %v732, %v1011
      %1013 = vmatpush.msra.mxu0 %v1012
      %v1014 = vand.u32 %v743, 4294901760
      %v1015 = vsub.f32 %v743, %v1014
      %1016 = vmatmul.f32.gmra.mxu0 %v1015
      %v1017 = vpop.f32.mrf.mxu0
      %v1018 = vadd.f32 %v942, %v1017
      %v1019 = vand.u32 %v746, 4294901760
      %v1020 = vsub.f32 %v746, %v1019
      %1021 = vmatmul.f32.gmra.mxu0 %v1020
      %v1022 = vpop.f32.mrf.mxu0
      %v1023 = vadd.f32 %v946, %v1022
      %v1024 = vand.u32 %v749, 4294901760
      %v1025 = vsub.f32 %v749, %v1024
      %1026 = vmatmul.f32.gmra.mxu0 %v1025
      %v1027 = vpop.f32.mrf.mxu0
      %v1028 = vadd.f32 %v950, %v1027
      %v1029 = vand.u32 %v752, 4294901760
      %v1030 = vsub.f32 %v752, %v1029
      %1031 = vmatmul.f32.gmra.mxu0 %v1030
      %v1032 = vpop.f32.mrf.mxu0
      %v1033 = vadd.f32 %v954, %v1032
      %v1034 = vand.u32 %v755, 4294901760
      %v1035 = vsub.f32 %v755, %v1034
      %1036 = vmatmul.f32.gmra.mxu0 %v1035
      %v1037 = vpop.f32.mrf.mxu0
      %v1038 = vadd.f32 %v958, %v1037
      %v1039 = vand.u32 %v758, 4294901760
      %v1040 = vsub.f32 %v758, %v1039
      %1041 = vmatmul.f32.gmra.mxu0 %v1040
      %v1042 = vpop.f32.mrf.mxu0
      %v1043 = vadd.f32 %v962, %v1042
      %v1044 = vand.u32 %v761, 4294901760
      %v1045 = vsub.f32 %v761, %v1044
      %1046 = vmatmul.f32.gmra.mxu0 %v1045
      %v1047 = vpop.f32.mrf.mxu0
      %v1048 = vadd.f32 %v966, %v1047
      %v1049 = vand.u32 %v764, 4294901760
      %v1050 = vsub.f32 %v764, %v1049
      %1051 = vmatmul.f32.gmra.mxu0 %v1050
      %v1052 = vpop.f32.mrf.mxu0
      %v1053 = vadd.f32 %v970, %v1052
      %v1054 = vand.u32 %v767, 4294901760
      %v1055 = vsub.f32 %v767, %v1054
      %1056 = vmatmul.f32.gmra.mxu0 %v1055
      %v1057 = vpop.f32.mrf.mxu0
      %v1058 = vadd.f32 %v974, %v1057
      %v1059 = vand.u32 %v770, 4294901760
      %v1060 = vsub.f32 %v770, %v1059
      %1061 = vmatmul.f32.gmra.mxu0 %v1060
      %v1062 = vpop.f32.mrf.mxu0
      %v1063 = vadd.f32 %v978, %v1062
      %v1064 = vand.u32 %v773, 4294901760
      %v1065 = vsub.f32 %v773, %v1064
      %1066 = vmatmul.f32.gmra.mxu0 %v1065
      %v1067 = vpop.f32.mrf.mxu0
      %v1068 = vadd.f32 %v982, %v1067
      %v1069 = vand.u32 %v776, 4294901760
      %v1070 = vsub.f32 %v776, %v1069
      %1071 = vmatmul.f32.gmra.mxu0 %v1070
      %v1072 = vpop.f32.mrf.mxu0
      %v1073 = vadd.f32 %v986, %v1072
      %v1074 = vand.u32 %v779, 4294901760
      %v1075 = vsub.f32 %v779, %v1074
      %1076 = vmatmul.f32.gmra.mxu0 %v1075
      %v1077 = vpop.f32.mrf.mxu0
      %v1078 = vadd.f32 %v990, %v1077
      %1079 = vdwg.mxu0
      %1080 = vmatpush.msra.mxu0 0.0
      %1081 = vmatpush.msra.mxu0 0.0
      %1082 = vmatpush.msra.mxu0 0.0
      %1083 = vmatpush.msra.mxu0 0.0
      %1084 = vmatpush.msra.mxu0 0.0
      %1085 = vmatpush.msra.mxu0 0.0
      %1086 = vmatpush.msra.mxu0 0.0
      %1087 = vmatpush.msra.mxu0 0.0
      %1088 = vmatpush.msra.mxu0 0.0
      %1089 = vmatpush.msra.mxu0 0.0
      %1090 = vmatpush.msra.mxu0 0.0
      %1091 = vmatpush.msra.mxu0 0.0
      %1092 = vmatpush.msra.mxu0 0.0
      %v1093 = vand.u32 %v782, 4294901760
      %1094 = vmatpush.msra.mxu0 %v1093
      %v1095 = vand.u32 %v736, 4294901760
      %1096 = vmatpush.msra.mxu0 %v1095
      %v1097 = vand.u32 %v732, 4294901760
      %1098 = vmatpush.msra.mxu0 %v1097
      %v1099 = vand.u32 %v743, 4294901760
      %v1100 = vsub.f32 %v743, %v1099
      %v1101 = vand.u32 %v1100, 4294901760
      %1102 = vmatmul.f32.gmra.mxu0 %v1101
      %v1103 = vpop.f32.mrf.mxu0
      %v1104 = vadd.f32 %v1018, %v1103
      %v1105 = vand.u32 %v746, 4294901760
      %v1106 = vsub.f32 %v746, %v1105
      %v1107 = vand.u32 %v1106, 4294901760
      %1108 = vmatmul.f32.gmra.mxu0 %v1107
      %v1109 = vpop.f32.mrf.mxu0
      %v1110 = vadd.f32 %v1023, %v1109
      %v1111 = vand.u32 %v749, 4294901760
      %v1112 = vsub.f32 %v749, %v1111
      %v1113 = vand.u32 %v1112, 4294901760
      %1114 = vmatmul.f32.gmra.mxu0 %v1113
      %v1115 = vpop.f32.mrf.mxu0
      %v1116 = vadd.f32 %v1028, %v1115
      %v1117 = vand.u32 %v752, 4294901760
      %v1118 = vsub.f32 %v752, %v1117
      %v1119 = vand.u32 %v1118, 4294901760
      %1120 = vmatmul.f32.gmra.mxu0 %v1119
      %v1121 = vpop.f32.mrf.mxu0
      %v1122 = vadd.f32 %v1033, %v1121
      %v1123 = vand.u32 %v755, 4294901760
      %v1124 = vsub.f32 %v755, %v1123
      %v1125 = vand.u32 %v1124, 4294901760
      %1126 = vmatmul.f32.gmra.mxu0 %v1125
      %v1127 = vpop.f32.mrf.mxu0
      %v1128 = vadd.f32 %v1038, %v1127
      %v1129 = vand.u32 %v758, 4294901760
      %v1130 = vsub.f32 %v758, %v1129
      %v1131 = vand.u32 %v1130, 4294901760
      %1132 = vmatmul.f32.gmra.mxu0 %v1131
      %v1133 = vpop.f32.mrf.mxu0
      %v1134 = vadd.f32 %v1043, %v1133
      %v1135 = vand.u32 %v761, 4294901760
      %v1136 = vsub.f32 %v761, %v1135
      %v1137 = vand.u32 %v1136, 4294901760
      %1138 = vmatmul.f32.gmra.mxu0 %v1137
      %v1139 = vpop.f32.mrf.mxu0
      %v1140 = vadd.f32 %v1048, %v1139
      %v1141 = vand.u32 %v764, 4294901760
      %v1142 = vsub.f32 %v764, %v1141
      %v1143 = vand.u32 %v1142, 4294901760
      %1144 = vmatmul.f32.gmra.mxu0 %v1143
      %v1145 = vpop.f32.mrf.mxu0
      %v1146 = vadd.f32 %v1053, %v1145
      %v1147 = vand.u32 %v767, 4294901760
      %v1148 = vsub.f32 %v767, %v1147
      %v1149 = vand.u32 %v1148, 4294901760
      %1150 = vmatmul.f32.gmra.mxu0 %v1149
      %v1151 = vpop.f32.mrf.mxu0
      %v1152 = vadd.f32 %v1058, %v1151
      %v1153 = vand.u32 %v770, 4294901760
      %v1154 = vsub.f32 %v770, %v1153
      %v1155 = vand.u32 %v1154, 4294901760
      %1156 = vmatmul.f32.gmra.mxu0 %v1155
      %v1157 = vpop.f32.mrf.mxu0
      %v1158 = vadd.f32 %v1063, %v1157
      %v1159 = vand.u32 %v773, 4294901760
      %v1160 = vsub.f32 %v773, %v1159
      %v1161 = vand.u32 %v1160, 4294901760
      %1162 = vmatmul.f32.gmra.mxu0 %v1161
      %v1163 = vpop.f32.mrf.mxu0
      %v1164 = vadd.f32 %v1068, %v1163
      %v1165 = vand.u32 %v776, 4294901760
      %v1166 = vsub.f32 %v776, %v1165
      %v1167 = vand.u32 %v1166, 4294901760
      %1168 = vmatmul.f32.gmra.mxu0 %v1167
      %v1169 = vpop.f32.mrf.mxu0
      %v1170 = vadd.f32 %v1073, %v1169
      %v1171 = vand.u32 %v779, 4294901760
      %v1172 = vsub.f32 %v779, %v1171
      %v1173 = vand.u32 %v1172, 4294901760
      %1174 = vmatmul.f32.gmra.mxu0 %v1173
      %v1175 = vpop.f32.mrf.mxu0
      %v1176 = vadd.f32 %v1078, %v1175
      %1177 = vdwg.mxu0
      %1178 = vmatpush.msra.mxu0 0.0
      %1179 = vmatpush.msra.mxu0 0.0
      %1180 = vmatpush.msra.mxu0 0.0
      %1181 = vmatpush.msra.mxu0 0.0
      %1182 = vmatpush.msra.mxu0 0.0
      %1183 = vmatpush.msra.mxu0 0.0
      %1184 = vmatpush.msra.mxu0 0.0
      %1185 = vmatpush.msra.mxu0 0.0
      %1186 = vmatpush.msra.mxu0 0.0
      %1187 = vmatpush.msra.mxu0 0.0
      %1188 = vmatpush.msra.mxu0 0.0
      %1189 = vmatpush.msra.mxu0 0.0
      %1190 = vmatpush.msra.mxu0 0.0
      %v1191 = vand.u32 %v782, 4294901760
      %v1192 = vsub.f32 %v782, %v1191
      %v1193 = vand.u32 %v1192, 4294901760
      %1194 = vmatpush.msra.mxu0 %v1193
      %v1195 = vand.u32 %v736, 4294901760
      %v1196 = vsub.f32 %v736, %v1195
      %v1197 = vand.u32 %v1196, 4294901760
      %1198 = vmatpush.msra.mxu0 %v1197
      %v1199 = vand.u32 %v732, 4294901760
      %v1200 = vsub.f32 %v732, %v1199
      %v1201 = vand.u32 %v1200, 4294901760
      %1202 = vmatpush.msra.mxu0 %v1201
      %v1203 = vand.u32 %v743, 4294901760
      %1204 = vmatmul.f32.gmra.mxu0 %v1203
      %v1205 = vpop.f32.mrf.mxu0
      %v1206 = vadd.f32 %v1104, %v1205
      %v1207 = vand.u32 %v746, 4294901760
      %1208 = vmatmul.f32.gmra.mxu0 %v1207
      %v1209 = vpop.f32.mrf.mxu0
      %v1210 = vadd.f32 %v1110, %v1209
      %v1211 = vand.u32 %v749, 4294901760
      %1212 = vmatmul.f32.gmra.mxu0 %v1211
      %v1213 = vpop.f32.mrf.mxu0
      %v1214 = vadd.f32 %v1116, %v1213
      %v1215 = vand.u32 %v752, 4294901760
      %1216 = vmatmul.f32.gmra.mxu0 %v1215
      %v1217 = vpop.f32.mrf.mxu0
      %v1218 = vadd.f32 %v1122, %v1217
      %v1219 = vand.u32 %v755, 4294901760
      %1220 = vmatmul.f32.gmra.mxu0 %v1219
      %v1221 = vpop.f32.mrf.mxu0
      %v1222 = vadd.f32 %v1128, %v1221
      %v1223 = vand.u32 %v758, 4294901760
      %1224 = vmatmul.f32.gmra.mxu0 %v1223
      %v1225 = vpop.f32.mrf.mxu0
      %v1226 = vadd.f32 %v1134, %v1225
      %v1227 = vand.u32 %v761, 4294901760
      %1228 = vmatmul.f32.gmra.mxu0 %v1227
      %v1229 = vpop.f32.mrf.mxu0
      %v1230 = vadd.f32 %v1140, %v1229
      %v1231 = vand.u32 %v764, 4294901760
      %1232 = vmatmul.f32.gmra.mxu0 %v1231
      %v1233 = vpop.f32.mrf.mxu0
      %v1234 = vadd.f32 %v1146, %v1233
      %v1235 = vand.u32 %v767, 4294901760
      %1236 = vmatmul.f32.gmra.mxu0 %v1235
      %v1237 = vpop.f32.mrf.mxu0
      %v1238 = vadd.f32 %v1152, %v1237
      %v1239 = vand.u32 %v770, 4294901760
      %1240 = vmatmul.f32.gmra.mxu0 %v1239
      %v1241 = vpop.f32.mrf.mxu0
      %v1242 = vadd.f32 %v1158, %v1241
      %v1243 = vand.u32 %v773, 4294901760
      %1244 = vmatmul.f32.gmra.mxu0 %v1243
      %v1245 = vpop.f32.mrf.mxu0
      %v1246 = vadd.f32 %v1164, %v1245
      %v1247 = vand.u32 %v776, 4294901760
      %1248 = vmatmul.f32.gmra.mxu0 %v1247
      %v1249 = vpop.f32.mrf.mxu0
      %v1250 = vadd.f32 %v1170, %v1249
      %v1251 = vand.u32 %v779, 4294901760
      %1252 = vmatmul.f32.gmra.mxu0 %v1251
      %v1253 = vpop.f32.mrf.mxu0
      %v1254 = vadd.f32 %v1176, %v1253
      %1255 = vdwg.mxu0
      %1256 = vmatpush.msra.mxu0 0.0
      %1257 = vmatpush.msra.mxu0 0.0
      %1258 = vmatpush.msra.mxu0 0.0
      %1259 = vmatpush.msra.mxu0 0.0
      %1260 = vmatpush.msra.mxu0 0.0
      %1261 = vmatpush.msra.mxu0 0.0
      %1262 = vmatpush.msra.mxu0 0.0
      %1263 = vmatpush.msra.mxu0 0.0
      %1264 = vmatpush.msra.mxu0 0.0
      %1265 = vmatpush.msra.mxu0 0.0
      %1266 = vmatpush.msra.mxu0 0.0
      %1267 = vmatpush.msra.mxu0 0.0
      %1268 = vmatpush.msra.mxu0 0.0
      %v1269 = vand.u32 %v782, 4294901760
      %1270 = vmatpush.msra.mxu0 %v1269
      %v1271 = vand.u32 %v736, 4294901760
      %1272 = vmatpush.msra.mxu0 %v1271
      %v1273 = vand.u32 %v732, 4294901760
      %1274 = vmatpush.msra.mxu0 %v1273
      %v1275 = vand.u32 %v743, 4294901760
      %1276 = vmatmul.f32.gmra.mxu0 %v1275
      %v1277 = vpop.f32.mrf.mxu0
      %v1278 = vadd.f32 %v1206, %v1277
      %v1279 = vand.u32 %v746, 4294901760
      %1280 = vmatmul.f32.gmra.mxu0 %v1279
      %v1281 = vpop.f32.mrf.mxu0
      %v1282 = vadd.f32 %v1210, %v1281
      %v1283 = vand.u32 %v749, 4294901760
      %1284 = vmatmul.f32.gmra.mxu0 %v1283
      %v1285 = vpop.f32.mrf.mxu0
      %v1286 = vadd.f32 %v1214, %v1285
      %v1287 = vand.u32 %v752, 4294901760
      %1288 = vmatmul.f32.gmra.mxu0 %v1287
      %v1289 = vpop.f32.mrf.mxu0
      %v1290 = vadd.f32 %v1218, %v1289
      %v1291 = vand.u32 %v755, 4294901760
      %1292 = vmatmul.f32.gmra.mxu0 %v1291
      %v1293 = vpop.f32.mrf.mxu0
      %v1294 = vadd.f32 %v1222, %v1293
      %v1295 = vand.u32 %v758, 4294901760
      %1296 = vmatmul.f32.gmra.mxu0 %v1295
      %v1297 = vpop.f32.mrf.mxu0
      %v1298 = vadd.f32 %v1226, %v1297
      %v1299 = vand.u32 %v761, 4294901760
      %1300 = vmatmul.f32.gmra.mxu0 %v1299
      %v1301 = vpop.f32.mrf.mxu0
      %v1302 = vadd.f32 %v1230, %v1301
      %v1303 = vand.u32 %v764, 4294901760
      %1304 = vmatmul.f32.gmra.mxu0 %v1303
      %v1305 = vpop.f32.mrf.mxu0
      %v1306 = vadd.f32 %v1234, %v1305
      %v1307 = vand.u32 %v767, 4294901760
      %1308 = vmatmul.f32.gmra.mxu0 %v1307
      %v1309 = vpop.f32.mrf.mxu0
      %v1310 = vadd.f32 %v1238, %v1309
      %v1311 = vand.u32 %v770, 4294901760
      %1312 = vmatmul.f32.gmra.mxu0 %v1311
      %v1313 = vpop.f32.mrf.mxu0
      %v1314 = vadd.f32 %v1242, %v1313
      %v1315 = vand.u32 %v773, 4294901760
      %1316 = vmatmul.f32.gmra.mxu0 %v1315
      %v1317 = vpop.f32.mrf.mxu0
      %v1318 = vadd.f32 %v1246, %v1317
      %v1319 = vand.u32 %v776, 4294901760
      %1320 = vmatmul.f32.gmra.mxu0 %v1319
      %v1321 = vpop.f32.mrf.mxu0
      %v1322 = vadd.f32 %v1250, %v1321
      %v1323 = vand.u32 %v779, 4294901760
      %1324 = vmatmul.f32.gmra.mxu0 %v1323
      %v1325 = vpop.f32.mrf.mxu0
      %v1326 = vadd.f32 %v1254, %v1325
      %1327 = vdwg.mxu0
      %s1328 = scalar_lea.vmem %s227, 312
      %1329 = vst.msk [vmem:[%s1328] sm:$0xff] %vm307, %v1278
      %1330 = vst.msk [vmem:[%s1328 + $0x8] sm:$0xff] %vm307, %v1282
      %1331 = vst.msk [vmem:[%s1328 + $0x10] sm:$0xff] %vm307, %v1286
      %1332 = vst.msk [vmem:[%s1328 + $0x18] sm:$0xff] %vm307, %v1290
      %1333 = vst.msk [vmem:[%s1328 + $0x20] sm:$0xff] %vm307, %v1294
      %1334 = vst.msk [vmem:[%s1328 + $0x28] sm:$0xff] %vm307, %v1298
      %1335 = vst.msk [vmem:[%s1328 + $0x30] sm:$0xff] %vm307, %v1302
      %1336 = vst.msk [vmem:[%s1328 + $0x38] sm:$0xff] %vm307, %v1306
      %1337 = vst.msk [vmem:[%s1328 + $0x40] sm:$0xff] %vm307, %v1310
      %1338 = vst.msk [vmem:[%s1328 + $0x48] sm:$0xff] %vm307, %v1314
      %1339 = vst.msk [vmem:[%s1328 + $0x50] sm:$0xff] %vm307, %v1318
      %1340 = vst.msk [vmem:[%s1328 + $0x58] sm:$0xff] %vm307, %v1322
      %1341 = vst.msk [vmem:[%s1328 + $0x60] sm:$0xf] %vm320, %v1326
      %s1342 = scalar_lea.vmem %s213, 24
      %v1343 = vld [vmem:[%s1342] sm:$0xff]
      %v1344 = vld [vmem:[%s1342 + $0x8] sm:$0xff]
      %v1345 = vld [vmem:[%s1342 + $0x10] sm:$0xf]
      %v1347 = vsel %vm494, %v1343, 0
      %v1350 = vsel %vm494, %v1344, 0
      %v1353 = vsel %vm494, %v1345, 0
      %1355 = vmatpush.msra.mxu0 0.0
      %1356 = vmatpush.msra.mxu0 0.0
      %1357 = vmatpush.msra.mxu0 0.0
      %1358 = vmatpush.msra.mxu0 0.0
      %1359 = vmatpush.msra.mxu0 0.0
      %1360 = vmatpush.msra.mxu0 0.0
      %1361 = vmatpush.msra.mxu0 0.0
      %1362 = vmatpush.msra.mxu0 0.0
      %1363 = vmatpush.msra.mxu0 0.0
      %1364 = vmatpush.msra.mxu0 0.0
      %1365 = vmatpush.msra.mxu0 0.0
      %1366 = vmatpush.msra.mxu0 0.0
      %1367 = vmatpush.msra.mxu0 0.0
      %v1368 = vand.u32 %v506, 4294901760
      %1369 = vmatpush.msra.mxu0 %v1368
      %v1370 = vand.u32 %v412, 4294901760
      %1371 = vmatpush.msra.mxu0 %v1370
      %v1372 = vand.u32 %v411, 4294901760
      %1373 = vmatpush.msra.mxu0 %v1372
      %v1374 = vand.u32 %v1347, 4294901760
      %v1375 = vsub.f32 %v1347, %v1374
      %v1376 = vand.u32 %v1375, 4294901760
      %v1377 = vsub.f32 %v1375, %v1376
      %v1378 = vand.u32 %v1377, 4294901760
      %1379 = vmatmul.f32.gmra.mxu0 %v1378
      %v1380 = vpop.f32.mrf.mxu0
      %v1381 = vadd.f32 0.0, %v1380
      %v1382 = vand.u32 %v1350, 4294901760
      %v1383 = vsub.f32 %v1350, %v1382
      %v1384 = vand.u32 %v1383, 4294901760
      %v1385 = vsub.f32 %v1383, %v1384
      %v1386 = vand.u32 %v1385, 4294901760
      %1387 = vmatmul.f32.gmra.mxu0 %v1386
      %v1388 = vpop.f32.mrf.mxu0
      %v1389 = vadd.f32 0.0, %v1388
      %v1390 = vand.u32 %v1353, 4294901760
      %v1391 = vsub.f32 %v1353, %v1390
      %v1392 = vand.u32 %v1391, 4294901760
      %v1393 = vsub.f32 %v1391, %v1392
      %v1394 = vand.u32 %v1393, 4294901760
      %1395 = vmatmul.f32.gmra.mxu0 %v1394
      %v1396 = vpop.f32.mrf.mxu0
      %v1397 = vadd.f32 0.0, %v1396
      %1398 = vdwg.mxu0
      %1399 = vmatpush.msra.mxu0 0.0
      %1400 = vmatpush.msra.mxu0 0.0
      %1401 = vmatpush.msra.mxu0 0.0
      %1402 = vmatpush.msra.mxu0 0.0
      %1403 = vmatpush.msra.mxu0 0.0
      %1404 = vmatpush.msra.mxu0 0.0
      %1405 = vmatpush.msra.mxu0 0.0
      %1406 = vmatpush.msra.mxu0 0.0
      %1407 = vmatpush.msra.mxu0 0.0
      %1408 = vmatpush.msra.mxu0 0.0
      %1409 = vmatpush.msra.mxu0 0.0
      %1410 = vmatpush.msra.mxu0 0.0
      %1411 = vmatpush.msra.mxu0 0.0
      %v1412 = vand.u32 %v506, 4294901760
      %v1413 = vsub.f32 %v506, %v1412
      %v1414 = vand.u32 %v1413, 4294901760
      %v1415 = vsub.f32 %v1413, %v1414
      %v1416 = vand.u32 %v1415, 4294901760
      %1417 = vmatpush.msra.mxu0 %v1416
      %v1418 = vand.u32 %v412, 4294901760
      %v1419 = vsub.f32 %v412, %v1418
      %v1420 = vand.u32 %v1419, 4294901760
      %v1421 = vsub.f32 %v1419, %v1420
      %v1422 = vand.u32 %v1421, 4294901760
      %1423 = vmatpush.msra.mxu0 %v1422
      %v1424 = vand.u32 %v411, 4294901760
      %v1425 = vsub.f32 %v411, %v1424
      %v1426 = vand.u32 %v1425, 4294901760
      %v1427 = vsub.f32 %v1425, %v1426
      %v1428 = vand.u32 %v1427, 4294901760
      %1429 = vmatpush.msra.mxu0 %v1428
      %v1430 = vand.u32 %v1347, 4294901760
      %1431 = vmatmul.f32.gmra.mxu0 %v1430
      %v1432 = vpop.f32.mrf.mxu0
      %v1433 = vadd.f32 %v1381, %v1432
      %v1434 = vand.u32 %v1350, 4294901760
      %1435 = vmatmul.f32.gmra.mxu0 %v1434
      %v1436 = vpop.f32.mrf.mxu0
      %v1437 = vadd.f32 %v1389, %v1436
      %v1438 = vand.u32 %v1353, 4294901760
      %1439 = vmatmul.f32.gmra.mxu0 %v1438
      %v1440 = vpop.f32.mrf.mxu0
      %v1441 = vadd.f32 %v1397, %v1440
      %1442 = vdwg.mxu0
      %1443 = vmatpush.msra.mxu0 0.0
      %1444 = vmatpush.msra.mxu0 0.0
      %1445 = vmatpush.msra.mxu0 0.0
      %1446 = vmatpush.msra.mxu0 0.0
      %1447 = vmatpush.msra.mxu0 0.0
      %1448 = vmatpush.msra.mxu0 0.0
      %1449 = vmatpush.msra.mxu0 0.0
      %1450 = vmatpush.msra.mxu0 0.0
      %1451 = vmatpush.msra.mxu0 0.0
      %1452 = vmatpush.msra.mxu0 0.0
      %1453 = vmatpush.msra.mxu0 0.0
      %1454 = vmatpush.msra.mxu0 0.0
      %1455 = vmatpush.msra.mxu0 0.0
      %v1456 = vand.u32 %v506, 4294901760
      %v1457 = vsub.f32 %v506, %v1456
      %1458 = vmatpush.msra.mxu0 %v1457
      %v1459 = vand.u32 %v412, 4294901760
      %v1460 = vsub.f32 %v412, %v1459
      %1461 = vmatpush.msra.mxu0 %v1460
      %v1462 = vand.u32 %v411, 4294901760
      %v1463 = vsub.f32 %v411, %v1462
      %1464 = vmatpush.msra.mxu0 %v1463
      %v1465 = vand.u32 %v1347, 4294901760
      %v1466 = vsub.f32 %v1347, %v1465
      %1467 = vmatmul.f32.gmra.mxu0 %v1466
      %v1468 = vpop.f32.mrf.mxu0
      %v1469 = vadd.f32 %v1433, %v1468
      %v1470 = vand.u32 %v1350, 4294901760
      %v1471 = vsub.f32 %v1350, %v1470
      %1472 = vmatmul.f32.gmra.mxu0 %v1471
      %v1473 = vpop.f32.mrf.mxu0
      %v1474 = vadd.f32 %v1437, %v1473
      %v1475 = vand.u32 %v1353, 4294901760
      %v1476 = vsub.f32 %v1353, %v1475
      %1477 = vmatmul.f32.gmra.mxu0 %v1476
      %v1478 = vpop.f32.mrf.mxu0
      %v1479 = vadd.f32 %v1441, %v1478
      %1480 = vdwg.mxu0
      %1481 = vmatpush.msra.mxu0 0.0
      %1482 = vmatpush.msra.mxu0 0.0
      %1483 = vmatpush.msra.mxu0 0.0
      %1484 = vmatpush.msra.mxu0 0.0
      %1485 = vmatpush.msra.mxu0 0.0
      %1486 = vmatpush.msra.mxu0 0.0
      %1487 = vmatpush.msra.mxu0 0.0
      %1488 = vmatpush.msra.mxu0 0.0
      %1489 = vmatpush.msra.mxu0 0.0
      %1490 = vmatpush.msra.mxu0 0.0
      %1491 = vmatpush.msra.mxu0 0.0
      %1492 = vmatpush.msra.mxu0 0.0
      %1493 = vmatpush.msra.mxu0 0.0
      %v1494 = vand.u32 %v506, 4294901760
      %1495 = vmatpush.msra.mxu0 %v1494
      %v1496 = vand.u32 %v412, 4294901760
      %1497 = vmatpush.msra.mxu0 %v1496
      %v1498 = vand.u32 %v411, 4294901760
      %1499 = vmatpush.msra.mxu0 %v1498
      %v1500 = vand.u32 %v1347, 4294901760
      %v1501 = vsub.f32 %v1347, %v1500
      %v1502 = vand.u32 %v1501, 4294901760
      %1503 = vmatmul.f32.gmra.mxu0 %v1502
      %v1504 = vpop.f32.mrf.mxu0
      %v1505 = vadd.f32 %v1469, %v1504
      %v1506 = vand.u32 %v1350, 4294901760
      %v1507 = vsub.f32 %v1350, %v1506
      %v1508 = vand.u32 %v1507, 4294901760
      %1509 = vmatmul.f32.gmra.mxu0 %v1508
      %v1510 = vpop.f32.mrf.mxu0
      %v1511 = vadd.f32 %v1474, %v1510
      %v1512 = vand.u32 %v1353, 4294901760
      %v1513 = vsub.f32 %v1353, %v1512
      %v1514 = vand.u32 %v1513, 4294901760
      %1515 = vmatmul.f32.gmra.mxu0 %v1514
      %v1516 = vpop.f32.mrf.mxu0
      %v1517 = vadd.f32 %v1479, %v1516
      %1518 = vdwg.mxu0
      %1519 = vmatpush.msra.mxu0 0.0
      %1520 = vmatpush.msra.mxu0 0.0
      %1521 = vmatpush.msra.mxu0 0.0
      %1522 = vmatpush.msra.mxu0 0.0
      %1523 = vmatpush.msra.mxu0 0.0
      %1524 = vmatpush.msra.mxu0 0.0
      %1525 = vmatpush.msra.mxu0 0.0
      %1526 = vmatpush.msra.mxu0 0.0
      %1527 = vmatpush.msra.mxu0 0.0
      %1528 = vmatpush.msra.mxu0 0.0
      %1529 = vmatpush.msra.mxu0 0.0
      %1530 = vmatpush.msra.mxu0 0.0
      %1531 = vmatpush.msra.mxu0 0.0
      %v1532 = vand.u32 %v506, 4294901760
      %v1533 = vsub.f32 %v506, %v1532
      %v1534 = vand.u32 %v1533, 4294901760
      %1535 = vmatpush.msra.mxu0 %v1534
      %v1536 = vand.u32 %v412, 4294901760
      %v1537 = vsub.f32 %v412, %v1536
      %v1538 = vand.u32 %v1537, 4294901760
      %1539 = vmatpush.msra.mxu0 %v1538
      %v1540 = vand.u32 %v411, 4294901760
      %v1541 = vsub.f32 %v411, %v1540
      %v1542 = vand.u32 %v1541, 4294901760
      %1543 = vmatpush.msra.mxu0 %v1542
      %v1544 = vand.u32 %v1347, 4294901760
      %1545 = vmatmul.f32.gmra.mxu0 %v1544
      %v1546 = vpop.f32.mrf.mxu0
      %v1547 = vadd.f32 %v1505, %v1546
      %v1548 = vand.u32 %v1350, 4294901760
      %1549 = vmatmul.f32.gmra.mxu0 %v1548
      %v1550 = vpop.f32.mrf.mxu0
      %v1551 = vadd.f32 %v1511, %v1550
      %v1552 = vand.u32 %v1353, 4294901760
      %1553 = vmatmul.f32.gmra.mxu0 %v1552
      %v1554 = vpop.f32.mrf.mxu0
      %v1555 = vadd.f32 %v1517, %v1554
      %1556 = vdwg.mxu0
      %1557 = vmatpush.msra.mxu0 0.0
      %1558 = vmatpush.msra.mxu0 0.0
      %1559 = vmatpush.msra.mxu0 0.0
      %1560 = vmatpush.msra.mxu0 0.0
      %1561 = vmatpush.msra.mxu0 0.0
      %1562 = vmatpush.msra.mxu0 0.0
      %1563 = vmatpush.msra.mxu0 0.0
      %1564 = vmatpush.msra.mxu0 0.0
      %1565 = vmatpush.msra.mxu0 0.0
      %1566 = vmatpush.msra.mxu0 0.0
      %1567 = vmatpush.msra.mxu0 0.0
      %1568 = vmatpush.msra.mxu0 0.0
      %1569 = vmatpush.msra.mxu0 0.0
      %v1570 = vand.u32 %v506, 4294901760
      %1571 = vmatpush.msra.mxu0 %v1570
      %v1572 = vand.u32 %v412, 4294901760
      %1573 = vmatpush.msra.mxu0 %v1572
      %v1574 = vand.u32 %v411, 4294901760
      %1575 = vmatpush.msra.mxu0 %v1574
      %v1576 = vand.u32 %v1347, 4294901760
      %1577 = vmatmul.f32.gmra.mxu0 %v1576
      %v1578 = vpop.f32.mrf.mxu0
      %v1579 = vadd.f32 %v1547, %v1578
      %v1580 = vand.u32 %v1350, 4294901760
      %1581 = vmatmul.f32.gmra.mxu0 %v1580
      %v1582 = vpop.f32.mrf.mxu0
      %v1583 = vadd.f32 %v1551, %v1582
      %v1584 = vand.u32 %v1353, 4294901760
      %1585 = vmatmul.f32.gmra.mxu0 %v1584
      %v1586 = vpop.f32.mrf.mxu0
      %v1587 = vadd.f32 %v1555, %v1586
      %1588 = vdwg.mxu0
      %v1590 = vsel %vm504, %v1587, 0
      %1592 = vmatpush.msra.mxu0 0.0
      %1593 = vmatpush.msra.mxu0 0.0
      %1594 = vmatpush.msra.mxu0 0.0
      %1595 = vmatpush.msra.mxu0 0.0
      %1596 = vmatpush.msra.mxu0 0.0
      %1597 = vmatpush.msra.mxu0 0.0
      %1598 = vmatpush.msra.mxu0 0.0
      %1599 = vmatpush.msra.mxu0 0.0
      %1600 = vmatpush.msra.mxu0 0.0
      %1601 = vmatpush.msra.mxu0 0.0
      %1602 = vmatpush.msra.mxu0 0.0
      %1603 = vmatpush.msra.mxu0 0.0
      %1604 = vmatpush.msra.mxu0 0.0
      %v1605 = vand.u32 %v1590, 4294901760
      %1606 = vmatpush.msra.mxu0 %v1605
      %v1607 = vand.u32 %v1583, 4294901760
      %1608 = vmatpush.msra.mxu0 %v1607
      %v1609 = vand.u32 %v1579, 4294901760
      %1610 = vmatpush.msra.mxu0 %v1609
      %v1611 = vand.u32 %v743, 4294901760
      %v1612 = vsub.f32 %v743, %v1611
      %v1613 = vand.u32 %v1612, 4294901760
      %v1614 = vsub.f32 %v1612, %v1613
      %v1615 = vand.u32 %v1614, 4294901760
      %1616 = vmatmul.f32.gmra.mxu0 %v1615
      %v1617 = vpop.f32.mrf.mxu0
      %v1618 = vadd.f32 0.0, %v1617
      %v1619 = vand.u32 %v746, 4294901760
      %v1620 = vsub.f32 %v746, %v1619
      %v1621 = vand.u32 %v1620, 4294901760
      %v1622 = vsub.f32 %v1620, %v1621
      %v1623 = vand.u32 %v1622, 4294901760
      %1624 = vmatmul.f32.gmra.mxu0 %v1623
      %v1625 = vpop.f32.mrf.mxu0
      %v1626 = vadd.f32 0.0, %v1625
      %v1627 = vand.u32 %v749, 4294901760
      %v1628 = vsub.f32 %v749, %v1627
      %v1629 = vand.u32 %v1628, 4294901760
      %v1630 = vsub.f32 %v1628, %v1629
      %v1631 = vand.u32 %v1630, 4294901760
      %1632 = vmatmul.f32.gmra.mxu0 %v1631
      %v1633 = vpop.f32.mrf.mxu0
      %v1634 = vadd.f32 0.0, %v1633
      %v1635 = vand.u32 %v752, 4294901760
      %v1636 = vsub.f32 %v752, %v1635
      %v1637 = vand.u32 %v1636, 4294901760
      %v1638 = vsub.f32 %v1636, %v1637
      %v1639 = vand.u32 %v1638, 4294901760
      %1640 = vmatmul.f32.gmra.mxu0 %v1639
      %v1641 = vpop.f32.mrf.mxu0
      %v1642 = vadd.f32 0.0, %v1641
      %v1643 = vand.u32 %v755, 4294901760
      %v1644 = vsub.f32 %v755, %v1643
      %v1645 = vand.u32 %v1644, 4294901760
      %v1646 = vsub.f32 %v1644, %v1645
      %v1647 = vand.u32 %v1646, 4294901760
      %1648 = vmatmul.f32.gmra.mxu0 %v1647
      %v1649 = vpop.f32.mrf.mxu0
      %v1650 = vadd.f32 0.0, %v1649
      %v1651 = vand.u32 %v758, 4294901760
      %v1652 = vsub.f32 %v758, %v1651
      %v1653 = vand.u32 %v1652, 4294901760
      %v1654 = vsub.f32 %v1652, %v1653
      %v1655 = vand.u32 %v1654, 4294901760
      %1656 = vmatmul.f32.gmra.mxu0 %v1655
      %v1657 = vpop.f32.mrf.mxu0
      %v1658 = vadd.f32 0.0, %v1657
      %v1659 = vand.u32 %v761, 4294901760
      %v1660 = vsub.f32 %v761, %v1659
      %v1661 = vand.u32 %v1660, 4294901760
      %v1662 = vsub.f32 %v1660, %v1661
      %v1663 = vand.u32 %v1662, 4294901760
      %1664 = vmatmul.f32.gmra.mxu0 %v1663
      %v1665 = vpop.f32.mrf.mxu0
      %v1666 = vadd.f32 0.0, %v1665
      %v1667 = vand.u32 %v764, 4294901760
      %v1668 = vsub.f32 %v764, %v1667
      %v1669 = vand.u32 %v1668, 4294901760
      %v1670 = vsub.f32 %v1668, %v1669
      %v1671 = vand.u32 %v1670, 4294901760
      %1672 = vmatmul.f32.gmra.mxu0 %v1671
      %v1673 = vpop.f32.mrf.mxu0
      %v1674 = vadd.f32 0.0, %v1673
      %v1675 = vand.u32 %v767, 4294901760
      %v1676 = vsub.f32 %v767, %v1675
      %v1677 = vand.u32 %v1676, 4294901760
      %v1678 = vsub.f32 %v1676, %v1677
      %v1679 = vand.u32 %v1678, 4294901760
      %1680 = vmatmul.f32.gmra.mxu0 %v1679
      %v1681 = vpop.f32.mrf.mxu0
      %v1682 = vadd.f32 0.0, %v1681
      %v1683 = vand.u32 %v770, 4294901760
      %v1684 = vsub.f32 %v770, %v1683
      %v1685 = vand.u32 %v1684, 4294901760
      %v1686 = vsub.f32 %v1684, %v1685
      %v1687 = vand.u32 %v1686, 4294901760
      %1688 = vmatmul.f32.gmra.mxu0 %v1687
      %v1689 = vpop.f32.mrf.mxu0
      %v1690 = vadd.f32 0.0, %v1689
      %v1691 = vand.u32 %v773, 4294901760
      %v1692 = vsub.f32 %v773, %v1691
      %v1693 = vand.u32 %v1692, 4294901760
      %v1694 = vsub.f32 %v1692, %v1693
      %v1695 = vand.u32 %v1694, 4294901760
      %1696 = vmatmul.f32.gmra.mxu0 %v1695
      %v1697 = vpop.f32.mrf.mxu0
      %v1698 = vadd.f32 0.0, %v1697
      %v1699 = vand.u32 %v776, 4294901760
      %v1700 = vsub.f32 %v776, %v1699
      %v1701 = vand.u32 %v1700, 4294901760
      %v1702 = vsub.f32 %v1700, %v1701
      %v1703 = vand.u32 %v1702, 4294901760
      %1704 = vmatmul.f32.gmra.mxu0 %v1703
      %v1705 = vpop.f32.mrf.mxu0
      %v1706 = vadd.f32 0.0, %v1705
      %v1707 = vand.u32 %v779, 4294901760
      %v1708 = vsub.f32 %v779, %v1707
      %v1709 = vand.u32 %v1708, 4294901760
      %v1710 = vsub.f32 %v1708, %v1709
      %v1711 = vand.u32 %v1710, 4294901760
      %1712 = vmatmul.f32.gmra.mxu0 %v1711
      %v1713 = vpop.f32.mrf.mxu0
      %v1714 = vadd.f32 0.0, %v1713
      %1715 = vdwg.mxu0
      %1716 = vmatpush.msra.mxu0 0.0
      %1717 = vmatpush.msra.mxu0 0.0
      %1718 = vmatpush.msra.mxu0 0.0
      %1719 = vmatpush.msra.mxu0 0.0
      %1720 = vmatpush.msra.mxu0 0.0
      %1721 = vmatpush.msra.mxu0 0.0
      %1722 = vmatpush.msra.mxu0 0.0
      %1723 = vmatpush.msra.mxu0 0.0
      %1724 = vmatpush.msra.mxu0 0.0
      %1725 = vmatpush.msra.mxu0 0.0
      %1726 = vmatpush.msra.mxu0 0.0
      %1727 = vmatpush.msra.mxu0 0.0
      %1728 = vmatpush.msra.mxu0 0.0
      %v1729 = vand.u32 %v1590, 4294901760
      %v1730 = vsub.f32 %v1590, %v1729
      %v1731 = vand.u32 %v1730, 4294901760
      %v1732 = vsub.f32 %v1730, %v1731
      %v1733 = vand.u32 %v1732, 4294901760
      %1734 = vmatpush.msra.mxu0 %v1733
      %v1735 = vand.u32 %v1583, 4294901760
      %v1736 = vsub.f32 %v1583, %v1735
      %v1737 = vand.u32 %v1736, 4294901760
      %v1738 = vsub.f32 %v1736, %v1737
      %v1739 = vand.u32 %v1738, 4294901760
      %1740 = vmatpush.msra.mxu0 %v1739
      %v1741 = vand.u32 %v1579, 4294901760
      %v1742 = vsub.f32 %v1579, %v1741
      %v1743 = vand.u32 %v1742, 4294901760
      %v1744 = vsub.f32 %v1742, %v1743
      %v1745 = vand.u32 %v1744, 4294901760
      %1746 = vmatpush.msra.mxu0 %v1745
      %v1747 = vand.u32 %v743, 4294901760
      %1748 = vmatmul.f32.gmra.mxu0 %v1747
      %v1749 = vpop.f32.mrf.mxu0
      %v1750 = vadd.f32 %v1618, %v1749
      %v1751 = vand.u32 %v746, 4294901760
      %1752 = vmatmul.f32.gmra.mxu0 %v1751
      %v1753 = vpop.f32.mrf.mxu0
      %v1754 = vadd.f32 %v1626, %v1753
      %v1755 = vand.u32 %v749, 4294901760
      %1756 = vmatmul.f32.gmra.mxu0 %v1755
      %v1757 = vpop.f32.mrf.mxu0
      %v1758 = vadd.f32 %v1634, %v1757
      %v1759 = vand.u32 %v752, 4294901760
      %1760 = vmatmul.f32.gmra.mxu0 %v1759
      %v1761 = vpop.f32.mrf.mxu0
      %v1762 = vadd.f32 %v1642, %v1761
      %v1763 = vand.u32 %v755, 4294901760
      %1764 = vmatmul.f32.gmra.mxu0 %v1763
      %v1765 = vpop.f32.mrf.mxu0
      %v1766 = vadd.f32 %v1650, %v1765
      %v1767 = vand.u32 %v758, 4294901760
      %1768 = vmatmul.f32.gmra.mxu0 %v1767
      %v1769 = vpop.f32.mrf.mxu0
      %v1770 = vadd.f32 %v1658, %v1769
      %v1771 = vand.u32 %v761, 4294901760
      %1772 = vmatmul.f32.gmra.mxu0 %v1771
      %v1773 = vpop.f32.mrf.mxu0
      %v1774 = vadd.f32 %v1666, %v1773
      %v1775 = vand.u32 %v764, 4294901760
      %1776 = vmatmul.f32.gmra.mxu0 %v1775
      %v1777 = vpop.f32.mrf.mxu0
      %v1778 = vadd.f32 %v1674, %v1777
      %v1779 = vand.u32 %v767, 4294901760
      %1780 = vmatmul.f32.gmra.mxu0 %v1779
      %v1781 = vpop.f32.mrf.mxu0
      %v1782 = vadd.f32 %v1682, %v1781
      %v1783 = vand.u32 %v770, 4294901760
      %1784 = vmatmul.f32.gmra.mxu0 %v1783
      %v1785 = vpop.f32.mrf.mxu0
      %v1786 = vadd.f32 %v1690, %v1785
      %v1787 = vand.u32 %v773, 4294901760
      %1788 = vmatmul.f32.gmra.mxu0 %v1787
      %v1789 = vpop.f32.mrf.mxu0
      %v1790 = vadd.f32 %v1698, %v1789
      %v1791 = vand.u32 %v776, 4294901760
      %1792 = vmatmul.f32.gmra.mxu0 %v1791
      %v1793 = vpop.f32.mrf.mxu0
      %v1794 = vadd.f32 %v1706, %v1793
      %v1795 = vand.u32 %v779, 4294901760
      %1796 = vmatmul.f32.gmra.mxu0 %v1795
      %v1797 = vpop.f32.mrf.mxu0
      %v1798 = vadd.f32 %v1714, %v1797
      %1799 = vdwg.mxu0
      %1800 = vmatpush.msra.mxu0 0.0
      %1801 = vmatpush.msra.mxu0 0.0
      %1802 = vmatpush.msra.mxu0 0.0
      %1803 = vmatpush.msra.mxu0 0.0
      %1804 = vmatpush.msra.mxu0 0.0
      %1805 = vmatpush.msra.mxu0 0.0
      %1806 = vmatpush.msra.mxu0 0.0
      %1807 = vmatpush.msra.mxu0 0.0
      %1808 = vmatpush.msra.mxu0 0.0
      %1809 = vmatpush.msra.mxu0 0.0
      %1810 = vmatpush.msra.mxu0 0.0
      %1811 = vmatpush.msra.mxu0 0.0
      %1812 = vmatpush.msra.mxu0 0.0
      %v1813 = vand.u32 %v1590, 4294901760
      %v1814 = vsub.f32 %v1590, %v1813
      %1815 = vmatpush.msra.mxu0 %v1814
      %v1816 = vand.u32 %v1583, 4294901760
      %v1817 = vsub.f32 %v1583, %v1816
      %1818 = vmatpush.msra.mxu0 %v1817
      %v1819 = vand.u32 %v1579, 4294901760
      %v1820 = vsub.f32 %v1579, %v1819
      %1821 = vmatpush.msra.mxu0 %v1820
      %v1822 = vand.u32 %v743, 4294901760
      %v1823 = vsub.f32 %v743, %v1822
      %1824 = vmatmul.f32.gmra.mxu0 %v1823
      %v1825 = vpop.f32.mrf.mxu0
      %v1826 = vadd.f32 %v1750, %v1825
      %v1827 = vand.u32 %v746, 4294901760
      %v1828 = vsub.f32 %v746, %v1827
      %1829 = vmatmul.f32.gmra.mxu0 %v1828
      %v1830 = vpop.f32.mrf.mxu0
      %v1831 = vadd.f32 %v1754, %v1830
      %v1832 = vand.u32 %v749, 4294901760
      %v1833 = vsub.f32 %v749, %v1832
      %1834 = vmatmul.f32.gmra.mxu0 %v1833
      %v1835 = vpop.f32.mrf.mxu0
      %v1836 = vadd.f32 %v1758, %v1835
      %v1837 = vand.u32 %v752, 4294901760
      %v1838 = vsub.f32 %v752, %v1837
      %1839 = vmatmul.f32.gmra.mxu0 %v1838
      %v1840 = vpop.f32.mrf.mxu0
      %v1841 = vadd.f32 %v1762, %v1840
      %v1842 = vand.u32 %v755, 4294901760
      %v1843 = vsub.f32 %v755, %v1842
      %1844 = vmatmul.f32.gmra.mxu0 %v1843
      %v1845 = vpop.f32.mrf.mxu0
      %v1846 = vadd.f32 %v1766, %v1845
      %v1847 = vand.u32 %v758, 4294901760
      %v1848 = vsub.f32 %v758, %v1847
      %1849 = vmatmul.f32.gmra.mxu0 %v1848
      %v1850 = vpop.f32.mrf.mxu0
      %v1851 = vadd.f32 %v1770, %v1850
      %v1852 = vand.u32 %v761, 4294901760
      %v1853 = vsub.f32 %v761, %v1852
      %1854 = vmatmul.f32.gmra.mxu0 %v1853
      %v1855 = vpop.f32.mrf.mxu0
      %v1856 = vadd.f32 %v1774, %v1855
      %v1857 = vand.u32 %v764, 4294901760
      %v1858 = vsub.f32 %v764, %v1857
      %1859 = vmatmul.f32.gmra.mxu0 %v1858
      %v1860 = vpop.f32.mrf.mxu0
      %v1861 = vadd.f32 %v1778, %v1860
      %v1862 = vand.u32 %v767, 4294901760
      %v1863 = vsub.f32 %v767, %v1862
      %1864 = vmatmul.f32.gmra.mxu0 %v1863
      %v1865 = vpop.f32.mrf.mxu0
      %v1866 = vadd.f32 %v1782, %v1865
      %v1867 = vand.u32 %v770, 4294901760
      %v1868 = vsub.f32 %v770, %v1867
      %1869 = vmatmul.f32.gmra.mxu0 %v1868
      %v1870 = vpop.f32.mrf.mxu0
      %v1871 = vadd.f32 %v1786, %v1870
      %v1872 = vand.u32 %v773, 4294901760
      %v1873 = vsub.f32 %v773, %v1872
      %1874 = vmatmul.f32.gmra.mxu0 %v1873
      %v1875 = vpop.f32.mrf.mxu0
      %v1876 = vadd.f32 %v1790, %v1875
      %v1877 = vand.u32 %v776, 4294901760
      %v1878 = vsub.f32 %v776, %v1877
      %1879 = vmatmul.f32.gmra.mxu0 %v1878
      %v1880 = vpop.f32.mrf.mxu0
      %v1881 = vadd.f32 %v1794, %v1880
      %v1882 = vand.u32 %v779, 4294901760
      %v1883 = vsub.f32 %v779, %v1882
      %1884 = vmatmul.f32.gmra.mxu0 %v1883
      %v1885 = vpop.f32.mrf.mxu0
      %v1886 = vadd.f32 %v1798, %v1885
      %1887 = vdwg.mxu0
      %1888 = vmatpush.msra.mxu0 0.0
      %1889 = vmatpush.msra.mxu0 0.0
      %1890 = vmatpush.msra.mxu0 0.0
      %1891 = vmatpush.msra.mxu0 0.0
      %1892 = vmatpush.msra.mxu0 0.0
      %1893 = vmatpush.msra.mxu0 0.0
      %1894 = vmatpush.msra.mxu0 0.0
      %1895 = vmatpush.msra.mxu0 0.0
      %1896 = vmatpush.msra.mxu0 0.0
      %1897 = vmatpush.msra.mxu0 0.0
      %1898 = vmatpush.msra.mxu0 0.0
      %1899 = vmatpush.msra.mxu0 0.0
      %1900 = vmatpush.msra.mxu0 0.0
      %v1901 = vand.u32 %v1590, 4294901760
      %1902 = vmatpush.msra.mxu0 %v1901
      %v1903 = vand.u32 %v1583, 4294901760
      %1904 = vmatpush.msra.mxu0 %v1903
      %v1905 = vand.u32 %v1579, 4294901760
      %1906 = vmatpush.msra.mxu0 %v1905
      %v1907 = vand.u32 %v743, 4294901760
      %v1908 = vsub.f32 %v743, %v1907
      %v1909 = vand.u32 %v1908, 4294901760
      %1910 = vmatmul.f32.gmra.mxu0 %v1909
      %v1911 = vpop.f32.mrf.mxu0
      %v1912 = vadd.f32 %v1826, %v1911
      %v1913 = vand.u32 %v746, 4294901760
      %v1914 = vsub.f32 %v746, %v1913
      %v1915 = vand.u32 %v1914, 4294901760
      %1916 = vmatmul.f32.gmra.mxu0 %v1915
      %v1917 = vpop.f32.mrf.mxu0
      %v1918 = vadd.f32 %v1831, %v1917
      %v1919 = vand.u32 %v749, 4294901760
      %v1920 = vsub.f32 %v749, %v1919
      %v1921 = vand.u32 %v1920, 4294901760
      %1922 = vmatmul.f32.gmra.mxu0 %v1921
      %v1923 = vpop.f32.mrf.mxu0
      %v1924 = vadd.f32 %v1836, %v1923
      %v1925 = vand.u32 %v752, 4294901760
      %v1926 = vsub.f32 %v752, %v1925
      %v1927 = vand.u32 %v1926, 4294901760
      %1928 = vmatmul.f32.gmra.mxu0 %v1927
      %v1929 = vpop.f32.mrf.mxu0
      %v1930 = vadd.f32 %v1841, %v1929
      %v1931 = vand.u32 %v755, 4294901760
      %v1932 = vsub.f32 %v755, %v1931
      %v1933 = vand.u32 %v1932, 4294901760
      %1934 = vmatmul.f32.gmra.mxu0 %v1933
      %v1935 = vpop.f32.mrf.mxu0
      %v1936 = vadd.f32 %v1846, %v1935
      %v1937 = vand.u32 %v758, 4294901760
      %v1938 = vsub.f32 %v758, %v1937
      %v1939 = vand.u32 %v1938, 4294901760
      %1940 = vmatmul.f32.gmra.mxu0 %v1939
      %v1941 = vpop.f32.mrf.mxu0
      %v1942 = vadd.f32 %v1851, %v1941
      %v1943 = vand.u32 %v761, 4294901760
      %v1944 = vsub.f32 %v761, %v1943
      %v1945 = vand.u32 %v1944, 4294901760
      %1946 = vmatmul.f32.gmra.mxu0 %v1945
      %v1947 = vpop.f32.mrf.mxu0
      %v1948 = vadd.f32 %v1856, %v1947
      %v1949 = vand.u32 %v764, 4294901760
      %v1950 = vsub.f32 %v764, %v1949
      %v1951 = vand.u32 %v1950, 4294901760
      %1952 = vmatmul.f32.gmra.mxu0 %v1951
      %v1953 = vpop.f32.mrf.mxu0
      %v1954 = vadd.f32 %v1861, %v1953
      %v1955 = vand.u32 %v767, 4294901760
      %v1956 = vsub.f32 %v767, %v1955
      %v1957 = vand.u32 %v1956, 4294901760
      %1958 = vmatmul.f32.gmra.mxu0 %v1957
      %v1959 = vpop.f32.mrf.mxu0
      %v1960 = vadd.f32 %v1866, %v1959
      %v1961 = vand.u32 %v770, 4294901760
      %v1962 = vsub.f32 %v770, %v1961
      %v1963 = vand.u32 %v1962, 4294901760
      %1964 = vmatmul.f32.gmra.mxu0 %v1963
      %v1965 = vpop.f32.mrf.mxu0
      %v1966 = vadd.f32 %v1871, %v1965
      %v1967 = vand.u32 %v773, 4294901760
      %v1968 = vsub.f32 %v773, %v1967
      %v1969 = vand.u32 %v1968, 4294901760
      %1970 = vmatmul.f32.gmra.mxu0 %v1969
      %v1971 = vpop.f32.mrf.mxu0
      %v1972 = vadd.f32 %v1876, %v1971
      %v1973 = vand.u32 %v776, 4294901760
      %v1974 = vsub.f32 %v776, %v1973
      %v1975 = vand.u32 %v1974, 4294901760
      %1976 = vmatmul.f32.gmra.mxu0 %v1975
      %v1977 = vpop.f32.mrf.mxu0
      %v1978 = vadd.f32 %v1881, %v1977
      %v1979 = vand.u32 %v779, 4294901760
      %v1980 = vsub.f32 %v779, %v1979
      %v1981 = vand.u32 %v1980, 4294901760
      %1982 = vmatmul.f32.gmra.mxu0 %v1981
      %v1983 = vpop.f32.mrf.mxu0
      %v1984 = vadd.f32 %v1886, %v1983
      %1985 = vdwg.mxu0
      %1986 = vmatpush.msra.mxu0 0.0
      %1987 = vmatpush.msra.mxu0 0.0
      %1988 = vmatpush.msra.mxu0 0.0
      %1989 = vmatpush.msra.mxu0 0.0
      %1990 = vmatpush.msra.mxu0 0.0
      %1991 = vmatpush.msra.mxu0 0.0
      %1992 = vmatpush.msra.mxu0 0.0
      %1993 = vmatpush.msra.mxu0 0.0
      %1994 = vmatpush.msra.mxu0 0.0
      %1995 = vmatpush.msra.mxu0 0.0
      %1996 = vmatpush.msra.mxu0 0.0
      %1997 = vmatpush.msra.mxu0 0.0
      %1998 = vmatpush.msra.mxu0 0.0
      %v1999 = vand.u32 %v1590, 4294901760
      %v2000 = vsub.f32 %v1590, %v1999
      %v2001 = vand.u32 %v2000, 4294901760
      %2002 = vmatpush.msra.mxu0 %v2001
      %v2003 = vand.u32 %v1583, 4294901760
      %v2004 = vsub.f32 %v1583, %v2003
      %v2005 = vand.u32 %v2004, 4294901760
      %2006 = vmatpush.msra.mxu0 %v2005
      %v2007 = vand.u32 %v1579, 4294901760
      %v2008 = vsub.f32 %v1579, %v2007
      %v2009 = vand.u32 %v2008, 4294901760
      %2010 = vmatpush.msra.mxu0 %v2009
      %v2011 = vand.u32 %v743, 4294901760
      %2012 = vmatmul.f32.gmra.mxu0 %v2011
      %v2013 = vpop.f32.mrf.mxu0
      %v2014 = vadd.f32 %v1912, %v2013
      %v2015 = vand.u32 %v746, 4294901760
      %2016 = vmatmul.f32.gmra.mxu0 %v2015
      %v2017 = vpop.f32.mrf.mxu0
      %v2018 = vadd.f32 %v1918, %v2017
      %v2019 = vand.u32 %v749, 4294901760
      %2020 = vmatmul.f32.gmra.mxu0 %v2019
      %v2021 = vpop.f32.mrf.mxu0
      %v2022 = vadd.f32 %v1924, %v2021
      %v2023 = vand.u32 %v752, 4294901760
      %2024 = vmatmul.f32.gmra.mxu0 %v2023
      %v2025 = vpop.f32.mrf.mxu0
      %v2026 = vadd.f32 %v1930, %v2025
      %v2027 = vand.u32 %v755, 4294901760
      %2028 = vmatmul.f32.gmra.mxu0 %v2027
      %v2029 = vpop.f32.mrf.mxu0
      %v2030 = vadd.f32 %v1936, %v2029
      %v2031 = vand.u32 %v758, 4294901760
      %2032 = vmatmul.f32.gmra.mxu0 %v2031
      %v2033 = vpop.f32.mrf.mxu0
      %v2034 = vadd.f32 %v1942, %v2033
      %v2035 = vand.u32 %v761, 4294901760
      %2036 = vmatmul.f32.gmra.mxu0 %v2035
      %v2037 = vpop.f32.mrf.mxu0
      %v2038 = vadd.f32 %v1948, %v2037
      %v2039 = vand.u32 %v764, 4294901760
      %2040 = vmatmul.f32.gmra.mxu0 %v2039
      %v2041 = vpop.f32.mrf.mxu0
      %v2042 = vadd.f32 %v1954, %v2041
      %v2043 = vand.u32 %v767, 4294901760
      %2044 = vmatmul.f32.gmra.mxu0 %v2043
      %v2045 = vpop.f32.mrf.mxu0
      %v2046 = vadd.f32 %v1960, %v2045
      %v2047 = vand.u32 %v770, 4294901760
      %2048 = vmatmul.f32.gmra.mxu0 %v2047
      %v2049 = vpop.f32.mrf.mxu0
      %v2050 = vadd.f32 %v1966, %v2049
      %v2051 = vand.u32 %v773, 4294901760
      %2052 = vmatmul.f32.gmra.mxu0 %v2051
      %v2053 = vpop.f32.mrf.mxu0
      %v2054 = vadd.f32 %v1972, %v2053
      %v2055 = vand.u32 %v776, 4294901760
      %2056 = vmatmul.f32.gmra.mxu0 %v2055
      %v2057 = vpop.f32.mrf.mxu0
      %v2058 = vadd.f32 %v1978, %v2057
      %v2059 = vand.u32 %v779, 4294901760
      %2060 = vmatmul.f32.gmra.mxu0 %v2059
      %v2061 = vpop.f32.mrf.mxu0
      %v2062 = vadd.f32 %v1984, %v2061
      %2063 = vdwg.mxu0
      %2064 = vmatpush.msra.mxu0 0.0
      %2065 = vmatpush.msra.mxu0 0.0
      %2066 = vmatpush.msra.mxu0 0.0
      %2067 = vmatpush.msra.mxu0 0.0
      %2068 = vmatpush.msra.mxu0 0.0
      %2069 = vmatpush.msra.mxu0 0.0
      %2070 = vmatpush.msra.mxu0 0.0
      %2071 = vmatpush.msra.mxu0 0.0
      %2072 = vmatpush.msra.mxu0 0.0
      %2073 = vmatpush.msra.mxu0 0.0
      %2074 = vmatpush.msra.mxu0 0.0
      %2075 = vmatpush.msra.mxu0 0.0
      %2076 = vmatpush.msra.mxu0 0.0
      %v2077 = vand.u32 %v1590, 4294901760
      %2078 = vmatpush.msra.mxu0 %v2077
      %v2079 = vand.u32 %v1583, 4294901760
      %2080 = vmatpush.msra.mxu0 %v2079
      %v2081 = vand.u32 %v1579, 4294901760
      %2082 = vmatpush.msra.mxu0 %v2081
      %v2083 = vand.u32 %v743, 4294901760
      %2084 = vmatmul.f32.gmra.mxu0 %v2083
      %v2085 = vpop.f32.mrf.mxu0
      %v2086 = vadd.f32 %v2014, %v2085
      %v2087 = vand.u32 %v746, 4294901760
      %2088 = vmatmul.f32.gmra.mxu0 %v2087
      %v2089 = vpop.f32.mrf.mxu0
      %v2090 = vadd.f32 %v2018, %v2089
      %v2091 = vand.u32 %v749, 4294901760
      %2092 = vmatmul.f32.gmra.mxu0 %v2091
      %v2093 = vpop.f32.mrf.mxu0
      %v2094 = vadd.f32 %v2022, %v2093
      %v2095 = vand.u32 %v752, 4294901760
      %2096 = vmatmul.f32.gmra.mxu0 %v2095
      %v2097 = vpop.f32.mrf.mxu0
      %v2098 = vadd.f32 %v2026, %v2097
      %v2099 = vand.u32 %v755, 4294901760
      %2100 = vmatmul.f32.gmra.mxu0 %v2099
      %v2101 = vpop.f32.mrf.mxu0
      %v2102 = vadd.f32 %v2030, %v2101
      %v2103 = vand.u32 %v758, 4294901760
      %2104 = vmatmul.f32.gmra.mxu0 %v2103
      %v2105 = vpop.f32.mrf.mxu0
      %v2106 = vadd.f32 %v2034, %v2105
      %v2107 = vand.u32 %v761, 4294901760
      %2108 = vmatmul.f32.gmra.mxu0 %v2107
      %v2109 = vpop.f32.mrf.mxu0
      %v2110 = vadd.f32 %v2038, %v2109
      %v2111 = vand.u32 %v764, 4294901760
      %2112 = vmatmul.f32.gmra.mxu0 %v2111
      %v2113 = vpop.f32.mrf.mxu0
      %v2114 = vadd.f32 %v2042, %v2113
      %v2115 = vand.u32 %v767, 4294901760
      %2116 = vmatmul.f32.gmra.mxu0 %v2115
      %v2117 = vpop.f32.mrf.mxu0
      %v2118 = vadd.f32 %v2046, %v2117
      %v2119 = vand.u32 %v770, 4294901760
      %2120 = vmatmul.f32.gmra.mxu0 %v2119
      %v2121 = vpop.f32.mrf.mxu0
      %v2122 = vadd.f32 %v2050, %v2121
      %v2123 = vand.u32 %v773, 4294901760
      %2124 = vmatmul.f32.gmra.mxu0 %v2123
      %v2125 = vpop.f32.mrf.mxu0
      %v2126 = vadd.f32 %v2054, %v2125
      %v2127 = vand.u32 %v776, 4294901760
      %2128 = vmatmul.f32.gmra.mxu0 %v2127
      %v2129 = vpop.f32.mrf.mxu0
      %v2130 = vadd.f32 %v2058, %v2129
      %v2131 = vand.u32 %v779, 4294901760
      %2132 = vmatmul.f32.gmra.mxu0 %v2131
      %v2133 = vpop.f32.mrf.mxu0
      %v2134 = vadd.f32 %v2062, %v2133
      %2135 = vdwg.mxu0
      %s2136 = scalar_lea.vmem %s227, 936
      %2137 = vst.msk [vmem:[%s2136] sm:$0xff] %vm307, %v2086
      %2138 = vst.msk [vmem:[%s2136 + $0x8] sm:$0xff] %vm307, %v2090
      %2139 = vst.msk [vmem:[%s2136 + $0x10] sm:$0xff] %vm307, %v2094
      %2140 = vst.msk [vmem:[%s2136 + $0x18] sm:$0xff] %vm307, %v2098
      %2141 = vst.msk [vmem:[%s2136 + $0x20] sm:$0xff] %vm307, %v2102
      %2142 = vst.msk [vmem:[%s2136 + $0x28] sm:$0xff] %vm307, %v2106
      %2143 = vst.msk [vmem:[%s2136 + $0x30] sm:$0xff] %vm307, %v2110
      %2144 = vst.msk [vmem:[%s2136 + $0x38] sm:$0xff] %vm307, %v2114
      %2145 = vst.msk [vmem:[%s2136 + $0x40] sm:$0xff] %vm307, %v2118
      %2146 = vst.msk [vmem:[%s2136 + $0x48] sm:$0xff] %vm307, %v2122
      %2147 = vst.msk [vmem:[%s2136 + $0x50] sm:$0xff] %vm307, %v2126
      %2148 = vst.msk [vmem:[%s2136 + $0x58] sm:$0xff] %vm307, %v2130
      %2149 = vst.msk [vmem:[%s2136 + $0x60] sm:$0xf] %vm320, %v2134
      %v2150 = vld [vmem:[%s220] sm:$0xff]
      %v2151 = vld [vmem:[%s220 + $0x8] sm:$0xff]
      %v2152 = vld [vmem:[%s220 + $0x10] sm:$0xff]
      %v2153 = vld [vmem:[%s220 + $0x18] sm:$0xff]
      %v2154 = vld [vmem:[%s220 + $0x20] sm:$0xff]
      %v2156 = vsel %vm494, %v2150, 0
      %v2159 = vsel %vm494, %v2151, 0
      %v2162 = vsel %vm494, %v2152, 0
      %v2165 = vsel %vm494, %v2153, 0
      %v2168 = vsel %vm494, %v2154, 0
      %2170 = vmatpush.msra.mxu0 0.0
      %2171 = vmatpush.msra.mxu0 0.0
      %2172 = vmatpush.msra.mxu0 0.0
      %2173 = vmatpush.msra.mxu0 0.0
      %2174 = vmatpush.msra.mxu0 0.0
      %2175 = vmatpush.msra.mxu0 0.0
      %2176 = vmatpush.msra.mxu0 0.0
      %2177 = vmatpush.msra.mxu0 0.0
      %2178 = vmatpush.msra.mxu0 0.0
      %2179 = vmatpush.msra.mxu0 0.0
      %2180 = vmatpush.msra.mxu0 0.0
      %2181 = vmatpush.msra.mxu0 0.0
      %2182 = vmatpush.msra.mxu0 0.0
      %v2183 = vand.u32 %v506, 4294901760
      %2184 = vmatpush.msra.mxu0 %v2183
      %v2185 = vand.u32 %v412, 4294901760
      %2186 = vmatpush.msra.mxu0 %v2185
      %v2187 = vand.u32 %v411, 4294901760
      %2188 = vmatpush.msra.mxu0 %v2187
      %v2189 = vand.u32 %v2156, 4294901760
      %v2190 = vsub.f32 %v2156, %v2189
      %v2191 = vand.u32 %v2190, 4294901760
      %v2192 = vsub.f32 %v2190, %v2191
      %v2193 = vand.u32 %v2192, 4294901760
      %2194 = vmatmul.f32.gmra.mxu0 %v2193
      %v2195 = vpop.f32.mrf.mxu0
      %v2196 = vadd.f32 0.0, %v2195
      %v2197 = vand.u32 %v2159, 4294901760
      %v2198 = vsub.f32 %v2159, %v2197
      %v2199 = vand.u32 %v2198, 4294901760
      %v2200 = vsub.f32 %v2198, %v2199
      %v2201 = vand.u32 %v2200, 4294901760
      %2202 = vmatmul.f32.gmra.mxu0 %v2201
      %v2203 = vpop.f32.mrf.mxu0
      %v2204 = vadd.f32 0.0, %v2203
      %v2205 = vand.u32 %v2162, 4294901760
      %v2206 = vsub.f32 %v2162, %v2205
      %v2207 = vand.u32 %v2206, 4294901760
      %v2208 = vsub.f32 %v2206, %v2207
      %v2209 = vand.u32 %v2208, 4294901760
      %2210 = vmatmul.f32.gmra.mxu0 %v2209
      %v2211 = vpop.f32.mrf.mxu0
      %v2212 = vadd.f32 0.0, %v2211
      %v2213 = vand.u32 %v2165, 4294901760
      %v2214 = vsub.f32 %v2165, %v2213
      %v2215 = vand.u32 %v2214, 4294901760
      %v2216 = vsub.f32 %v2214, %v2215
      %v2217 = vand.u32 %v2216, 4294901760
      %2218 = vmatmul.f32.gmra.mxu0 %v2217
      %v2219 = vpop.f32.mrf.mxu0
      %v2220 = vadd.f32 0.0, %v2219
      %v2221 = vand.u32 %v2168, 4294901760
      %v2222 = vsub.f32 %v2168, %v2221
      %v2223 = vand.u32 %v2222, 4294901760
      %v2224 = vsub.f32 %v2222, %v2223
      %v2225 = vand.u32 %v2224, 4294901760
      %2226 = vmatmul.f32.gmra.mxu0 %v2225
      %v2227 = vpop.f32.mrf.mxu0
      %v2228 = vadd.f32 0.0, %v2227
      %2229 = vdwg.mxu0
      %2230 = vmatpush.msra.mxu0 0.0
      %2231 = vmatpush.msra.mxu0 0.0
      %2232 = vmatpush.msra.mxu0 0.0
      %2233 = vmatpush.msra.mxu0 0.0
      %2234 = vmatpush.msra.mxu0 0.0
      %2235 = vmatpush.msra.mxu0 0.0
      %2236 = vmatpush.msra.mxu0 0.0
      %2237 = vmatpush.msra.mxu0 0.0
      %2238 = vmatpush.msra.mxu0 0.0
      %2239 = vmatpush.msra.mxu0 0.0
      %2240 = vmatpush.msra.mxu0 0.0
      %2241 = vmatpush.msra.mxu0 0.0
      %2242 = vmatpush.msra.mxu0 0.0
      %v2243 = vand.u32 %v506, 4294901760
      %v2244 = vsub.f32 %v506, %v2243
      %v2245 = vand.u32 %v2244, 4294901760
      %v2246 = vsub.f32 %v2244, %v2245
      %v2247 = vand.u32 %v2246, 4294901760
      %2248 = vmatpush.msra.mxu0 %v2247
      %v2249 = vand.u32 %v412, 4294901760
      %v2250 = vsub.f32 %v412, %v2249
      %v2251 = vand.u32 %v2250, 4294901760
      %v2252 = vsub.f32 %v2250, %v2251
      %v2253 = vand.u32 %v2252, 4294901760
      %2254 = vmatpush.msra.mxu0 %v2253
      %v2255 = vand.u32 %v411, 4294901760
      %v2256 = vsub.f32 %v411, %v2255
      %v2257 = vand.u32 %v2256, 4294901760
      %v2258 = vsub.f32 %v2256, %v2257
      %v2259 = vand.u32 %v2258, 4294901760
      %2260 = vmatpush.msra.mxu0 %v2259
      %v2261 = vand.u32 %v2156, 4294901760
      %2262 = vmatmul.f32.gmra.mxu0 %v2261
      %v2263 = vpop.f32.mrf.mxu0
      %v2264 = vadd.f32 %v2196, %v2263
      %v2265 = vand.u32 %v2159, 4294901760
      %2266 = vmatmul.f32.gmra.mxu0 %v2265
      %v2267 = vpop.f32.mrf.mxu0
      %v2268 = vadd.f32 %v2204, %v2267
      %v2269 = vand.u32 %v2162, 4294901760
      %2270 = vmatmul.f32.gmra.mxu0 %v2269
      %v2271 = vpop.f32.mrf.mxu0
      %v2272 = vadd.f32 %v2212, %v2271
      %v2273 = vand.u32 %v2165, 4294901760
      %2274 = vmatmul.f32.gmra.mxu0 %v2273
      %v2275 = vpop.f32.mrf.mxu0
      %v2276 = vadd.f32 %v2220, %v2275
      %v2277 = vand.u32 %v2168, 4294901760
      %2278 = vmatmul.f32.gmra.mxu0 %v2277
      %v2279 = vpop.f32.mrf.mxu0
      %v2280 = vadd.f32 %v2228, %v2279
      %2281 = vdwg.mxu0
      %2282 = vmatpush.msra.mxu0 0.0
      %2283 = vmatpush.msra.mxu0 0.0
      %2284 = vmatpush.msra.mxu0 0.0
      %2285 = vmatpush.msra.mxu0 0.0
      %2286 = vmatpush.msra.mxu0 0.0
      %2287 = vmatpush.msra.mxu0 0.0
      %2288 = vmatpush.msra.mxu0 0.0
      %2289 = vmatpush.msra.mxu0 0.0
      %2290 = vmatpush.msra.mxu0 0.0
      %2291 = vmatpush.msra.mxu0 0.0
      %2292 = vmatpush.msra.mxu0 0.0
      %2293 = vmatpush.msra.mxu0 0.0
      %2294 = vmatpush.msra.mxu0 0.0
      %v2295 = vand.u32 %v506, 4294901760
      %v2296 = vsub.f32 %v506, %v2295
      %2297 = vmatpush.msra.mxu0 %v2296
      %v2298 = vand.u32 %v412, 4294901760
      %v2299 = vsub.f32 %v412, %v2298
      %2300 = vmatpush.msra.mxu0 %v2299
      %v2301 = vand.u32 %v411, 4294901760
      %v2302 = vsub.f32 %v411, %v2301
      %2303 = vmatpush.msra.mxu0 %v2302
      %v2304 = vand.u32 %v2156, 4294901760
      %v2305 = vsub.f32 %v2156, %v2304
      %2306 = vmatmul.f32.gmra.mxu0 %v2305
      %v2307 = vpop.f32.mrf.mxu0
      %v2308 = vadd.f32 %v2264, %v2307
      %v2309 = vand.u32 %v2159, 4294901760
      %v2310 = vsub.f32 %v2159, %v2309
      %2311 = vmatmul.f32.gmra.mxu0 %v2310
      %v2312 = vpop.f32.mrf.mxu0
      %v2313 = vadd.f32 %v2268, %v2312
      %v2314 = vand.u32 %v2162, 4294901760
      %v2315 = vsub.f32 %v2162, %v2314
      %2316 = vmatmul.f32.gmra.mxu0 %v2315
      %v2317 = vpop.f32.mrf.mxu0
      %v2318 = vadd.f32 %v2272, %v2317
      %v2319 = vand.u32 %v2165, 4294901760
      %v2320 = vsub.f32 %v2165, %v2319
      %2321 = vmatmul.f32.gmra.mxu0 %v2320
      %v2322 = vpop.f32.mrf.mxu0
      %v2323 = vadd.f32 %v2276, %v2322
      %v2324 = vand.u32 %v2168, 4294901760
      %v2325 = vsub.f32 %v2168, %v2324
      %2326 = vmatmul.f32.gmra.mxu0 %v2325
      %v2327 = vpop.f32.mrf.mxu0
      %v2328 = vadd.f32 %v2280, %v2327
      %2329 = vdwg.mxu0
      %2330 = vmatpush.msra.mxu0 0.0
      %2331 = vmatpush.msra.mxu0 0.0
      %2332 = vmatpush.msra.mxu0 0.0
      %2333 = vmatpush.msra.mxu0 0.0
      %2334 = vmatpush.msra.mxu0 0.0
      %2335 = vmatpush.msra.mxu0 0.0
      %2336 = vmatpush.msra.mxu0 0.0
      %2337 = vmatpush.msra.mxu0 0.0
      %2338 = vmatpush.msra.mxu0 0.0
      %2339 = vmatpush.msra.mxu0 0.0
      %2340 = vmatpush.msra.mxu0 0.0
      %2341 = vmatpush.msra.mxu0 0.0
      %2342 = vmatpush.msra.mxu0 0.0
      %v2343 = vand.u32 %v506, 4294901760
      %2344 = vmatpush.msra.mxu0 %v2343
      %v2345 = vand.u32 %v412, 4294901760
      %2346 = vmatpush.msra.mxu0 %v2345
      %v2347 = vand.u32 %v411, 4294901760
      %2348 = vmatpush.msra.mxu0 %v2347
      %v2349 = vand.u32 %v2156, 4294901760
      %v2350 = vsub.f32 %v2156, %v2349
      %v2351 = vand.u32 %v2350, 4294901760
      %2352 = vmatmul.f32.gmra.mxu0 %v2351
      %v2353 = vpop.f32.mrf.mxu0
      %v2354 = vadd.f32 %v2308, %v2353
      %v2355 = vand.u32 %v2159, 4294901760
      %v2356 = vsub.f32 %v2159, %v2355
      %v2357 = vand.u32 %v2356, 4294901760
      %2358 = vmatmul.f32.gmra.mxu0 %v2357
      %v2359 = vpop.f32.mrf.mxu0
      %v2360 = vadd.f32 %v2313, %v2359
      %v2361 = vand.u32 %v2162, 4294901760
      %v2362 = vsub.f32 %v2162, %v2361
      %v2363 = vand.u32 %v2362, 4294901760
      %2364 = vmatmul.f32.gmra.mxu0 %v2363
      %v2365 = vpop.f32.mrf.mxu0
      %v2366 = vadd.f32 %v2318, %v2365
      %v2367 = vand.u32 %v2165, 4294901760
      %v2368 = vsub.f32 %v2165, %v2367
      %v2369 = vand.u32 %v2368, 4294901760
      %2370 = vmatmul.f32.gmra.mxu0 %v2369
      %v2371 = vpop.f32.mrf.mxu0
      %v2372 = vadd.f32 %v2323, %v2371
      %v2373 = vand.u32 %v2168, 4294901760
      %v2374 = vsub.f32 %v2168, %v2373
      %v2375 = vand.u32 %v2374, 4294901760
      %2376 = vmatmul.f32.gmra.mxu0 %v2375
      %v2377 = vpop.f32.mrf.mxu0
      %v2378 = vadd.f32 %v2328, %v2377
      %2379 = vdwg.mxu0
      %2380 = vmatpush.msra.mxu0 0.0
      %2381 = vmatpush.msra.mxu0 0.0
      %2382 = vmatpush.msra.mxu0 0.0
      %2383 = vmatpush.msra.mxu0 0.0
      %2384 = vmatpush.msra.mxu0 0.0
      %2385 = vmatpush.msra.mxu0 0.0
      %2386 = vmatpush.msra.mxu0 0.0
      %2387 = vmatpush.msra.mxu0 0.0
      %2388 = vmatpush.msra.mxu0 0.0
      %2389 = vmatpush.msra.mxu0 0.0
      %2390 = vmatpush.msra.mxu0 0.0
      %2391 = vmatpush.msra.mxu0 0.0
      %2392 = vmatpush.msra.mxu0 0.0
      %v2393 = vand.u32 %v506, 4294901760
      %v2394 = vsub.f32 %v506, %v2393
      %v2395 = vand.u32 %v2394, 4294901760
      %2396 = vmatpush.msra.mxu0 %v2395
      %v2397 = vand.u32 %v412, 4294901760
      %v2398 = vsub.f32 %v412, %v2397
      %v2399 = vand.u32 %v2398, 4294901760
      %2400 = vmatpush.msra.mxu0 %v2399
      %v2401 = vand.u32 %v411, 4294901760
      %v2402 = vsub.f32 %v411, %v2401
      %v2403 = vand.u32 %v2402, 4294901760
      %2404 = vmatpush.msra.mxu0 %v2403
      %v2405 = vand.u32 %v2156, 4294901760
      %2406 = vmatmul.f32.gmra.mxu0 %v2405
      %v2407 = vpop.f32.mrf.mxu0
      %v2408 = vadd.f32 %v2354, %v2407
      %v2409 = vand.u32 %v2159, 4294901760
      %2410 = vmatmul.f32.gmra.mxu0 %v2409
      %v2411 = vpop.f32.mrf.mxu0
      %v2412 = vadd.f32 %v2360, %v2411
      %v2413 = vand.u32 %v2162, 4294901760
      %2414 = vmatmul.f32.gmra.mxu0 %v2413
      %v2415 = vpop.f32.mrf.mxu0
      %v2416 = vadd.f32 %v2366, %v2415
      %v2417 = vand.u32 %v2165, 4294901760
      %2418 = vmatmul.f32.gmra.mxu0 %v2417
      %v2419 = vpop.f32.mrf.mxu0
      %v2420 = vadd.f32 %v2372, %v2419
      %v2421 = vand.u32 %v2168, 4294901760
      %2422 = vmatmul.f32.gmra.mxu0 %v2421
      %v2423 = vpop.f32.mrf.mxu0
      %v2424 = vadd.f32 %v2378, %v2423
      %2425 = vdwg.mxu0
      %2426 = vmatpush.msra.mxu0 0.0
      %2427 = vmatpush.msra.mxu0 0.0
      %2428 = vmatpush.msra.mxu0 0.0
      %2429 = vmatpush.msra.mxu0 0.0
      %2430 = vmatpush.msra.mxu0 0.0
      %2431 = vmatpush.msra.mxu0 0.0
      %2432 = vmatpush.msra.mxu0 0.0
      %2433 = vmatpush.msra.mxu0 0.0
      %2434 = vmatpush.msra.mxu0 0.0
      %2435 = vmatpush.msra.mxu0 0.0
      %2436 = vmatpush.msra.mxu0 0.0
      %2437 = vmatpush.msra.mxu0 0.0
      %2438 = vmatpush.msra.mxu0 0.0
      %v2439 = vand.u32 %v506, 4294901760
      %2440 = vmatpush.msra.mxu0 %v2439
      %v2441 = vand.u32 %v412, 4294901760
      %2442 = vmatpush.msra.mxu0 %v2441
      %v2443 = vand.u32 %v411, 4294901760
      %2444 = vmatpush.msra.mxu0 %v2443
      %v2445 = vand.u32 %v2156, 4294901760
      %2446 = vmatmul.f32.gmra.mxu0 %v2445
      %v2447 = vpop.f32.mrf.mxu0
      %v2448 = vadd.f32 %v2408, %v2447
      %v2449 = vand.u32 %v2159, 4294901760
      %2450 = vmatmul.f32.gmra.mxu0 %v2449
      %v2451 = vpop.f32.mrf.mxu0
      %v2452 = vadd.f32 %v2412, %v2451
      %v2453 = vand.u32 %v2162, 4294901760
      %2454 = vmatmul.f32.gmra.mxu0 %v2453
      %v2455 = vpop.f32.mrf.mxu0
      %v2456 = vadd.f32 %v2416, %v2455
      %v2457 = vand.u32 %v2165, 4294901760
      %2458 = vmatmul.f32.gmra.mxu0 %v2457
      %v2459 = vpop.f32.mrf.mxu0
      %v2460 = vadd.f32 %v2420, %v2459
      %v2461 = vand.u32 %v2168, 4294901760
      %2462 = vmatmul.f32.gmra.mxu0 %v2461
      %v2463 = vpop.f32.mrf.mxu0
      %v2464 = vadd.f32 %v2424, %v2463
      %2465 = vdwg.mxu0
      %v2467 = vsel %vm504, %v2456, 0
      %2469 = vmatpush.msra.mxu0 0.0
      %2470 = vmatpush.msra.mxu0 0.0
      %2471 = vmatpush.msra.mxu0 0.0
      %2472 = vmatpush.msra.mxu0 0.0
      %2473 = vmatpush.msra.mxu0 0.0
      %2474 = vmatpush.msra.mxu0 0.0
      %2475 = vmatpush.msra.mxu0 0.0
      %2476 = vmatpush.msra.mxu0 0.0
      %2477 = vmatpush.msra.mxu0 0.0
      %2478 = vmatpush.msra.mxu0 0.0
      %2479 = vmatpush.msra.mxu0 0.0
      %2480 = vmatpush.msra.mxu0 0.0
      %2481 = vmatpush.msra.mxu0 0.0
      %v2482 = vand.u32 %v2467, 4294901760
      %2483 = vmatpush.msra.mxu0 %v2482
      %v2484 = vand.u32 %v2452, 4294901760
      %2485 = vmatpush.msra.mxu0 %v2484
      %v2486 = vand.u32 %v2448, 4294901760
      %2487 = vmatpush.msra.mxu0 %v2486
      %v2488 = vand.u32 %v743, 4294901760
      %v2489 = vsub.f32 %v743, %v2488
      %v2490 = vand.u32 %v2489, 4294901760
      %v2491 = vsub.f32 %v2489, %v2490
      %v2492 = vand.u32 %v2491, 4294901760
      %2493 = vmatmul.f32.gmra.mxu0 %v2492
      %v2494 = vpop.f32.mrf.mxu0
      %v2495 = vadd.f32 0.0, %v2494
      %v2496 = vand.u32 %v746, 4294901760
      %v2497 = vsub.f32 %v746, %v2496
      %v2498 = vand.u32 %v2497, 4294901760
      %v2499 = vsub.f32 %v2497, %v2498
      %v2500 = vand.u32 %v2499, 4294901760
      %2501 = vmatmul.f32.gmra.mxu0 %v2500
      %v2502 = vpop.f32.mrf.mxu0
      %v2503 = vadd.f32 0.0, %v2502
      %v2504 = vand.u32 %v749, 4294901760
      %v2505 = vsub.f32 %v749, %v2504
      %v2506 = vand.u32 %v2505, 4294901760
      %v2507 = vsub.f32 %v2505, %v2506
      %v2508 = vand.u32 %v2507, 4294901760
      %2509 = vmatmul.f32.gmra.mxu0 %v2508
      %v2510 = vpop.f32.mrf.mxu0
      %v2511 = vadd.f32 0.0, %v2510
      %v2512 = vand.u32 %v752, 4294901760
      %v2513 = vsub.f32 %v752, %v2512
      %v2514 = vand.u32 %v2513, 4294901760
      %v2515 = vsub.f32 %v2513, %v2514
      %v2516 = vand.u32 %v2515, 4294901760
      %2517 = vmatmul.f32.gmra.mxu0 %v2516
      %v2518 = vpop.f32.mrf.mxu0
      %v2519 = vadd.f32 0.0, %v2518
      %v2520 = vand.u32 %v755, 4294901760
      %v2521 = vsub.f32 %v755, %v2520
      %v2522 = vand.u32 %v2521, 4294901760
      %v2523 = vsub.f32 %v2521, %v2522
      %v2524 = vand.u32 %v2523, 4294901760
      %2525 = vmatmul.f32.gmra.mxu0 %v2524
      %v2526 = vpop.f32.mrf.mxu0
      %v2527 = vadd.f32 0.0, %v2526
      %v2528 = vand.u32 %v758, 4294901760
      %v2529 = vsub.f32 %v758, %v2528
      %v2530 = vand.u32 %v2529, 4294901760
      %v2531 = vsub.f32 %v2529, %v2530
      %v2532 = vand.u32 %v2531, 4294901760
      %2533 = vmatmul.f32.gmra.mxu0 %v2532
      %v2534 = vpop.f32.mrf.mxu0
      %v2535 = vadd.f32 0.0, %v2534
      %v2536 = vand.u32 %v761, 4294901760
      %v2537 = vsub.f32 %v761, %v2536
      %v2538 = vand.u32 %v2537, 4294901760
      %v2539 = vsub.f32 %v2537, %v2538
      %v2540 = vand.u32 %v2539, 4294901760
      %2541 = vmatmul.f32.gmra.mxu0 %v2540
      %v2542 = vpop.f32.mrf.mxu0
      %v2543 = vadd.f32 0.0, %v2542
      %v2544 = vand.u32 %v764, 4294901760
      %v2545 = vsub.f32 %v764, %v2544
      %v2546 = vand.u32 %v2545, 4294901760
      %v2547 = vsub.f32 %v2545, %v2546
      %v2548 = vand.u32 %v2547, 4294901760
      %2549 = vmatmul.f32.gmra.mxu0 %v2548
      %v2550 = vpop.f32.mrf.mxu0
      %v2551 = vadd.f32 0.0, %v2550
      %v2552 = vand.u32 %v767, 4294901760
      %v2553 = vsub.f32 %v767, %v2552
      %v2554 = vand.u32 %v2553, 4294901760
      %v2555 = vsub.f32 %v2553, %v2554
      %v2556 = vand.u32 %v2555, 4294901760
      %2557 = vmatmul.f32.gmra.mxu0 %v2556
      %v2558 = vpop.f32.mrf.mxu0
      %v2559 = vadd.f32 0.0, %v2558
      %v2560 = vand.u32 %v770, 4294901760
      %v2561 = vsub.f32 %v770, %v2560
      %v2562 = vand.u32 %v2561, 4294901760
      %v2563 = vsub.f32 %v2561, %v2562
      %v2564 = vand.u32 %v2563, 4294901760
      %2565 = vmatmul.f32.gmra.mxu0 %v2564
      %v2566 = vpop.f32.mrf.mxu0
      %v2567 = vadd.f32 0.0, %v2566
      %v2568 = vand.u32 %v773, 4294901760
      %v2569 = vsub.f32 %v773, %v2568
      %v2570 = vand.u32 %v2569, 4294901760
      %v2571 = vsub.f32 %v2569, %v2570
      %v2572 = vand.u32 %v2571, 4294901760
      %2573 = vmatmul.f32.gmra.mxu0 %v2572
      %v2574 = vpop.f32.mrf.mxu0
      %v2575 = vadd.f32 0.0, %v2574
      %v2576 = vand.u32 %v776, 4294901760
      %v2577 = vsub.f32 %v776, %v2576
      %v2578 = vand.u32 %v2577, 4294901760
      %v2579 = vsub.f32 %v2577, %v2578
      %v2580 = vand.u32 %v2579, 4294901760
      %2581 = vmatmul.f32.gmra.mxu0 %v2580
      %v2582 = vpop.f32.mrf.mxu0
      %v2583 = vadd.f32 0.0, %v2582
      %v2584 = vand.u32 %v779, 4294901760
      %v2585 = vsub.f32 %v779, %v2584
      %v2586 = vand.u32 %v2585, 4294901760
      %v2587 = vsub.f32 %v2585, %v2586
      %v2588 = vand.u32 %v2587, 4294901760
      %2589 = vmatmul.f32.gmra.mxu0 %v2588
      %v2590 = vpop.f32.mrf.mxu0
      %v2591 = vadd.f32 0.0, %v2590
      %2592 = vdwg.mxu0
      %2593 = vmatpush.msra.mxu0 0.0
      %2594 = vmatpush.msra.mxu0 0.0
      %2595 = vmatpush.msra.mxu0 0.0
      %2596 = vmatpush.msra.mxu0 0.0
      %2597 = vmatpush.msra.mxu0 0.0
      %2598 = vmatpush.msra.mxu0 0.0
      %2599 = vmatpush.msra.mxu0 0.0
      %2600 = vmatpush.msra.mxu0 0.0
      %2601 = vmatpush.msra.mxu0 0.0
      %2602 = vmatpush.msra.mxu0 0.0
      %2603 = vmatpush.msra.mxu0 0.0
      %2604 = vmatpush.msra.mxu0 0.0
      %2605 = vmatpush.msra.mxu0 0.0
      %v2606 = vand.u32 %v2467, 4294901760
      %v2607 = vsub.f32 %v2467, %v2606
      %v2608 = vand.u32 %v2607, 4294901760
      %v2609 = vsub.f32 %v2607, %v2608
      %v2610 = vand.u32 %v2609, 4294901760
      %2611 = vmatpush.msra.mxu0 %v2610
      %v2612 = vand.u32 %v2452, 4294901760
      %v2613 = vsub.f32 %v2452, %v2612
      %v2614 = vand.u32 %v2613, 4294901760
      %v2615 = vsub.f32 %v2613, %v2614
      %v2616 = vand.u32 %v2615, 4294901760
      %2617 = vmatpush.msra.mxu0 %v2616
      %v2618 = vand.u32 %v2448, 4294901760
      %v2619 = vsub.f32 %v2448, %v2618
      %v2620 = vand.u32 %v2619, 4294901760
      %v2621 = vsub.f32 %v2619, %v2620
      %v2622 = vand.u32 %v2621, 4294901760
      %2623 = vmatpush.msra.mxu0 %v2622
      %v2624 = vand.u32 %v743, 4294901760
      %2625 = vmatmul.f32.gmra.mxu0 %v2624
      %v2626 = vpop.f32.mrf.mxu0
      %v2627 = vadd.f32 %v2495, %v2626
      %v2628 = vand.u32 %v746, 4294901760
      %2629 = vmatmul.f32.gmra.mxu0 %v2628
      %v2630 = vpop.f32.mrf.mxu0
      %v2631 = vadd.f32 %v2503, %v2630
      %v2632 = vand.u32 %v749, 4294901760
      %2633 = vmatmul.f32.gmra.mxu0 %v2632
      %v2634 = vpop.f32.mrf.mxu0
      %v2635 = vadd.f32 %v2511, %v2634
      %v2636 = vand.u32 %v752, 4294901760
      %2637 = vmatmul.f32.gmra.mxu0 %v2636
      %v2638 = vpop.f32.mrf.mxu0
      %v2639 = vadd.f32 %v2519, %v2638
      %v2640 = vand.u32 %v755, 4294901760
      %2641 = vmatmul.f32.gmra.mxu0 %v2640
      %v2642 = vpop.f32.mrf.mxu0
      %v2643 = vadd.f32 %v2527, %v2642
      %v2644 = vand.u32 %v758, 4294901760
      %2645 = vmatmul.f32.gmra.mxu0 %v2644
      %v2646 = vpop.f32.mrf.mxu0
      %v2647 = vadd.f32 %v2535, %v2646
      %v2648 = vand.u32 %v761, 4294901760
      %2649 = vmatmul.f32.gmra.mxu0 %v2648
      %v2650 = vpop.f32.mrf.mxu0
      %v2651 = vadd.f32 %v2543, %v2650
      %v2652 = vand.u32 %v764, 4294901760
      %2653 = vmatmul.f32.gmra.mxu0 %v2652
      %v2654 = vpop.f32.mrf.mxu0
      %v2655 = vadd.f32 %v2551, %v2654
      %v2656 = vand.u32 %v767, 4294901760
      %2657 = vmatmul.f32.gmra.mxu0 %v2656
      %v2658 = vpop.f32.mrf.mxu0
      %v2659 = vadd.f32 %v2559, %v2658
      %v2660 = vand.u32 %v770, 4294901760
      %2661 = vmatmul.f32.gmra.mxu0 %v2660
      %v2662 = vpop.f32.mrf.mxu0
      %v2663 = vadd.f32 %v2567, %v2662
      %v2664 = vand.u32 %v773, 4294901760
      %2665 = vmatmul.f32.gmra.mxu0 %v2664
      %v2666 = vpop.f32.mrf.mxu0
      %v2667 = vadd.f32 %v2575, %v2666
      %v2668 = vand.u32 %v776, 4294901760
      %2669 = vmatmul.f32.gmra.mxu0 %v2668
      %v2670 = vpop.f32.mrf.mxu0
      %v2671 = vadd.f32 %v2583, %v2670
      %v2672 = vand.u32 %v779, 4294901760
      %2673 = vmatmul.f32.gmra.mxu0 %v2672
      %v2674 = vpop.f32.mrf.mxu0
      %v2675 = vadd.f32 %v2591, %v2674
      %2676 = vdwg.mxu0
      %2677 = vmatpush.msra.mxu0 0.0
      %2678 = vmatpush.msra.mxu0 0.0
      %2679 = vmatpush.msra.mxu0 0.0
      %2680 = vmatpush.msra.mxu0 0.0
      %2681 = vmatpush.msra.mxu0 0.0
      %2682 = vmatpush.msra.mxu0 0.0
      %2683 = vmatpush.msra.mxu0 0.0
      %2684 = vmatpush.msra.mxu0 0.0
      %2685 = vmatpush.msra.mxu0 0.0
      %2686 = vmatpush.msra.mxu0 0.0
      %2687 = vmatpush.msra.mxu0 0.0
      %2688 = vmatpush.msra.mxu0 0.0
      %2689 = vmatpush.msra.mxu0 0.0
      %v2690 = vand.u32 %v2467, 4294901760
      %v2691 = vsub.f32 %v2467, %v2690
      %2692 = vmatpush.msra.mxu0 %v2691
      %v2693 = vand.u32 %v2452, 4294901760
      %v2694 = vsub.f32 %v2452, %v2693
      %2695 = vmatpush.msra.mxu0 %v2694
      %v2696 = vand.u32 %v2448, 4294901760
      %v2697 = vsub.f32 %v2448, %v2696
      %2698 = vmatpush.msra.mxu0 %v2697
      %v2699 = vand.u32 %v743, 4294901760
      %v2700 = vsub.f32 %v743, %v2699
      %2701 = vmatmul.f32.gmra.mxu0 %v2700
      %v2702 = vpop.f32.mrf.mxu0
      %v2703 = vadd.f32 %v2627, %v2702
      %v2704 = vand.u32 %v746, 4294901760
      %v2705 = vsub.f32 %v746, %v2704
      %2706 = vmatmul.f32.gmra.mxu0 %v2705
      %v2707 = vpop.f32.mrf.mxu0
      %v2708 = vadd.f32 %v2631, %v2707
      %v2709 = vand.u32 %v749, 4294901760
      %v2710 = vsub.f32 %v749, %v2709
      %2711 = vmatmul.f32.gmra.mxu0 %v2710
      %v2712 = vpop.f32.mrf.mxu0
      %v2713 = vadd.f32 %v2635, %v2712
      %v2714 = vand.u32 %v752, 4294901760
      %v2715 = vsub.f32 %v752, %v2714
      %2716 = vmatmul.f32.gmra.mxu0 %v2715
      %v2717 = vpop.f32.mrf.mxu0
      %v2718 = vadd.f32 %v2639, %v2717
      %v2719 = vand.u32 %v755, 4294901760
      %v2720 = vsub.f32 %v755, %v2719
      %2721 = vmatmul.f32.gmra.mxu0 %v2720
      %v2722 = vpop.f32.mrf.mxu0
      %v2723 = vadd.f32 %v2643, %v2722
      %v2724 = vand.u32 %v758, 4294901760
      %v2725 = vsub.f32 %v758, %v2724
      %2726 = vmatmul.f32.gmra.mxu0 %v2725
      %v2727 = vpop.f32.mrf.mxu0
      %v2728 = vadd.f32 %v2647, %v2727
      %v2729 = vand.u32 %v761, 4294901760
      %v2730 = vsub.f32 %v761, %v2729
      %2731 = vmatmul.f32.gmra.mxu0 %v2730
      %v2732 = vpop.f32.mrf.mxu0
      %v2733 = vadd.f32 %v2651, %v2732
      %v2734 = vand.u32 %v764, 4294901760
      %v2735 = vsub.f32 %v764, %v2734
      %2736 = vmatmul.f32.gmra.mxu0 %v2735
      %v2737 = vpop.f32.mrf.mxu0
      %v2738 = vadd.f32 %v2655, %v2737
      %v2739 = vand.u32 %v767, 4294901760
      %v2740 = vsub.f32 %v767, %v2739
      %2741 = vmatmul.f32.gmra.mxu0 %v2740
      %v2742 = vpop.f32.mrf.mxu0
      %v2743 = vadd.f32 %v2659, %v2742
      %v2744 = vand.u32 %v770, 4294901760
      %v2745 = vsub.f32 %v770, %v2744
      %2746 = vmatmul.f32.gmra.mxu0 %v2745
      %v2747 = vpop.f32.mrf.mxu0
      %v2748 = vadd.f32 %v2663, %v2747
      %v2749 = vand.u32 %v773, 4294901760
      %v2750 = vsub.f32 %v773, %v2749
      %2751 = vmatmul.f32.gmra.mxu0 %v2750
      %v2752 = vpop.f32.mrf.mxu0
      %v2753 = vadd.f32 %v2667, %v2752
      %v2754 = vand.u32 %v776, 4294901760
      %v2755 = vsub.f32 %v776, %v2754
      %2756 = vmatmul.f32.gmra.mxu0 %v2755
      %v2757 = vpop.f32.mrf.mxu0
      %v2758 = vadd.f32 %v2671, %v2757
      %v2759 = vand.u32 %v779, 4294901760
      %v2760 = vsub.f32 %v779, %v2759
      %2761 = vmatmul.f32.gmra.mxu0 %v2760
      %v2762 = vpop.f32.mrf.mxu0
      %v2763 = vadd.f32 %v2675, %v2762
      %2764 = vdwg.mxu0
      %2765 = vmatpush.msra.mxu0 0.0
      %2766 = vmatpush.msra.mxu0 0.0
      %2767 = vmatpush.msra.mxu0 0.0
      %2768 = vmatpush.msra.mxu0 0.0
      %2769 = vmatpush.msra.mxu0 0.0
      %2770 = vmatpush.msra.mxu0 0.0
      %2771 = vmatpush.msra.mxu0 0.0
      %2772 = vmatpush.msra.mxu0 0.0
      %2773 = vmatpush.msra.mxu0 0.0
      %2774 = vmatpush.msra.mxu0 0.0
      %2775 = vmatpush.msra.mxu0 0.0
      %2776 = vmatpush.msra.mxu0 0.0
      %2777 = vmatpush.msra.mxu0 0.0
      %v2778 = vand.u32 %v2467, 4294901760
      %2779 = vmatpush.msra.mxu0 %v2778
      %v2780 = vand.u32 %v2452, 4294901760
      %2781 = vmatpush.msra.mxu0 %v2780
      %v2782 = vand.u32 %v2448, 4294901760
      %2783 = vmatpush.msra.mxu0 %v2782
      %v2784 = vand.u32 %v743, 4294901760
      %v2785 = vsub.f32 %v743, %v2784
      %v2786 = vand.u32 %v2785, 4294901760
      %2787 = vmatmul.f32.gmra.mxu0 %v2786
      %v2788 = vpop.f32.mrf.mxu0
      %v2789 = vadd.f32 %v2703, %v2788
      %v2790 = vand.u32 %v746, 4294901760
      %v2791 = vsub.f32 %v746, %v2790
      %v2792 = vand.u32 %v2791, 4294901760
      %2793 = vmatmul.f32.gmra.mxu0 %v2792
      %v2794 = vpop.f32.mrf.mxu0
      %v2795 = vadd.f32 %v2708, %v2794
      %v2796 = vand.u32 %v749, 4294901760
      %v2797 = vsub.f32 %v749, %v2796
      %v2798 = vand.u32 %v2797, 4294901760
      %2799 = vmatmul.f32.gmra.mxu0 %v2798
      %v2800 = vpop.f32.mrf.mxu0
      %v2801 = vadd.f32 %v2713, %v2800
      %v2802 = vand.u32 %v752, 4294901760
      %v2803 = vsub.f32 %v752, %v2802
      %v2804 = vand.u32 %v2803, 4294901760
      %2805 = vmatmul.f32.gmra.mxu0 %v2804
      %v2806 = vpop.f32.mrf.mxu0
      %v2807 = vadd.f32 %v2718, %v2806
      %v2808 = vand.u32 %v755, 4294901760
      %v2809 = vsub.f32 %v755, %v2808
      %v2810 = vand.u32 %v2809, 4294901760
      %2811 = vmatmul.f32.gmra.mxu0 %v2810
      %v2812 = vpop.f32.mrf.mxu0
      %v2813 = vadd.f32 %v2723, %v2812
      %v2814 = vand.u32 %v758, 4294901760
      %v2815 = vsub.f32 %v758, %v2814
      %v2816 = vand.u32 %v2815, 4294901760
      %2817 = vmatmul.f32.gmra.mxu0 %v2816
      %v2818 = vpop.f32.mrf.mxu0
      %v2819 = vadd.f32 %v2728, %v2818
      %v2820 = vand.u32 %v761, 4294901760
      %v2821 = vsub.f32 %v761, %v2820
      %v2822 = vand.u32 %v2821, 4294901760
      %2823 = vmatmul.f32.gmra.mxu0 %v2822
      %v2824 = vpop.f32.mrf.mxu0
      %v2825 = vadd.f32 %v2733, %v2824
      %v2826 = vand.u32 %v764, 4294901760
      %v2827 = vsub.f32 %v764, %v2826
      %v2828 = vand.u32 %v2827, 4294901760
      %2829 = vmatmul.f32.gmra.mxu0 %v2828
      %v2830 = vpop.f32.mrf.mxu0
      %v2831 = vadd.f32 %v2738, %v2830
      %v2832 = vand.u32 %v767, 4294901760
      %v2833 = vsub.f32 %v767, %v2832
      %v2834 = vand.u32 %v2833, 4294901760
      %2835 = vmatmul.f32.gmra.mxu0 %v2834
      %v2836 = vpop.f32.mrf.mxu0
      %v2837 = vadd.f32 %v2743, %v2836
      %v2838 = vand.u32 %v770, 4294901760
      %v2839 = vsub.f32 %v770, %v2838
      %v2840 = vand.u32 %v2839, 4294901760
      %2841 = vmatmul.f32.gmra.mxu0 %v2840
      %v2842 = vpop.f32.mrf.mxu0
      %v2843 = vadd.f32 %v2748, %v2842
      %v2844 = vand.u32 %v773, 4294901760
      %v2845 = vsub.f32 %v773, %v2844
      %v2846 = vand.u32 %v2845, 4294901760
      %2847 = vmatmul.f32.gmra.mxu0 %v2846
      %v2848 = vpop.f32.mrf.mxu0
      %v2849 = vadd.f32 %v2753, %v2848
      %v2850 = vand.u32 %v776, 4294901760
      %v2851 = vsub.f32 %v776, %v2850
      %v2852 = vand.u32 %v2851, 4294901760
      %2853 = vmatmul.f32.gmra.mxu0 %v2852
      %v2854 = vpop.f32.mrf.mxu0
      %v2855 = vadd.f32 %v2758, %v2854
      %v2856 = vand.u32 %v779, 4294901760
      %v2857 = vsub.f32 %v779, %v2856
      %v2858 = vand.u32 %v2857, 4294901760
      %2859 = vmatmul.f32.gmra.mxu0 %v2858
      %v2860 = vpop.f32.mrf.mxu0
      %v2861 = vadd.f32 %v2763, %v2860
      %2862 = vdwg.mxu0
      %2863 = vmatpush.msra.mxu0 0.0
      %2864 = vmatpush.msra.mxu0 0.0
      %2865 = vmatpush.msra.mxu0 0.0
      %2866 = vmatpush.msra.mxu0 0.0
      %2867 = vmatpush.msra.mxu0 0.0
      %2868 = vmatpush.msra.mxu0 0.0
      %2869 = vmatpush.msra.mxu0 0.0
      %2870 = vmatpush.msra.mxu0 0.0
      %2871 = vmatpush.msra.mxu0 0.0
      %2872 = vmatpush.msra.mxu0 0.0
      %2873 = vmatpush.msra.mxu0 0.0
      %2874 = vmatpush.msra.mxu0 0.0
      %2875 = vmatpush.msra.mxu0 0.0
      %v2876 = vand.u32 %v2467, 4294901760
      %v2877 = vsub.f32 %v2467, %v2876
      %v2878 = vand.u32 %v2877, 4294901760
      %2879 = vmatpush.msra.mxu0 %v2878
      %v2880 = vand.u32 %v2452, 4294901760
      %v2881 = vsub.f32 %v2452, %v2880
      %v2882 = vand.u32 %v2881, 4294901760
      %2883 = vmatpush.msra.mxu0 %v2882
      %v2884 = vand.u32 %v2448, 4294901760
      %v2885 = vsub.f32 %v2448, %v2884
      %v2886 = vand.u32 %v2885, 4294901760
      %2887 = vmatpush.msra.mxu0 %v2886
      %v2888 = vand.u32 %v743, 4294901760
      %2889 = vmatmul.f32.gmra.mxu0 %v2888
      %v2890 = vpop.f32.mrf.mxu0
      %v2891 = vadd.f32 %v2789, %v2890
      %v2892 = vand.u32 %v746, 4294901760
      %2893 = vmatmul.f32.gmra.mxu0 %v2892
      %v2894 = vpop.f32.mrf.mxu0
      %v2895 = vadd.f32 %v2795, %v2894
      %v2896 = vand.u32 %v749, 4294901760
      %2897 = vmatmul.f32.gmra.mxu0 %v2896
      %v2898 = vpop.f32.mrf.mxu0
      %v2899 = vadd.f32 %v2801, %v2898
      %v2900 = vand.u32 %v752, 4294901760
      %2901 = vmatmul.f32.gmra.mxu0 %v2900
      %v2902 = vpop.f32.mrf.mxu0
      %v2903 = vadd.f32 %v2807, %v2902
      %v2904 = vand.u32 %v755, 4294901760
      %2905 = vmatmul.f32.gmra.mxu0 %v2904
      %v2906 = vpop.f32.mrf.mxu0
      %v2907 = vadd.f32 %v2813, %v2906
      %v2908 = vand.u32 %v758, 4294901760
      %2909 = vmatmul.f32.gmra.mxu0 %v2908
      %v2910 = vpop.f32.mrf.mxu0
      %v2911 = vadd.f32 %v2819, %v2910
      %v2912 = vand.u32 %v761, 4294901760
      %2913 = vmatmul.f32.gmra.mxu0 %v2912
      %v2914 = vpop.f32.mrf.mxu0
      %v2915 = vadd.f32 %v2825, %v2914
      %v2916 = vand.u32 %v764, 4294901760
      %2917 = vmatmul.f32.gmra.mxu0 %v2916
      %v2918 = vpop.f32.mrf.mxu0
      %v2919 = vadd.f32 %v2831, %v2918
      %v2920 = vand.u32 %v767, 4294901760
      %2921 = vmatmul.f32.gmra.mxu0 %v2920
      %v2922 = vpop.f32.mrf.mxu0
      %v2923 = vadd.f32 %v2837, %v2922
      %v2924 = vand.u32 %v770, 4294901760
      %2925 = vmatmul.f32.gmra.mxu0 %v2924
      %v2926 = vpop.f32.mrf.mxu0
      %v2927 = vadd.f32 %v2843, %v2926
      %v2928 = vand.u32 %v773, 4294901760
      %2929 = vmatmul.f32.gmra.mxu0 %v2928
      %v2930 = vpop.f32.mrf.mxu0
      %v2931 = vadd.f32 %v2849, %v2930
      %v2932 = vand.u32 %v776, 4294901760
      %2933 = vmatmul.f32.gmra.mxu0 %v2932
      %v2934 = vpop.f32.mrf.mxu0
      %v2935 = vadd.f32 %v2855, %v2934
      %v2936 = vand.u32 %v779, 4294901760
      %2937 = vmatmul.f32.gmra.mxu0 %v2936
      %v2938 = vpop.f32.mrf.mxu0
      %v2939 = vadd.f32 %v2861, %v2938
      %2940 = vdwg.mxu0
      %2941 = vmatpush.msra.mxu0 0.0
      %2942 = vmatpush.msra.mxu0 0.0
      %2943 = vmatpush.msra.mxu0 0.0
      %2944 = vmatpush.msra.mxu0 0.0
      %2945 = vmatpush.msra.mxu0 0.0
      %2946 = vmatpush.msra.mxu0 0.0
      %2947 = vmatpush.msra.mxu0 0.0
      %2948 = vmatpush.msra.mxu0 0.0
      %2949 = vmatpush.msra.mxu0 0.0
      %2950 = vmatpush.msra.mxu0 0.0
      %2951 = vmatpush.msra.mxu0 0.0
      %2952 = vmatpush.msra.mxu0 0.0
      %2953 = vmatpush.msra.mxu0 0.0
      %v2954 = vand.u32 %v2467, 4294901760
      %2955 = vmatpush.msra.mxu0 %v2954
      %v2956 = vand.u32 %v2452, 4294901760
      %2957 = vmatpush.msra.mxu0 %v2956
      %v2958 = vand.u32 %v2448, 4294901760
      %2959 = vmatpush.msra.mxu0 %v2958
      %v2960 = vand.u32 %v743, 4294901760
      %2961 = vmatmul.f32.gmra.mxu0 %v2960
      %v2962 = vpop.f32.mrf.mxu0
      %v2963 = vadd.f32 %v2891, %v2962
      %v2964 = vand.u32 %v746, 4294901760
      %2965 = vmatmul.f32.gmra.mxu0 %v2964
      %v2966 = vpop.f32.mrf.mxu0
      %v2967 = vadd.f32 %v2895, %v2966
      %v2968 = vand.u32 %v749, 4294901760
      %2969 = vmatmul.f32.gmra.mxu0 %v2968
      %v2970 = vpop.f32.mrf.mxu0
      %v2971 = vadd.f32 %v2899, %v2970
      %v2972 = vand.u32 %v752, 4294901760
      %2973 = vmatmul.f32.gmra.mxu0 %v2972
      %v2974 = vpop.f32.mrf.mxu0
      %v2975 = vadd.f32 %v2903, %v2974
      %v2976 = vand.u32 %v755, 4294901760
      %2977 = vmatmul.f32.gmra.mxu0 %v2976
      %v2978 = vpop.f32.mrf.mxu0
      %v2979 = vadd.f32 %v2907, %v2978
      %v2980 = vand.u32 %v758, 4294901760
      %2981 = vmatmul.f32.gmra.mxu0 %v2980
      %v2982 = vpop.f32.mrf.mxu0
      %v2983 = vadd.f32 %v2911, %v2982
      %v2984 = vand.u32 %v761, 4294901760
      %2985 = vmatmul.f32.gmra.mxu0 %v2984
      %v2986 = vpop.f32.mrf.mxu0
      %v2987 = vadd.f32 %v2915, %v2986
      %v2988 = vand.u32 %v764, 4294901760
      %2989 = vmatmul.f32.gmra.mxu0 %v2988
      %v2990 = vpop.f32.mrf.mxu0
      %v2991 = vadd.f32 %v2919, %v2990
      %v2992 = vand.u32 %v767, 4294901760
      %2993 = vmatmul.f32.gmra.mxu0 %v2992
      %v2994 = vpop.f32.mrf.mxu0
      %v2995 = vadd.f32 %v2923, %v2994
      %v2996 = vand.u32 %v770, 4294901760
      %2997 = vmatmul.f32.gmra.mxu0 %v2996
      %v2998 = vpop.f32.mrf.mxu0
      %v2999 = vadd.f32 %v2927, %v2998
      %v3000 = vand.u32 %v773, 4294901760
      %3001 = vmatmul.f32.gmra.mxu0 %v3000
      %v3002 = vpop.f32.mrf.mxu0
      %v3003 = vadd.f32 %v2931, %v3002
      %v3004 = vand.u32 %v776, 4294901760
      %3005 = vmatmul.f32.gmra.mxu0 %v3004
      %v3006 = vpop.f32.mrf.mxu0
      %v3007 = vadd.f32 %v2935, %v3006
      %v3008 = vand.u32 %v779, 4294901760
      %3009 = vmatmul.f32.gmra.mxu0 %v3008
      %v3010 = vpop.f32.mrf.mxu0
      %v3011 = vadd.f32 %v2939, %v3010
      %3012 = vdwg.mxu0
      %s3013 = scalar_lea.vmem %s227, 416
      %3014 = vst.msk [vmem:[%s3013] sm:$0xff] %vm307, %v2963
      %3015 = vst.msk [vmem:[%s3013 + $0x8] sm:$0xff] %vm307, %v2967
      %3016 = vst.msk [vmem:[%s3013 + $0x10] sm:$0xff] %vm307, %v2971
      %3017 = vst.msk [vmem:[%s3013 + $0x18] sm:$0xff] %vm307, %v2975
      %3018 = vst.msk [vmem:[%s3013 + $0x20] sm:$0xff] %vm307, %v2979
      %3019 = vst.msk [vmem:[%s3013 + $0x28] sm:$0xff] %vm307, %v2983
      %3020 = vst.msk [vmem:[%s3013 + $0x30] sm:$0xff] %vm307, %v2987
      %3021 = vst.msk [vmem:[%s3013 + $0x38] sm:$0xff] %vm307, %v2991
      %3022 = vst.msk [vmem:[%s3013 + $0x40] sm:$0xff] %vm307, %v2995
      %3023 = vst.msk [vmem:[%s3013 + $0x48] sm:$0xff] %vm307, %v2999
      %3024 = vst.msk [vmem:[%s3013 + $0x50] sm:$0xff] %vm307, %v3003
      %3025 = vst.msk [vmem:[%s3013 + $0x58] sm:$0xff] %vm307, %v3007
      %3026 = vst.msk [vmem:[%s3013 + $0x60] sm:$0xf] %vm320, %v3011
      %v3029 = vrot.slane %v2456, 4
      %v3030 = vrot.slane %v2460, 4
      %v3031 = vsel %vm504, %v3029, %v3030
      %v3032 = vrot.slane %v2464, 4
      %v3033 = vsel %vm504, %v3030, %v3032
      %v3036 = vsel %vm504, %v3032, 0
      %3038 = vmatpush.msra.mxu0 0.0
      %3039 = vmatpush.msra.mxu0 0.0
      %3040 = vmatpush.msra.mxu0 0.0
      %3041 = vmatpush.msra.mxu0 0.0
      %3042 = vmatpush.msra.mxu0 0.0
      %3043 = vmatpush.msra.mxu0 0.0
      %3044 = vmatpush.msra.mxu0 0.0
      %3045 = vmatpush.msra.mxu0 0.0
      %3046 = vmatpush.msra.mxu0 0.0
      %3047 = vmatpush.msra.mxu0 0.0
      %3048 = vmatpush.msra.mxu0 0.0
      %3049 = vmatpush.msra.mxu0 0.0
      %3050 = vmatpush.msra.mxu0 0.0
      %v3051 = vand.u32 %v3036, 4294901760
      %3052 = vmatpush.msra.mxu0 %v3051
      %v3053 = vand.u32 %v3033, 4294901760
      %3054 = vmatpush.msra.mxu0 %v3053
      %v3055 = vand.u32 %v3031, 4294901760
      %3056 = vmatpush.msra.mxu0 %v3055
      %v3057 = vand.u32 %v743, 4294901760
      %v3058 = vsub.f32 %v743, %v3057
      %v3059 = vand.u32 %v3058, 4294901760
      %v3060 = vsub.f32 %v3058, %v3059
      %v3061 = vand.u32 %v3060, 4294901760
      %3062 = vmatmul.f32.gmra.mxu0 %v3061
      %v3063 = vpop.f32.mrf.mxu0
      %v3064 = vadd.f32 0.0, %v3063
      %v3065 = vand.u32 %v746, 4294901760
      %v3066 = vsub.f32 %v746, %v3065
      %v3067 = vand.u32 %v3066, 4294901760
      %v3068 = vsub.f32 %v3066, %v3067
      %v3069 = vand.u32 %v3068, 4294901760
      %3070 = vmatmul.f32.gmra.mxu0 %v3069
      %v3071 = vpop.f32.mrf.mxu0
      %v3072 = vadd.f32 0.0, %v3071
      %v3073 = vand.u32 %v749, 4294901760
      %v3074 = vsub.f32 %v749, %v3073
      %v3075 = vand.u32 %v3074, 4294901760
      %v3076 = vsub.f32 %v3074, %v3075
      %v3077 = vand.u32 %v3076, 4294901760
      %3078 = vmatmul.f32.gmra.mxu0 %v3077
      %v3079 = vpop.f32.mrf.mxu0
      %v3080 = vadd.f32 0.0, %v3079
      %v3081 = vand.u32 %v752, 4294901760
      %v3082 = vsub.f32 %v752, %v3081
      %v3083 = vand.u32 %v3082, 4294901760
      %v3084 = vsub.f32 %v3082, %v3083
      %v3085 = vand.u32 %v3084, 4294901760
      %3086 = vmatmul.f32.gmra.mxu0 %v3085
      %v3087 = vpop.f32.mrf.mxu0
      %v3088 = vadd.f32 0.0, %v3087
      %v3089 = vand.u32 %v755, 4294901760
      %v3090 = vsub.f32 %v755, %v3089
      %v3091 = vand.u32 %v3090, 4294901760
      %v3092 = vsub.f32 %v3090, %v3091
      %v3093 = vand.u32 %v3092, 4294901760
      %3094 = vmatmul.f32.gmra.mxu0 %v3093
      %v3095 = vpop.f32.mrf.mxu0
      %v3096 = vadd.f32 0.0, %v3095
      %v3097 = vand.u32 %v758, 4294901760
      %v3098 = vsub.f32 %v758, %v3097
      %v3099 = vand.u32 %v3098, 4294901760
      %v3100 = vsub.f32 %v3098, %v3099
      %v3101 = vand.u32 %v3100, 4294901760
      %3102 = vmatmul.f32.gmra.mxu0 %v3101
      %v3103 = vpop.f32.mrf.mxu0
      %v3104 = vadd.f32 0.0, %v3103
      %v3105 = vand.u32 %v761, 4294901760
      %v3106 = vsub.f32 %v761, %v3105
      %v3107 = vand.u32 %v3106, 4294901760
      %v3108 = vsub.f32 %v3106, %v3107
      %v3109 = vand.u32 %v3108, 4294901760
      %3110 = vmatmul.f32.gmra.mxu0 %v3109
      %v3111 = vpop.f32.mrf.mxu0
      %v3112 = vadd.f32 0.0, %v3111
      %v3113 = vand.u32 %v764, 4294901760
      %v3114 = vsub.f32 %v764, %v3113
      %v3115 = vand.u32 %v3114, 4294901760
      %v3116 = vsub.f32 %v3114, %v3115
      %v3117 = vand.u32 %v3116, 4294901760
      %3118 = vmatmul.f32.gmra.mxu0 %v3117
      %v3119 = vpop.f32.mrf.mxu0
      %v3120 = vadd.f32 0.0, %v3119
      %v3121 = vand.u32 %v767, 4294901760
      %v3122 = vsub.f32 %v767, %v3121
      %v3123 = vand.u32 %v3122, 4294901760
      %v3124 = vsub.f32 %v3122, %v3123
      %v3125 = vand.u32 %v3124, 4294901760
      %3126 = vmatmul.f32.gmra.mxu0 %v3125
      %v3127 = vpop.f32.mrf.mxu0
      %v3128 = vadd.f32 0.0, %v3127
      %v3129 = vand.u32 %v770, 4294901760
      %v3130 = vsub.f32 %v770, %v3129
      %v3131 = vand.u32 %v3130, 4294901760
      %v3132 = vsub.f32 %v3130, %v3131
      %v3133 = vand.u32 %v3132, 4294901760
      %3134 = vmatmul.f32.gmra.mxu0 %v3133
      %v3135 = vpop.f32.mrf.mxu0
      %v3136 = vadd.f32 0.0, %v3135
      %v3137 = vand.u32 %v773, 4294901760
      %v3138 = vsub.f32 %v773, %v3137
      %v3139 = vand.u32 %v3138, 4294901760
      %v3140 = vsub.f32 %v3138, %v3139
      %v3141 = vand.u32 %v3140, 4294901760
      %3142 = vmatmul.f32.gmra.mxu0 %v3141
      %v3143 = vpop.f32.mrf.mxu0
      %v3144 = vadd.f32 0.0, %v3143
      %v3145 = vand.u32 %v776, 4294901760
      %v3146 = vsub.f32 %v776, %v3145
      %v3147 = vand.u32 %v3146, 4294901760
      %v3148 = vsub.f32 %v3146, %v3147
      %v3149 = vand.u32 %v3148, 4294901760
      %3150 = vmatmul.f32.gmra.mxu0 %v3149
      %v3151 = vpop.f32.mrf.mxu0
      %v3152 = vadd.f32 0.0, %v3151
      %v3153 = vand.u32 %v779, 4294901760
      %v3154 = vsub.f32 %v779, %v3153
      %v3155 = vand.u32 %v3154, 4294901760
      %v3156 = vsub.f32 %v3154, %v3155
      %v3157 = vand.u32 %v3156, 4294901760
      %3158 = vmatmul.f32.gmra.mxu0 %v3157
      %v3159 = vpop.f32.mrf.mxu0
      %v3160 = vadd.f32 0.0, %v3159
      %3161 = vdwg.mxu0
      %3162 = vmatpush.msra.mxu0 0.0
      %3163 = vmatpush.msra.mxu0 0.0
      %3164 = vmatpush.msra.mxu0 0.0
      %3165 = vmatpush.msra.mxu0 0.0
      %3166 = vmatpush.msra.mxu0 0.0
      %3167 = vmatpush.msra.mxu0 0.0
      %3168 = vmatpush.msra.mxu0 0.0
      %3169 = vmatpush.msra.mxu0 0.0
      %3170 = vmatpush.msra.mxu0 0.0
      %3171 = vmatpush.msra.mxu0 0.0
      %3172 = vmatpush.msra.mxu0 0.0
      %3173 = vmatpush.msra.mxu0 0.0
      %3174 = vmatpush.msra.mxu0 0.0
      %v3175 = vand.u32 %v3036, 4294901760
      %v3176 = vsub.f32 %v3036, %v3175
      %v3177 = vand.u32 %v3176, 4294901760
      %v3178 = vsub.f32 %v3176, %v3177
      %v3179 = vand.u32 %v3178, 4294901760
      %3180 = vmatpush.msra.mxu0 %v3179
      %v3181 = vand.u32 %v3033, 4294901760
      %v3182 = vsub.f32 %v3033, %v3181
      %v3183 = vand.u32 %v3182, 4294901760
      %v3184 = vsub.f32 %v3182, %v3183
      %v3185 = vand.u32 %v3184, 4294901760
      %3186 = vmatpush.msra.mxu0 %v3185
      %v3187 = vand.u32 %v3031, 4294901760
      %v3188 = vsub.f32 %v3031, %v3187
      %v3189 = vand.u32 %v3188, 4294901760
      %v3190 = vsub.f32 %v3188, %v3189
      %v3191 = vand.u32 %v3190, 4294901760
      %3192 = vmatpush.msra.mxu0 %v3191
      %v3193 = vand.u32 %v743, 4294901760
      %3194 = vmatmul.f32.gmra.mxu0 %v3193
      %v3195 = vpop.f32.mrf.mxu0
      %v3196 = vadd.f32 %v3064, %v3195
      %v3197 = vand.u32 %v746, 4294901760
      %3198 = vmatmul.f32.gmra.mxu0 %v3197
      %v3199 = vpop.f32.mrf.mxu0
      %v3200 = vadd.f32 %v3072, %v3199
      %v3201 = vand.u32 %v749, 4294901760
      %3202 = vmatmul.f32.gmra.mxu0 %v3201
      %v3203 = vpop.f32.mrf.mxu0
      %v3204 = vadd.f32 %v3080, %v3203
      %v3205 = vand.u32 %v752, 4294901760
      %3206 = vmatmul.f32.gmra.mxu0 %v3205
      %v3207 = vpop.f32.mrf.mxu0
      %v3208 = vadd.f32 %v3088, %v3207
      %v3209 = vand.u32 %v755, 4294901760
      %3210 = vmatmul.f32.gmra.mxu0 %v3209
      %v3211 = vpop.f32.mrf.mxu0
      %v3212 = vadd.f32 %v3096, %v3211
      %v3213 = vand.u32 %v758, 4294901760
      %3214 = vmatmul.f32.gmra.mxu0 %v3213
      %v3215 = vpop.f32.mrf.mxu0
      %v3216 = vadd.f32 %v3104, %v3215
      %v3217 = vand.u32 %v761, 4294901760
      %3218 = vmatmul.f32.gmra.mxu0 %v3217
      %v3219 = vpop.f32.mrf.mxu0
      %v3220 = vadd.f32 %v3112, %v3219
      %v3221 = vand.u32 %v764, 4294901760
      %3222 = vmatmul.f32.gmra.mxu0 %v3221
      %v3223 = vpop.f32.mrf.mxu0
      %v3224 = vadd.f32 %v3120, %v3223
      %v3225 = vand.u32 %v767, 4294901760
      %3226 = vmatmul.f32.gmra.mxu0 %v3225
      %v3227 = vpop.f32.mrf.mxu0
      %v3228 = vadd.f32 %v3128, %v3227
      %v3229 = vand.u32 %v770, 4294901760
      %3230 = vmatmul.f32.gmra.mxu0 %v3229
      %v3231 = vpop.f32.mrf.mxu0
      %v3232 = vadd.f32 %v3136, %v3231
      %v3233 = vand.u32 %v773, 4294901760
      %3234 = vmatmul.f32.gmra.mxu0 %v3233
      %v3235 = vpop.f32.mrf.mxu0
      %v3236 = vadd.f32 %v3144, %v3235
      %v3237 = vand.u32 %v776, 4294901760
      %3238 = vmatmul.f32.gmra.mxu0 %v3237
      %v3239 = vpop.f32.mrf.mxu0
      %v3240 = vadd.f32 %v3152, %v3239
      %v3241 = vand.u32 %v779, 4294901760
      %3242 = vmatmul.f32.gmra.mxu0 %v3241
      %v3243 = vpop.f32.mrf.mxu0
      %v3244 = vadd.f32 %v3160, %v3243
      %3245 = vdwg.mxu0
      %3246 = vmatpush.msra.mxu0 0.0
      %3247 = vmatpush.msra.mxu0 0.0
      %3248 = vmatpush.msra.mxu0 0.0
      %3249 = vmatpush.msra.mxu0 0.0
      %3250 = vmatpush.msra.mxu0 0.0
      %3251 = vmatpush.msra.mxu0 0.0
      %3252 = vmatpush.msra.mxu0 0.0
      %3253 = vmatpush.msra.mxu0 0.0
      %3254 = vmatpush.msra.mxu0 0.0
      %3255 = vmatpush.msra.mxu0 0.0
      %3256 = vmatpush.msra.mxu0 0.0
      %3257 = vmatpush.msra.mxu0 0.0
      %3258 = vmatpush.msra.mxu0 0.0
      %v3259 = vand.u32 %v3036, 4294901760
      %v3260 = vsub.f32 %v3036, %v3259
      %3261 = vmatpush.msra.mxu0 %v3260
      %v3262 = vand.u32 %v3033, 4294901760
      %v3263 = vsub.f32 %v3033, %v3262
      %3264 = vmatpush.msra.mxu0 %v3263
      %v3265 = vand.u32 %v3031, 4294901760
      %v3266 = vsub.f32 %v3031, %v3265
      %3267 = vmatpush.msra.mxu0 %v3266
      %v3268 = vand.u32 %v743, 4294901760
      %v3269 = vsub.f32 %v743, %v3268
      %3270 = vmatmul.f32.gmra.mxu0 %v3269
      %v3271 = vpop.f32.mrf.mxu0
      %v3272 = vadd.f32 %v3196, %v3271
      %v3273 = vand.u32 %v746, 4294901760
      %v3274 = vsub.f32 %v746, %v3273
      %3275 = vmatmul.f32.gmra.mxu0 %v3274
      %v3276 = vpop.f32.mrf.mxu0
      %v3277 = vadd.f32 %v3200, %v3276
      %v3278 = vand.u32 %v749, 4294901760
      %v3279 = vsub.f32 %v749, %v3278
      %3280 = vmatmul.f32.gmra.mxu0 %v3279
      %v3281 = vpop.f32.mrf.mxu0
      %v3282 = vadd.f32 %v3204, %v3281
      %v3283 = vand.u32 %v752, 4294901760
      %v3284 = vsub.f32 %v752, %v3283
      %3285 = vmatmul.f32.gmra.mxu0 %v3284
      %v3286 = vpop.f32.mrf.mxu0
      %v3287 = vadd.f32 %v3208, %v3286
      %v3288 = vand.u32 %v755, 4294901760
      %v3289 = vsub.f32 %v755, %v3288
      %3290 = vmatmul.f32.gmra.mxu0 %v3289
      %v3291 = vpop.f32.mrf.mxu0
      %v3292 = vadd.f32 %v3212, %v3291
      %v3293 = vand.u32 %v758, 4294901760
      %v3294 = vsub.f32 %v758, %v3293
      %3295 = vmatmul.f32.gmra.mxu0 %v3294
      %v3296 = vpop.f32.mrf.mxu0
      %v3297 = vadd.f32 %v3216, %v3296
      %v3298 = vand.u32 %v761, 4294901760
      %v3299 = vsub.f32 %v761, %v3298
      %3300 = vmatmul.f32.gmra.mxu0 %v3299
      %v3301 = vpop.f32.mrf.mxu0
      %v3302 = vadd.f32 %v3220, %v3301
      %v3303 = vand.u32 %v764, 4294901760
      %v3304 = vsub.f32 %v764, %v3303
      %3305 = vmatmul.f32.gmra.mxu0 %v3304
      %v3306 = vpop.f32.mrf.mxu0
      %v3307 = vadd.f32 %v3224, %v3306
      %v3308 = vand.u32 %v767, 4294901760
      %v3309 = vsub.f32 %v767, %v3308
      %3310 = vmatmul.f32.gmra.mxu0 %v3309
      %v3311 = vpop.f32.mrf.mxu0
      %v3312 = vadd.f32 %v3228, %v3311
      %v3313 = vand.u32 %v770, 4294901760
      %v3314 = vsub.f32 %v770, %v3313
      %3315 = vmatmul.f32.gmra.mxu0 %v3314
      %v3316 = vpop.f32.mrf.mxu0
      %v3317 = vadd.f32 %v3232, %v3316
      %v3318 = vand.u32 %v773, 4294901760
      %v3319 = vsub.f32 %v773, %v3318
      %3320 = vmatmul.f32.gmra.mxu0 %v3319
      %v3321 = vpop.f32.mrf.mxu0
      %v3322 = vadd.f32 %v3236, %v3321
      %v3323 = vand.u32 %v776, 4294901760
      %v3324 = vsub.f32 %v776, %v3323
      %3325 = vmatmul.f32.gmra.mxu0 %v3324
      %v3326 = vpop.f32.mrf.mxu0
      %v3327 = vadd.f32 %v3240, %v3326
      %v3328 = vand.u32 %v779, 4294901760
      %v3329 = vsub.f32 %v779, %v3328
      %3330 = vmatmul.f32.gmra.mxu0 %v3329
      %v3331 = vpop.f32.mrf.mxu0
      %v3332 = vadd.f32 %v3244, %v3331
      %3333 = vdwg.mxu0
      %3334 = vmatpush.msra.mxu0 0.0
      %3335 = vmatpush.msra.mxu0 0.0
      %3336 = vmatpush.msra.mxu0 0.0
      %3337 = vmatpush.msra.mxu0 0.0
      %3338 = vmatpush.msra.mxu0 0.0
      %3339 = vmatpush.msra.mxu0 0.0
      %3340 = vmatpush.msra.mxu0 0.0
      %3341 = vmatpush.msra.mxu0 0.0
      %3342 = vmatpush.msra.mxu0 0.0
      %3343 = vmatpush.msra.mxu0 0.0
      %3344 = vmatpush.msra.mxu0 0.0
      %3345 = vmatpush.msra.mxu0 0.0
      %3346 = vmatpush.msra.mxu0 0.0
      %v3347 = vand.u32 %v3036, 4294901760
      %3348 = vmatpush.msra.mxu0 %v3347
      %v3349 = vand.u32 %v3033, 4294901760
      %3350 = vmatpush.msra.mxu0 %v3349
      %v3351 = vand.u32 %v3031, 4294901760
      %3352 = vmatpush.msra.mxu0 %v3351
      %v3353 = vand.u32 %v743, 4294901760
      %v3354 = vsub.f32 %v743, %v3353
      %v3355 = vand.u32 %v3354, 4294901760
      %3356 = vmatmul.f32.gmra.mxu0 %v3355
      %v3357 = vpop.f32.mrf.mxu0
      %v3358 = vadd.f32 %v3272, %v3357
      %v3359 = vand.u32 %v746, 4294901760
      %v3360 = vsub.f32 %v746, %v3359
      %v3361 = vand.u32 %v3360, 4294901760
      %3362 = vmatmul.f32.gmra.mxu0 %v3361
      %v3363 = vpop.f32.mrf.mxu0
      %v3364 = vadd.f32 %v3277, %v3363
      %v3365 = vand.u32 %v749, 4294901760
      %v3366 = vsub.f32 %v749, %v3365
      %v3367 = vand.u32 %v3366, 4294901760
      %3368 = vmatmul.f32.gmra.mxu0 %v3367
      %v3369 = vpop.f32.mrf.mxu0
      %v3370 = vadd.f32 %v3282, %v3369
      %v3371 = vand.u32 %v752, 4294901760
      %v3372 = vsub.f32 %v752, %v3371
      %v3373 = vand.u32 %v3372, 4294901760
      %3374 = vmatmul.f32.gmra.mxu0 %v3373
      %v3375 = vpop.f32.mrf.mxu0
      %v3376 = vadd.f32 %v3287, %v3375
      %v3377 = vand.u32 %v755, 4294901760
      %v3378 = vsub.f32 %v755, %v3377
      %v3379 = vand.u32 %v3378, 4294901760
      %3380 = vmatmul.f32.gmra.mxu0 %v3379
      %v3381 = vpop.f32.mrf.mxu0
      %v3382 = vadd.f32 %v3292, %v3381
      %v3383 = vand.u32 %v758, 4294901760
      %v3384 = vsub.f32 %v758, %v3383
      %v3385 = vand.u32 %v3384, 4294901760
      %3386 = vmatmul.f32.gmra.mxu0 %v3385
      %v3387 = vpop.f32.mrf.mxu0
      %v3388 = vadd.f32 %v3297, %v3387
      %v3389 = vand.u32 %v761, 4294901760
      %v3390 = vsub.f32 %v761, %v3389
      %v3391 = vand.u32 %v3390, 4294901760
      %3392 = vmatmul.f32.gmra.mxu0 %v3391
      %v3393 = vpop.f32.mrf.mxu0
      %v3394 = vadd.f32 %v3302, %v3393
      %v3395 = vand.u32 %v764, 4294901760
      %v3396 = vsub.f32 %v764, %v3395
      %v3397 = vand.u32 %v3396, 4294901760
      %3398 = vmatmul.f32.gmra.mxu0 %v3397
      %v3399 = vpop.f32.mrf.mxu0
      %v3400 = vadd.f32 %v3307, %v3399
      %v3401 = vand.u32 %v767, 4294901760
      %v3402 = vsub.f32 %v767, %v3401
      %v3403 = vand.u32 %v3402, 4294901760
      %3404 = vmatmul.f32.gmra.mxu0 %v3403
      %v3405 = vpop.f32.mrf.mxu0
      %v3406 = vadd.f32 %v3312, %v3405
      %v3407 = vand.u32 %v770, 4294901760
      %v3408 = vsub.f32 %v770, %v3407
      %v3409 = vand.u32 %v3408, 4294901760
      %3410 = vmatmul.f32.gmra.mxu0 %v3409
      %v3411 = vpop.f32.mrf.mxu0
      %v3412 = vadd.f32 %v3317, %v3411
      %v3413 = vand.u32 %v773, 4294901760
      %v3414 = vsub.f32 %v773, %v3413
      %v3415 = vand.u32 %v3414, 4294901760
      %3416 = vmatmul.f32.gmra.mxu0 %v3415
      %v3417 = vpop.f32.mrf.mxu0
      %v3418 = vadd.f32 %v3322, %v3417
      %v3419 = vand.u32 %v776, 4294901760
      %v3420 = vsub.f32 %v776, %v3419
      %v3421 = vand.u32 %v3420, 4294901760
      %3422 = vmatmul.f32.gmra.mxu0 %v3421
      %v3423 = vpop.f32.mrf.mxu0
      %v3424 = vadd.f32 %v3327, %v3423
      %v3425 = vand.u32 %v779, 4294901760
      %v3426 = vsub.f32 %v779, %v3425
      %v3427 = vand.u32 %v3426, 4294901760
      %3428 = vmatmul.f32.gmra.mxu0 %v3427
      %v3429 = vpop.f32.mrf.mxu0
      %v3430 = vadd.f32 %v3332, %v3429
      %3431 = vdwg.mxu0
      %3432 = vmatpush.msra.mxu0 0.0
      %3433 = vmatpush.msra.mxu0 0.0
      %3434 = vmatpush.msra.mxu0 0.0
      %3435 = vmatpush.msra.mxu0 0.0
      %3436 = vmatpush.msra.mxu0 0.0
      %3437 = vmatpush.msra.mxu0 0.0
      %3438 = vmatpush.msra.mxu0 0.0
      %3439 = vmatpush.msra.mxu0 0.0
      %3440 = vmatpush.msra.mxu0 0.0
      %3441 = vmatpush.msra.mxu0 0.0
      %3442 = vmatpush.msra.mxu0 0.0
      %3443 = vmatpush.msra.mxu0 0.0
      %3444 = vmatpush.msra.mxu0 0.0
      %v3445 = vand.u32 %v3036, 4294901760
      %v3446 = vsub.f32 %v3036, %v3445
      %v3447 = vand.u32 %v3446, 4294901760
      %3448 = vmatpush.msra.mxu0 %v3447
      %v3449 = vand.u32 %v3033, 4294901760
      %v3450 = vsub.f32 %v3033, %v3449
      %v3451 = vand.u32 %v3450, 4294901760
      %3452 = vmatpush.msra.mxu0 %v3451
      %v3453 = vand.u32 %v3031, 4294901760
      %v3454 = vsub.f32 %v3031, %v3453
      %v3455 = vand.u32 %v3454, 4294901760
      %3456 = vmatpush.msra.mxu0 %v3455
      %v3457 = vand.u32 %v743, 4294901760
      %3458 = vmatmul.f32.gmra.mxu0 %v3457
      %v3459 = vpop.f32.mrf.mxu0
      %v3460 = vadd.f32 %v3358, %v3459
      %v3461 = vand.u32 %v746, 4294901760
      %3462 = vmatmul.f32.gmra.mxu0 %v3461
      %v3463 = vpop.f32.mrf.mxu0
      %v3464 = vadd.f32 %v3364, %v3463
      %v3465 = vand.u32 %v749, 4294901760
      %3466 = vmatmul.f32.gmra.mxu0 %v3465
      %v3467 = vpop.f32.mrf.mxu0
      %v3468 = vadd.f32 %v3370, %v3467
      %v3469 = vand.u32 %v752, 4294901760
      %3470 = vmatmul.f32.gmra.mxu0 %v3469
      %v3471 = vpop.f32.mrf.mxu0
      %v3472 = vadd.f32 %v3376, %v3471
      %v3473 = vand.u32 %v755, 4294901760
      %3474 = vmatmul.f32.gmra.mxu0 %v3473
      %v3475 = vpop.f32.mrf.mxu0
      %v3476 = vadd.f32 %v3382, %v3475
      %v3477 = vand.u32 %v758, 4294901760
      %3478 = vmatmul.f32.gmra.mxu0 %v3477
      %v3479 = vpop.f32.mrf.mxu0
      %v3480 = vadd.f32 %v3388, %v3479
      %v3481 = vand.u32 %v761, 4294901760
      %3482 = vmatmul.f32.gmra.mxu0 %v3481
      %v3483 = vpop.f32.mrf.mxu0
      %v3484 = vadd.f32 %v3394, %v3483
      %v3485 = vand.u32 %v764, 4294901760
      %3486 = vmatmul.f32.gmra.mxu0 %v3485
      %v3487 = vpop.f32.mrf.mxu0
      %v3488 = vadd.f32 %v3400, %v3487
      %v3489 = vand.u32 %v767, 4294901760
      %3490 = vmatmul.f32.gmra.mxu0 %v3489
      %v3491 = vpop.f32.mrf.mxu0
      %v3492 = vadd.f32 %v3406, %v3491
      %v3493 = vand.u32 %v770, 4294901760
      %3494 = vmatmul.f32.gmra.mxu0 %v3493
      %v3495 = vpop.f32.mrf.mxu0
      %v3496 = vadd.f32 %v3412, %v3495
      %v3497 = vand.u32 %v773, 4294901760
      %3498 = vmatmul.f32.gmra.mxu0 %v3497
      %v3499 = vpop.f32.mrf.mxu0
      %v3500 = vadd.f32 %v3418, %v3499
      %v3501 = vand.u32 %v776, 4294901760
      %3502 = vmatmul.f32.gmra.mxu0 %v3501
      %v3503 = vpop.f32.mrf.mxu0
      %v3504 = vadd.f32 %v3424, %v3503
      %v3505 = vand.u32 %v779, 4294901760
      %3506 = vmatmul.f32.gmra.mxu0 %v3505
      %v3507 = vpop.f32.mrf.mxu0
      %v3508 = vadd.f32 %v3430, %v3507
      %3509 = vdwg.mxu0
      %3510 = vmatpush.msra.mxu0 0.0
      %3511 = vmatpush.msra.mxu0 0.0
      %3512 = vmatpush.msra.mxu0 0.0
      %3513 = vmatpush.msra.mxu0 0.0
      %3514 = vmatpush.msra.mxu0 0.0
      %3515 = vmatpush.msra.mxu0 0.0
      %3516 = vmatpush.msra.mxu0 0.0
      %3517 = vmatpush.msra.mxu0 0.0
      %3518 = vmatpush.msra.mxu0 0.0
      %3519 = vmatpush.msra.mxu0 0.0
      %3520 = vmatpush.msra.mxu0 0.0
      %3521 = vmatpush.msra.mxu0 0.0
      %3522 = vmatpush.msra.mxu0 0.0
      %v3523 = vand.u32 %v3036, 4294901760
      %3524 = vmatpush.msra.mxu0 %v3523
      %v3525 = vand.u32 %v3033, 4294901760
      %3526 = vmatpush.msra.mxu0 %v3525
      %v3527 = vand.u32 %v3031, 4294901760
      %3528 = vmatpush.msra.mxu0 %v3527
      %v3529 = vand.u32 %v743, 4294901760
      %3530 = vmatmul.f32.gmra.mxu0 %v3529
      %v3531 = vpop.f32.mrf.mxu0
      %v3532 = vadd.f32 %v3460, %v3531
      %v3533 = vand.u32 %v746, 4294901760
      %3534 = vmatmul.f32.gmra.mxu0 %v3533
      %v3535 = vpop.f32.mrf.mxu0
      %v3536 = vadd.f32 %v3464, %v3535
      %v3537 = vand.u32 %v749, 4294901760
      %3538 = vmatmul.f32.gmra.mxu0 %v3537
      %v3539 = vpop.f32.mrf.mxu0
      %v3540 = vadd.f32 %v3468, %v3539
      %v3541 = vand.u32 %v752, 4294901760
      %3542 = vmatmul.f32.gmra.mxu0 %v3541
      %v3543 = vpop.f32.mrf.mxu0
      %v3544 = vadd.f32 %v3472, %v3543
      %v3545 = vand.u32 %v755, 4294901760
      %3546 = vmatmul.f32.gmra.mxu0 %v3545
      %v3547 = vpop.f32.mrf.mxu0
      %v3548 = vadd.f32 %v3476, %v3547
      %v3549 = vand.u32 %v758, 4294901760
      %3550 = vmatmul.f32.gmra.mxu0 %v3549
      %v3551 = vpop.f32.mrf.mxu0
      %v3552 = vadd.f32 %v3480, %v3551
      %v3553 = vand.u32 %v761, 4294901760
      %3554 = vmatmul.f32.gmra.mxu0 %v3553
      %v3555 = vpop.f32.mrf.mxu0
      %v3556 = vadd.f32 %v3484, %v3555
      %v3557 = vand.u32 %v764, 4294901760
      %3558 = vmatmul.f32.gmra.mxu0 %v3557
      %v3559 = vpop.f32.mrf.mxu0
      %v3560 = vadd.f32 %v3488, %v3559
      %v3561 = vand.u32 %v767, 4294901760
      %3562 = vmatmul.f32.gmra.mxu0 %v3561
      %v3563 = vpop.f32.mrf.mxu0
      %v3564 = vadd.f32 %v3492, %v3563
      %v3565 = vand.u32 %v770, 4294901760
      %3566 = vmatmul.f32.gmra.mxu0 %v3565
      %v3567 = vpop.f32.mrf.mxu0
      %v3568 = vadd.f32 %v3496, %v3567
      %v3569 = vand.u32 %v773, 4294901760
      %3570 = vmatmul.f32.gmra.mxu0 %v3569
      %v3571 = vpop.f32.mrf.mxu0
      %v3572 = vadd.f32 %v3500, %v3571
      %v3573 = vand.u32 %v776, 4294901760
      %3574 = vmatmul.f32.gmra.mxu0 %v3573
      %v3575 = vpop.f32.mrf.mxu0
      %v3576 = vadd.f32 %v3504, %v3575
      %v3577 = vand.u32 %v779, 4294901760
      %3578 = vmatmul.f32.gmra.mxu0 %v3577
      %v3579 = vpop.f32.mrf.mxu0
      %v3580 = vadd.f32 %v3508, %v3579
      %3581 = vdwg.mxu0
      %s3582 = scalar_lea.vmem %s227, 520
      %3583 = vst.msk [vmem:[%s3582] sm:$0xff] %vm307, %v3532
      %3584 = vst.msk [vmem:[%s3582 + $0x8] sm:$0xff] %vm307, %v3536
      %3585 = vst.msk [vmem:[%s3582 + $0x10] sm:$0xff] %vm307, %v3540
      %3586 = vst.msk [vmem:[%s3582 + $0x18] sm:$0xff] %vm307, %v3544
      %3587 = vst.msk [vmem:[%s3582 + $0x20] sm:$0xff] %vm307, %v3548
      %3588 = vst.msk [vmem:[%s3582 + $0x28] sm:$0xff] %vm307, %v3552
      %3589 = vst.msk [vmem:[%s3582 + $0x30] sm:$0xff] %vm307, %v3556
      %3590 = vst.msk [vmem:[%s3582 + $0x38] sm:$0xff] %vm307, %v3560
      %3591 = vst.msk [vmem:[%s3582 + $0x40] sm:$0xff] %vm307, %v3564
      %3592 = vst.msk [vmem:[%s3582 + $0x48] sm:$0xff] %vm307, %v3568
      %3593 = vst.msk [vmem:[%s3582 + $0x50] sm:$0xff] %vm307, %v3572
      %3594 = vst.msk [vmem:[%s3582 + $0x58] sm:$0xff] %vm307, %v3576
      %3595 = vst.msk [vmem:[%s3582 + $0x60] sm:$0xf] %vm320, %v3580
      %s3596 = scalar_lea.vmem %s220, 40
      %v3597 = vld [vmem:[%s3596] sm:$0xff]
      %v3598 = vld [vmem:[%s3596 + $0x8] sm:$0xff]
      %v3599 = vld [vmem:[%s3596 + $0x10] sm:$0xff]
      %v3600 = vld [vmem:[%s3596 + $0x18] sm:$0xff]
      %v3601 = vld [vmem:[%s3596 + $0x20] sm:$0xff]
      %v3603 = vsel %vm494, %v3597, 0
      %v3606 = vsel %vm494, %v3598, 0
      %v3609 = vsel %vm494, %v3599, 0
      %v3612 = vsel %vm494, %v3600, 0
      %v3615 = vsel %vm494, %v3601, 0
      %3617 = vmatpush.msra.mxu0 0.0
      %3618 = vmatpush.msra.mxu0 0.0
      %3619 = vmatpush.msra.mxu0 0.0
      %3620 = vmatpush.msra.mxu0 0.0
      %3621 = vmatpush.msra.mxu0 0.0
      %3622 = vmatpush.msra.mxu0 0.0
      %3623 = vmatpush.msra.mxu0 0.0
      %3624 = vmatpush.msra.mxu0 0.0
      %3625 = vmatpush.msra.mxu0 0.0
      %3626 = vmatpush.msra.mxu0 0.0
      %3627 = vmatpush.msra.mxu0 0.0
      %3628 = vmatpush.msra.mxu0 0.0
      %3629 = vmatpush.msra.mxu0 0.0
      %v3630 = vand.u32 %v506, 4294901760
      %3631 = vmatpush.msra.mxu0 %v3630
      %v3632 = vand.u32 %v412, 4294901760
      %3633 = vmatpush.msra.mxu0 %v3632
      %v3634 = vand.u32 %v411, 4294901760
      %3635 = vmatpush.msra.mxu0 %v3634
      %v3636 = vand.u32 %v3603, 4294901760
      %v3637 = vsub.f32 %v3603, %v3636
      %v3638 = vand.u32 %v3637, 4294901760
      %v3639 = vsub.f32 %v3637, %v3638
      %v3640 = vand.u32 %v3639, 4294901760
      %3641 = vmatmul.f32.gmra.mxu0 %v3640
      %v3642 = vpop.f32.mrf.mxu0
      %v3643 = vadd.f32 0.0, %v3642
      %v3644 = vand.u32 %v3606, 4294901760
      %v3645 = vsub.f32 %v3606, %v3644
      %v3646 = vand.u32 %v3645, 4294901760
      %v3647 = vsub.f32 %v3645, %v3646
      %v3648 = vand.u32 %v3647, 4294901760
      %3649 = vmatmul.f32.gmra.mxu0 %v3648
      %v3650 = vpop.f32.mrf.mxu0
      %v3651 = vadd.f32 0.0, %v3650
      %v3652 = vand.u32 %v3609, 4294901760
      %v3653 = vsub.f32 %v3609, %v3652
      %v3654 = vand.u32 %v3653, 4294901760
      %v3655 = vsub.f32 %v3653, %v3654
      %v3656 = vand.u32 %v3655, 4294901760
      %3657 = vmatmul.f32.gmra.mxu0 %v3656
      %v3658 = vpop.f32.mrf.mxu0
      %v3659 = vadd.f32 0.0, %v3658
      %v3660 = vand.u32 %v3612, 4294901760
      %v3661 = vsub.f32 %v3612, %v3660
      %v3662 = vand.u32 %v3661, 4294901760
      %v3663 = vsub.f32 %v3661, %v3662
      %v3664 = vand.u32 %v3663, 4294901760
      %3665 = vmatmul.f32.gmra.mxu0 %v3664
      %v3666 = vpop.f32.mrf.mxu0
      %v3667 = vadd.f32 0.0, %v3666
      %v3668 = vand.u32 %v3615, 4294901760
      %v3669 = vsub.f32 %v3615, %v3668
      %v3670 = vand.u32 %v3669, 4294901760
      %v3671 = vsub.f32 %v3669, %v3670
      %v3672 = vand.u32 %v3671, 4294901760
      %3673 = vmatmul.f32.gmra.mxu0 %v3672
      %v3674 = vpop.f32.mrf.mxu0
      %v3675 = vadd.f32 0.0, %v3674
      %3676 = vdwg.mxu0
      %3677 = vmatpush.msra.mxu0 0.0
      %3678 = vmatpush.msra.mxu0 0.0
      %3679 = vmatpush.msra.mxu0 0.0
      %3680 = vmatpush.msra.mxu0 0.0
      %3681 = vmatpush.msra.mxu0 0.0
      %3682 = vmatpush.msra.mxu0 0.0
      %3683 = vmatpush.msra.mxu0 0.0
      %3684 = vmatpush.msra.mxu0 0.0
      %3685 = vmatpush.msra.mxu0 0.0
      %3686 = vmatpush.msra.mxu0 0.0
      %3687 = vmatpush.msra.mxu0 0.0
      %3688 = vmatpush.msra.mxu0 0.0
      %3689 = vmatpush.msra.mxu0 0.0
      %v3690 = vand.u32 %v506, 4294901760
      %v3691 = vsub.f32 %v506, %v3690
      %v3692 = vand.u32 %v3691, 4294901760
      %v3693 = vsub.f32 %v3691, %v3692
      %v3694 = vand.u32 %v3693, 4294901760
      %3695 = vmatpush.msra.mxu0 %v3694
      %v3696 = vand.u32 %v412, 4294901760
      %v3697 = vsub.f32 %v412, %v3696
      %v3698 = vand.u32 %v3697, 4294901760
      %v3699 = vsub.f32 %v3697, %v3698
      %v3700 = vand.u32 %v3699, 4294901760
      %3701 = vmatpush.msra.mxu0 %v3700
      %v3702 = vand.u32 %v411, 4294901760
      %v3703 = vsub.f32 %v411, %v3702
      %v3704 = vand.u32 %v3703, 4294901760
      %v3705 = vsub.f32 %v3703, %v3704
      %v3706 = vand.u32 %v3705, 4294901760
      %3707 = vmatpush.msra.mxu0 %v3706
      %v3708 = vand.u32 %v3603, 4294901760
      %3709 = vmatmul.f32.gmra.mxu0 %v3708
      %v3710 = vpop.f32.mrf.mxu0
      %v3711 = vadd.f32 %v3643, %v3710
      %v3712 = vand.u32 %v3606, 4294901760
      %3713 = vmatmul.f32.gmra.mxu0 %v3712
      %v3714 = vpop.f32.mrf.mxu0
      %v3715 = vadd.f32 %v3651, %v3714
      %v3716 = vand.u32 %v3609, 4294901760
      %3717 = vmatmul.f32.gmra.mxu0 %v3716
      %v3718 = vpop.f32.mrf.mxu0
      %v3719 = vadd.f32 %v3659, %v3718
      %v3720 = vand.u32 %v3612, 4294901760
      %3721 = vmatmul.f32.gmra.mxu0 %v3720
      %v3722 = vpop.f32.mrf.mxu0
      %v3723 = vadd.f32 %v3667, %v3722
      %v3724 = vand.u32 %v3615, 4294901760
      %3725 = vmatmul.f32.gmra.mxu0 %v3724
      %v3726 = vpop.f32.mrf.mxu0
      %v3727 = vadd.f32 %v3675, %v3726
      %3728 = vdwg.mxu0
      %3729 = vmatpush.msra.mxu0 0.0
      %3730 = vmatpush.msra.mxu0 0.0
      %3731 = vmatpush.msra.mxu0 0.0
      %3732 = vmatpush.msra.mxu0 0.0
      %3733 = vmatpush.msra.mxu0 0.0
      %3734 = vmatpush.msra.mxu0 0.0
      %3735 = vmatpush.msra.mxu0 0.0
      %3736 = vmatpush.msra.mxu0 0.0
      %3737 = vmatpush.msra.mxu0 0.0
      %3738 = vmatpush.msra.mxu0 0.0
      %3739 = vmatpush.msra.mxu0 0.0
      %3740 = vmatpush.msra.mxu0 0.0
      %3741 = vmatpush.msra.mxu0 0.0
      %v3742 = vand.u32 %v506, 4294901760
      %v3743 = vsub.f32 %v506, %v3742
      %3744 = vmatpush.msra.mxu0 %v3743
      %v3745 = vand.u32 %v412, 4294901760
      %v3746 = vsub.f32 %v412, %v3745
      %3747 = vmatpush.msra.mxu0 %v3746
      %v3748 = vand.u32 %v411, 4294901760
      %v3749 = vsub.f32 %v411, %v3748
      %3750 = vmatpush.msra.mxu0 %v3749
      %v3751 = vand.u32 %v3603, 4294901760
      %v3752 = vsub.f32 %v3603, %v3751
      %3753 = vmatmul.f32.gmra.mxu0 %v3752
      %v3754 = vpop.f32.mrf.mxu0
      %v3755 = vadd.f32 %v3711, %v3754
      %v3756 = vand.u32 %v3606, 4294901760
      %v3757 = vsub.f32 %v3606, %v3756
      %3758 = vmatmul.f32.gmra.mxu0 %v3757
      %v3759 = vpop.f32.mrf.mxu0
      %v3760 = vadd.f32 %v3715, %v3759
      %v3761 = vand.u32 %v3609, 4294901760
      %v3762 = vsub.f32 %v3609, %v3761
      %3763 = vmatmul.f32.gmra.mxu0 %v3762
      %v3764 = vpop.f32.mrf.mxu0
      %v3765 = vadd.f32 %v3719, %v3764
      %v3766 = vand.u32 %v3612, 4294901760
      %v3767 = vsub.f32 %v3612, %v3766
      %3768 = vmatmul.f32.gmra.mxu0 %v3767
      %v3769 = vpop.f32.mrf.mxu0
      %v3770 = vadd.f32 %v3723, %v3769
      %v3771 = vand.u32 %v3615, 4294901760
      %v3772 = vsub.f32 %v3615, %v3771
      %3773 = vmatmul.f32.gmra.mxu0 %v3772
      %v3774 = vpop.f32.mrf.mxu0
      %v3775 = vadd.f32 %v3727, %v3774
      %3776 = vdwg.mxu0
      %3777 = vmatpush.msra.mxu0 0.0
      %3778 = vmatpush.msra.mxu0 0.0
      %3779 = vmatpush.msra.mxu0 0.0
      %3780 = vmatpush.msra.mxu0 0.0
      %3781 = vmatpush.msra.mxu0 0.0
      %3782 = vmatpush.msra.mxu0 0.0
      %3783 = vmatpush.msra.mxu0 0.0
      %3784 = vmatpush.msra.mxu0 0.0
      %3785 = vmatpush.msra.mxu0 0.0
      %3786 = vmatpush.msra.mxu0 0.0
      %3787 = vmatpush.msra.mxu0 0.0
      %3788 = vmatpush.msra.mxu0 0.0
      %3789 = vmatpush.msra.mxu0 0.0
      %v3790 = vand.u32 %v506, 4294901760
      %3791 = vmatpush.msra.mxu0 %v3790
      %v3792 = vand.u32 %v412, 4294901760
      %3793 = vmatpush.msra.mxu0 %v3792
      %v3794 = vand.u32 %v411, 4294901760
      %3795 = vmatpush.msra.mxu0 %v3794
      %v3796 = vand.u32 %v3603, 4294901760
      %v3797 = vsub.f32 %v3603, %v3796
      %v3798 = vand.u32 %v3797, 4294901760
      %3799 = vmatmul.f32.gmra.mxu0 %v3798
      %v3800 = vpop.f32.mrf.mxu0
      %v3801 = vadd.f32 %v3755, %v3800
      %v3802 = vand.u32 %v3606, 4294901760
      %v3803 = vsub.f32 %v3606, %v3802
      %v3804 = vand.u32 %v3803, 4294901760
      %3805 = vmatmul.f32.gmra.mxu0 %v3804
      %v3806 = vpop.f32.mrf.mxu0
      %v3807 = vadd.f32 %v3760, %v3806
      %v3808 = vand.u32 %v3609, 4294901760
      %v3809 = vsub.f32 %v3609, %v3808
      %v3810 = vand.u32 %v3809, 4294901760
      %3811 = vmatmul.f32.gmra.mxu0 %v3810
      %v3812 = vpop.f32.mrf.mxu0
      %v3813 = vadd.f32 %v3765, %v3812
      %v3814 = vand.u32 %v3612, 4294901760
      %v3815 = vsub.f32 %v3612, %v3814
      %v3816 = vand.u32 %v3815, 4294901760
      %3817 = vmatmul.f32.gmra.mxu0 %v3816
      %v3818 = vpop.f32.mrf.mxu0
      %v3819 = vadd.f32 %v3770, %v3818
      %v3820 = vand.u32 %v3615, 4294901760
      %v3821 = vsub.f32 %v3615, %v3820
      %v3822 = vand.u32 %v3821, 4294901760
      %3823 = vmatmul.f32.gmra.mxu0 %v3822
      %v3824 = vpop.f32.mrf.mxu0
      %v3825 = vadd.f32 %v3775, %v3824
      %3826 = vdwg.mxu0
      %3827 = vmatpush.msra.mxu0 0.0
      %3828 = vmatpush.msra.mxu0 0.0
      %3829 = vmatpush.msra.mxu0 0.0
      %3830 = vmatpush.msra.mxu0 0.0
      %3831 = vmatpush.msra.mxu0 0.0
      %3832 = vmatpush.msra.mxu0 0.0
      %3833 = vmatpush.msra.mxu0 0.0
      %3834 = vmatpush.msra.mxu0 0.0
      %3835 = vmatpush.msra.mxu0 0.0
      %3836 = vmatpush.msra.mxu0 0.0
      %3837 = vmatpush.msra.mxu0 0.0
      %3838 = vmatpush.msra.mxu0 0.0
      %3839 = vmatpush.msra.mxu0 0.0
      %v3840 = vand.u32 %v506, 4294901760
      %v3841 = vsub.f32 %v506, %v3840
      %v3842 = vand.u32 %v3841, 4294901760
      %3843 = vmatpush.msra.mxu0 %v3842
      %v3844 = vand.u32 %v412, 4294901760
      %v3845 = vsub.f32 %v412, %v3844
      %v3846 = vand.u32 %v3845, 4294901760
      %3847 = vmatpush.msra.mxu0 %v3846
      %v3848 = vand.u32 %v411, 4294901760
      %v3849 = vsub.f32 %v411, %v3848
      %v3850 = vand.u32 %v3849, 4294901760
      %3851 = vmatpush.msra.mxu0 %v3850
      %v3852 = vand.u32 %v3603, 4294901760
      %3853 = vmatmul.f32.gmra.mxu0 %v3852
      %v3854 = vpop.f32.mrf.mxu0
      %v3855 = vadd.f32 %v3801, %v3854
      %v3856 = vand.u32 %v3606, 4294901760
      %3857 = vmatmul.f32.gmra.mxu0 %v3856
      %v3858 = vpop.f32.mrf.mxu0
      %v3859 = vadd.f32 %v3807, %v3858
      %v3860 = vand.u32 %v3609, 4294901760
      %3861 = vmatmul.f32.gmra.mxu0 %v3860
      %v3862 = vpop.f32.mrf.mxu0
      %v3863 = vadd.f32 %v3813, %v3862
      %v3864 = vand.u32 %v3612, 4294901760
      %3865 = vmatmul.f32.gmra.mxu0 %v3864
      %v3866 = vpop.f32.mrf.mxu0
      %v3867 = vadd.f32 %v3819, %v3866
      %v3868 = vand.u32 %v3615, 4294901760
      %3869 = vmatmul.f32.gmra.mxu0 %v3868
      %v3870 = vpop.f32.mrf.mxu0
      %v3871 = vadd.f32 %v3825, %v3870
      %3872 = vdwg.mxu0
      %3873 = vmatpush.msra.mxu0 0.0
      %3874 = vmatpush.msra.mxu0 0.0
      %3875 = vmatpush.msra.mxu0 0.0
      %3876 = vmatpush.msra.mxu0 0.0
      %3877 = vmatpush.msra.mxu0 0.0
      %3878 = vmatpush.msra.mxu0 0.0
      %3879 = vmatpush.msra.mxu0 0.0
      %3880 = vmatpush.msra.mxu0 0.0
      %3881 = vmatpush.msra.mxu0 0.0
      %3882 = vmatpush.msra.mxu0 0.0
      %3883 = vmatpush.msra.mxu0 0.0
      %3884 = vmatpush.msra.mxu0 0.0
      %3885 = vmatpush.msra.mxu0 0.0
      %v3886 = vand.u32 %v506, 4294901760
      %3887 = vmatpush.msra.mxu0 %v3886
      %v3888 = vand.u32 %v412, 4294901760
      %3889 = vmatpush.msra.mxu0 %v3888
      %v3890 = vand.u32 %v411, 4294901760
      %3891 = vmatpush.msra.mxu0 %v3890
      %v3892 = vand.u32 %v3603, 4294901760
      %3893 = vmatmul.f32.gmra.mxu0 %v3892
      %v3894 = vpop.f32.mrf.mxu0
      %v3895 = vadd.f32 %v3855, %v3894
      %v3896 = vand.u32 %v3606, 4294901760
      %3897 = vmatmul.f32.gmra.mxu0 %v3896
      %v3898 = vpop.f32.mrf.mxu0
      %v3899 = vadd.f32 %v3859, %v3898
      %v3900 = vand.u32 %v3609, 4294901760
      %3901 = vmatmul.f32.gmra.mxu0 %v3900
      %v3902 = vpop.f32.mrf.mxu0
      %v3903 = vadd.f32 %v3863, %v3902
      %v3904 = vand.u32 %v3612, 4294901760
      %3905 = vmatmul.f32.gmra.mxu0 %v3904
      %v3906 = vpop.f32.mrf.mxu0
      %v3907 = vadd.f32 %v3867, %v3906
      %v3908 = vand.u32 %v3615, 4294901760
      %3909 = vmatmul.f32.gmra.mxu0 %v3908
      %v3910 = vpop.f32.mrf.mxu0
      %v3911 = vadd.f32 %v3871, %v3910
      %3912 = vdwg.mxu0
      %v3914 = vsel %vm504, %v3903, 0
      %3916 = vmatpush.msra.mxu0 0.0
      %3917 = vmatpush.msra.mxu0 0.0
      %3918 = vmatpush.msra.mxu0 0.0
      %3919 = vmatpush.msra.mxu0 0.0
      %3920 = vmatpush.msra.mxu0 0.0
      %3921 = vmatpush.msra.mxu0 0.0
      %3922 = vmatpush.msra.mxu0 0.0
      %3923 = vmatpush.msra.mxu0 0.0
      %3924 = vmatpush.msra.mxu0 0.0
      %3925 = vmatpush.msra.mxu0 0.0
      %3926 = vmatpush.msra.mxu0 0.0
      %3927 = vmatpush.msra.mxu0 0.0
      %3928 = vmatpush.msra.mxu0 0.0
      %v3929 = vand.u32 %v3914, 4294901760
      %3930 = vmatpush.msra.mxu0 %v3929
      %v3931 = vand.u32 %v3899, 4294901760
      %3932 = vmatpush.msra.mxu0 %v3931
      %v3933 = vand.u32 %v3895, 4294901760
      %3934 = vmatpush.msra.mxu0 %v3933
      %v3935 = vand.u32 %v743, 4294901760
      %v3936 = vsub.f32 %v743, %v3935
      %v3937 = vand.u32 %v3936, 4294901760
      %v3938 = vsub.f32 %v3936, %v3937
      %v3939 = vand.u32 %v3938, 4294901760
      %3940 = vmatmul.f32.gmra.mxu0 %v3939
      %v3941 = vpop.f32.mrf.mxu0
      %v3942 = vadd.f32 0.0, %v3941
      %v3943 = vand.u32 %v746, 4294901760
      %v3944 = vsub.f32 %v746, %v3943
      %v3945 = vand.u32 %v3944, 4294901760
      %v3946 = vsub.f32 %v3944, %v3945
      %v3947 = vand.u32 %v3946, 4294901760
      %3948 = vmatmul.f32.gmra.mxu0 %v3947
      %v3949 = vpop.f32.mrf.mxu0
      %v3950 = vadd.f32 0.0, %v3949
      %v3951 = vand.u32 %v749, 4294901760
      %v3952 = vsub.f32 %v749, %v3951
      %v3953 = vand.u32 %v3952, 4294901760
      %v3954 = vsub.f32 %v3952, %v3953
      %v3955 = vand.u32 %v3954, 4294901760
      %3956 = vmatmul.f32.gmra.mxu0 %v3955
      %v3957 = vpop.f32.mrf.mxu0
      %v3958 = vadd.f32 0.0, %v3957
      %v3959 = vand.u32 %v752, 4294901760
      %v3960 = vsub.f32 %v752, %v3959
      %v3961 = vand.u32 %v3960, 4294901760
      %v3962 = vsub.f32 %v3960, %v3961
      %v3963 = vand.u32 %v3962, 4294901760
      %3964 = vmatmul.f32.gmra.mxu0 %v3963
      %v3965 = vpop.f32.mrf.mxu0
      %v3966 = vadd.f32 0.0, %v3965
      %v3967 = vand.u32 %v755, 4294901760
      %v3968 = vsub.f32 %v755, %v3967
      %v3969 = vand.u32 %v3968, 4294901760
      %v3970 = vsub.f32 %v3968, %v3969
      %v3971 = vand.u32 %v3970, 4294901760
      %3972 = vmatmul.f32.gmra.mxu0 %v3971
      %v3973 = vpop.f32.mrf.mxu0
      %v3974 = vadd.f32 0.0, %v3973
      %v3975 = vand.u32 %v758, 4294901760
      %v3976 = vsub.f32 %v758, %v3975
      %v3977 = vand.u32 %v3976, 4294901760
      %v3978 = vsub.f32 %v3976, %v3977
      %v3979 = vand.u32 %v3978, 4294901760
      %3980 = vmatmul.f32.gmra.mxu0 %v3979
      %v3981 = vpop.f32.mrf.mxu0
      %v3982 = vadd.f32 0.0, %v3981
      %v3983 = vand.u32 %v761, 4294901760
      %v3984 = vsub.f32 %v761, %v3983
      %v3985 = vand.u32 %v3984, 4294901760
      %v3986 = vsub.f32 %v3984, %v3985
      %v3987 = vand.u32 %v3986, 4294901760
      %3988 = vmatmul.f32.gmra.mxu0 %v3987
      %v3989 = vpop.f32.mrf.mxu0
      %v3990 = vadd.f32 0.0, %v3989
      %v3991 = vand.u32 %v764, 4294901760
      %v3992 = vsub.f32 %v764, %v3991
      %v3993 = vand.u32 %v3992, 4294901760
      %v3994 = vsub.f32 %v3992, %v3993
      %v3995 = vand.u32 %v3994, 4294901760
      %3996 = vmatmul.f32.gmra.mxu0 %v3995
      %v3997 = vpop.f32.mrf.mxu0
      %v3998 = vadd.f32 0.0, %v3997
      %v3999 = vand.u32 %v767, 4294901760
      %v4000 = vsub.f32 %v767, %v3999
      %v4001 = vand.u32 %v4000, 4294901760
      %v4002 = vsub.f32 %v4000, %v4001
      %v4003 = vand.u32 %v4002, 4294901760
      %4004 = vmatmul.f32.gmra.mxu0 %v4003
      %v4005 = vpop.f32.mrf.mxu0
      %v4006 = vadd.f32 0.0, %v4005
      %v4007 = vand.u32 %v770, 4294901760
      %v4008 = vsub.f32 %v770, %v4007
      %v4009 = vand.u32 %v4008, 4294901760
      %v4010 = vsub.f32 %v4008, %v4009
      %v4011 = vand.u32 %v4010, 4294901760
      %4012 = vmatmul.f32.gmra.mxu0 %v4011
      %v4013 = vpop.f32.mrf.mxu0
      %v4014 = vadd.f32 0.0, %v4013
      %v4015 = vand.u32 %v773, 4294901760
      %v4016 = vsub.f32 %v773, %v4015
      %v4017 = vand.u32 %v4016, 4294901760
      %v4018 = vsub.f32 %v4016, %v4017
      %v4019 = vand.u32 %v4018, 4294901760
      %4020 = vmatmul.f32.gmra.mxu0 %v4019
      %v4021 = vpop.f32.mrf.mxu0
      %v4022 = vadd.f32 0.0, %v4021
      %v4023 = vand.u32 %v776, 4294901760
      %v4024 = vsub.f32 %v776, %v4023
      %v4025 = vand.u32 %v4024, 4294901760
      %v4026 = vsub.f32 %v4024, %v4025
      %v4027 = vand.u32 %v4026, 4294901760
      %4028 = vmatmul.f32.gmra.mxu0 %v4027
      %v4029 = vpop.f32.mrf.mxu0
      %v4030 = vadd.f32 0.0, %v4029
      %v4031 = vand.u32 %v779, 4294901760
      %v4032 = vsub.f32 %v779, %v4031
      %v4033 = vand.u32 %v4032, 4294901760
      %v4034 = vsub.f32 %v4032, %v4033
      %v4035 = vand.u32 %v4034, 4294901760
      %4036 = vmatmul.f32.gmra.mxu0 %v4035
      %v4037 = vpop.f32.mrf.mxu0
      %v4038 = vadd.f32 0.0, %v4037
      %4039 = vdwg.mxu0
      %4040 = vmatpush.msra.mxu0 0.0
      %4041 = vmatpush.msra.mxu0 0.0
      %4042 = vmatpush.msra.mxu0 0.0
      %4043 = vmatpush.msra.mxu0 0.0
      %4044 = vmatpush.msra.mxu0 0.0
      %4045 = vmatpush.msra.mxu0 0.0
      %4046 = vmatpush.msra.mxu0 0.0
      %4047 = vmatpush.msra.mxu0 0.0
      %4048 = vmatpush.msra.mxu0 0.0
      %4049 = vmatpush.msra.mxu0 0.0
      %4050 = vmatpush.msra.mxu0 0.0
      %4051 = vmatpush.msra.mxu0 0.0
      %4052 = vmatpush.msra.mxu0 0.0
      %v4053 = vand.u32 %v3914, 4294901760
      %v4054 = vsub.f32 %v3914, %v4053
      %v4055 = vand.u32 %v4054, 4294901760
      %v4056 = vsub.f32 %v4054, %v4055
      %v4057 = vand.u32 %v4056, 4294901760
      %4058 = vmatpush.msra.mxu0 %v4057
      %v4059 = vand.u32 %v3899, 4294901760
      %v4060 = vsub.f32 %v3899, %v4059
      %v4061 = vand.u32 %v4060, 4294901760
      %v4062 = vsub.f32 %v4060, %v4061
      %v4063 = vand.u32 %v4062, 4294901760
      %4064 = vmatpush.msra.mxu0 %v4063
      %v4065 = vand.u32 %v3895, 4294901760
      %v4066 = vsub.f32 %v3895, %v4065
      %v4067 = vand.u32 %v4066, 4294901760
      %v4068 = vsub.f32 %v4066, %v4067
      %v4069 = vand.u32 %v4068, 4294901760
      %4070 = vmatpush.msra.mxu0 %v4069
      %v4071 = vand.u32 %v743, 4294901760
      %4072 = vmatmul.f32.gmra.mxu0 %v4071
      %v4073 = vpop.f32.mrf.mxu0
      %v4074 = vadd.f32 %v3942, %v4073
      %v4075 = vand.u32 %v746, 4294901760
      %4076 = vmatmul.f32.gmra.mxu0 %v4075
      %v4077 = vpop.f32.mrf.mxu0
      %v4078 = vadd.f32 %v3950, %v4077
      %v4079 = vand.u32 %v749, 4294901760
      %4080 = vmatmul.f32.gmra.mxu0 %v4079
      %v4081 = vpop.f32.mrf.mxu0
      %v4082 = vadd.f32 %v3958, %v4081
      %v4083 = vand.u32 %v752, 4294901760
      %4084 = vmatmul.f32.gmra.mxu0 %v4083
      %v4085 = vpop.f32.mrf.mxu0
      %v4086 = vadd.f32 %v3966, %v4085
      %v4087 = vand.u32 %v755, 4294901760
      %4088 = vmatmul.f32.gmra.mxu0 %v4087
      %v4089 = vpop.f32.mrf.mxu0
      %v4090 = vadd.f32 %v3974, %v4089
      %v4091 = vand.u32 %v758, 4294901760
      %4092 = vmatmul.f32.gmra.mxu0 %v4091
      %v4093 = vpop.f32.mrf.mxu0
      %v4094 = vadd.f32 %v3982, %v4093
      %v4095 = vand.u32 %v761, 4294901760
      %4096 = vmatmul.f32.gmra.mxu0 %v4095
      %v4097 = vpop.f32.mrf.mxu0
      %v4098 = vadd.f32 %v3990, %v4097
      %v4099 = vand.u32 %v764, 4294901760
      %4100 = vmatmul.f32.gmra.mxu0 %v4099
      %v4101 = vpop.f32.mrf.mxu0
      %v4102 = vadd.f32 %v3998, %v4101
      %v4103 = vand.u32 %v767, 4294901760
      %4104 = vmatmul.f32.gmra.mxu0 %v4103
      %v4105 = vpop.f32.mrf.mxu0
      %v4106 = vadd.f32 %v4006, %v4105
      %v4107 = vand.u32 %v770, 4294901760
      %4108 = vmatmul.f32.gmra.mxu0 %v4107
      %v4109 = vpop.f32.mrf.mxu0
      %v4110 = vadd.f32 %v4014, %v4109
      %v4111 = vand.u32 %v773, 4294901760
      %4112 = vmatmul.f32.gmra.mxu0 %v4111
      %v4113 = vpop.f32.mrf.mxu0
      %v4114 = vadd.f32 %v4022, %v4113
      %v4115 = vand.u32 %v776, 4294901760
      %4116 = vmatmul.f32.gmra.mxu0 %v4115
      %v4117 = vpop.f32.mrf.mxu0
      %v4118 = vadd.f32 %v4030, %v4117
      %v4119 = vand.u32 %v779, 4294901760
      %4120 = vmatmul.f32.gmra.mxu0 %v4119
      %v4121 = vpop.f32.mrf.mxu0
      %v4122 = vadd.f32 %v4038, %v4121
      %4123 = vdwg.mxu0
      %4124 = vmatpush.msra.mxu0 0.0
      %4125 = vmatpush.msra.mxu0 0.0
      %4126 = vmatpush.msra.mxu0 0.0
      %4127 = vmatpush.msra.mxu0 0.0
      %4128 = vmatpush.msra.mxu0 0.0
      %4129 = vmatpush.msra.mxu0 0.0
      %4130 = vmatpush.msra.mxu0 0.0
      %4131 = vmatpush.msra.mxu0 0.0
      %4132 = vmatpush.msra.mxu0 0.0
      %4133 = vmatpush.msra.mxu0 0.0
      %4134 = vmatpush.msra.mxu0 0.0
      %4135 = vmatpush.msra.mxu0 0.0
      %4136 = vmatpush.msra.mxu0 0.0
      %v4137 = vand.u32 %v3914, 4294901760
      %v4138 = vsub.f32 %v3914, %v4137
      %4139 = vmatpush.msra.mxu0 %v4138
      %v4140 = vand.u32 %v3899, 4294901760
      %v4141 = vsub.f32 %v3899, %v4140
      %4142 = vmatpush.msra.mxu0 %v4141
      %v4143 = vand.u32 %v3895, 4294901760
      %v4144 = vsub.f32 %v3895, %v4143
      %4145 = vmatpush.msra.mxu0 %v4144
      %v4146 = vand.u32 %v743, 4294901760
      %v4147 = vsub.f32 %v743, %v4146
      %4148 = vmatmul.f32.gmra.mxu0 %v4147
      %v4149 = vpop.f32.mrf.mxu0
      %v4150 = vadd.f32 %v4074, %v4149
      %v4151 = vand.u32 %v746, 4294901760
      %v4152 = vsub.f32 %v746, %v4151
      %4153 = vmatmul.f32.gmra.mxu0 %v4152
      %v4154 = vpop.f32.mrf.mxu0
      %v4155 = vadd.f32 %v4078, %v4154
      %v4156 = vand.u32 %v749, 4294901760
      %v4157 = vsub.f32 %v749, %v4156
      %4158 = vmatmul.f32.gmra.mxu0 %v4157
      %v4159 = vpop.f32.mrf.mxu0
      %v4160 = vadd.f32 %v4082, %v4159
      %v4161 = vand.u32 %v752, 4294901760
      %v4162 = vsub.f32 %v752, %v4161
      %4163 = vmatmul.f32.gmra.mxu0 %v4162
      %v4164 = vpop.f32.mrf.mxu0
      %v4165 = vadd.f32 %v4086, %v4164
      %v4166 = vand.u32 %v755, 4294901760
      %v4167 = vsub.f32 %v755, %v4166
      %4168 = vmatmul.f32.gmra.mxu0 %v4167
      %v4169 = vpop.f32.mrf.mxu0
      %v4170 = vadd.f32 %v4090, %v4169
      %v4171 = vand.u32 %v758, 4294901760
      %v4172 = vsub.f32 %v758, %v4171
      %4173 = vmatmul.f32.gmra.mxu0 %v4172
      %v4174 = vpop.f32.mrf.mxu0
      %v4175 = vadd.f32 %v4094, %v4174
      %v4176 = vand.u32 %v761, 4294901760
      %v4177 = vsub.f32 %v761, %v4176
      %4178 = vmatmul.f32.gmra.mxu0 %v4177
      %v4179 = vpop.f32.mrf.mxu0
      %v4180 = vadd.f32 %v4098, %v4179
      %v4181 = vand.u32 %v764, 4294901760
      %v4182 = vsub.f32 %v764, %v4181
      %4183 = vmatmul.f32.gmra.mxu0 %v4182
      %v4184 = vpop.f32.mrf.mxu0
      %v4185 = vadd.f32 %v4102, %v4184
      %v4186 = vand.u32 %v767, 4294901760
      %v4187 = vsub.f32 %v767, %v4186
      %4188 = vmatmul.f32.gmra.mxu0 %v4187
      %v4189 = vpop.f32.mrf.mxu0
      %v4190 = vadd.f32 %v4106, %v4189
      %v4191 = vand.u32 %v770, 4294901760
      %v4192 = vsub.f32 %v770, %v4191
      %4193 = vmatmul.f32.gmra.mxu0 %v4192
      %v4194 = vpop.f32.mrf.mxu0
      %v4195 = vadd.f32 %v4110, %v4194
      %v4196 = vand.u32 %v773, 4294901760
      %v4197 = vsub.f32 %v773, %v4196
      %4198 = vmatmul.f32.gmra.mxu0 %v4197
      %v4199 = vpop.f32.mrf.mxu0
      %v4200 = vadd.f32 %v4114, %v4199
      %v4201 = vand.u32 %v776, 4294901760
      %v4202 = vsub.f32 %v776, %v4201
      %4203 = vmatmul.f32.gmra.mxu0 %v4202
      %v4204 = vpop.f32.mrf.mxu0
      %v4205 = vadd.f32 %v4118, %v4204
      %v4206 = vand.u32 %v779, 4294901760
      %v4207 = vsub.f32 %v779, %v4206
      %4208 = vmatmul.f32.gmra.mxu0 %v4207
      %v4209 = vpop.f32.mrf.mxu0
      %v4210 = vadd.f32 %v4122, %v4209
      %4211 = vdwg.mxu0
      %4212 = vmatpush.msra.mxu0 0.0
      %4213 = vmatpush.msra.mxu0 0.0
      %4214 = vmatpush.msra.mxu0 0.0
      %4215 = vmatpush.msra.mxu0 0.0
      %4216 = vmatpush.msra.mxu0 0.0
      %4217 = vmatpush.msra.mxu0 0.0
      %4218 = vmatpush.msra.mxu0 0.0
      %4219 = vmatpush.msra.mxu0 0.0
      %4220 = vmatpush.msra.mxu0 0.0
      %4221 = vmatpush.msra.mxu0 0.0
      %4222 = vmatpush.msra.mxu0 0.0
      %4223 = vmatpush.msra.mxu0 0.0
      %4224 = vmatpush.msra.mxu0 0.0
      %v4225 = vand.u32 %v3914, 4294901760
      %4226 = vmatpush.msra.mxu0 %v4225
      %v4227 = vand.u32 %v3899, 4294901760
      %4228 = vmatpush.msra.mxu0 %v4227
      %v4229 = vand.u32 %v3895, 4294901760
      %4230 = vmatpush.msra.mxu0 %v4229
      %v4231 = vand.u32 %v743, 4294901760
      %v4232 = vsub.f32 %v743, %v4231
      %v4233 = vand.u32 %v4232, 4294901760
      %4234 = vmatmul.f32.gmra.mxu0 %v4233
      %v4235 = vpop.f32.mrf.mxu0
      %v4236 = vadd.f32 %v4150, %v4235
      %v4237 = vand.u32 %v746, 4294901760
      %v4238 = vsub.f32 %v746, %v4237
      %v4239 = vand.u32 %v4238, 4294901760
      %4240 = vmatmul.f32.gmra.mxu0 %v4239
      %v4241 = vpop.f32.mrf.mxu0
      %v4242 = vadd.f32 %v4155, %v4241
      %v4243 = vand.u32 %v749, 4294901760
      %v4244 = vsub.f32 %v749, %v4243
      %v4245 = vand.u32 %v4244, 4294901760
      %4246 = vmatmul.f32.gmra.mxu0 %v4245
      %v4247 = vpop.f32.mrf.mxu0
      %v4248 = vadd.f32 %v4160, %v4247
      %v4249 = vand.u32 %v752, 4294901760
      %v4250 = vsub.f32 %v752, %v4249
      %v4251 = vand.u32 %v4250, 4294901760
      %4252 = vmatmul.f32.gmra.mxu0 %v4251
      %v4253 = vpop.f32.mrf.mxu0
      %v4254 = vadd.f32 %v4165, %v4253
      %v4255 = vand.u32 %v755, 4294901760
      %v4256 = vsub.f32 %v755, %v4255
      %v4257 = vand.u32 %v4256, 4294901760
      %4258 = vmatmul.f32.gmra.mxu0 %v4257
      %v4259 = vpop.f32.mrf.mxu0
      %v4260 = vadd.f32 %v4170, %v4259
      %v4261 = vand.u32 %v758, 4294901760
      %v4262 = vsub.f32 %v758, %v4261
      %v4263 = vand.u32 %v4262, 4294901760
      %4264 = vmatmul.f32.gmra.mxu0 %v4263
      %v4265 = vpop.f32.mrf.mxu0
      %v4266 = vadd.f32 %v4175, %v4265
      %v4267 = vand.u32 %v761, 4294901760
      %v4268 = vsub.f32 %v761, %v4267
      %v4269 = vand.u32 %v4268, 4294901760
      %4270 = vmatmul.f32.gmra.mxu0 %v4269
      %v4271 = vpop.f32.mrf.mxu0
      %v4272 = vadd.f32 %v4180, %v4271
      %v4273 = vand.u32 %v764, 4294901760
      %v4274 = vsub.f32 %v764, %v4273
      %v4275 = vand.u32 %v4274, 4294901760
      %4276 = vmatmul.f32.gmra.mxu0 %v4275
      %v4277 = vpop.f32.mrf.mxu0
      %v4278 = vadd.f32 %v4185, %v4277
      %v4279 = vand.u32 %v767, 4294901760
      %v4280 = vsub.f32 %v767, %v4279
      %v4281 = vand.u32 %v4280, 4294901760
      %4282 = vmatmul.f32.gmra.mxu0 %v4281
      %v4283 = vpop.f32.mrf.mxu0
      %v4284 = vadd.f32 %v4190, %v4283
      %v4285 = vand.u32 %v770, 4294901760
      %v4286 = vsub.f32 %v770, %v4285
      %v4287 = vand.u32 %v4286, 4294901760
      %4288 = vmatmul.f32.gmra.mxu0 %v4287
      %v4289 = vpop.f32.mrf.mxu0
      %v4290 = vadd.f32 %v4195, %v4289
      %v4291 = vand.u32 %v773, 4294901760
      %v4292 = vsub.f32 %v773, %v4291
      %v4293 = vand.u32 %v4292, 4294901760
      %4294 = vmatmul.f32.gmra.mxu0 %v4293
      %v4295 = vpop.f32.mrf.mxu0
      %v4296 = vadd.f32 %v4200, %v4295
      %v4297 = vand.u32 %v776, 4294901760
      %v4298 = vsub.f32 %v776, %v4297
      %v4299 = vand.u32 %v4298, 4294901760
      %4300 = vmatmul.f32.gmra.mxu0 %v4299
      %v4301 = vpop.f32.mrf.mxu0
      %v4302 = vadd.f32 %v4205, %v4301
      %v4303 = vand.u32 %v779, 4294901760
      %v4304 = vsub.f32 %v779, %v4303
      %v4305 = vand.u32 %v4304, 4294901760
      %4306 = vmatmul.f32.gmra.mxu0 %v4305
      %v4307 = vpop.f32.mrf.mxu0
      %v4308 = vadd.f32 %v4210, %v4307
      %4309 = vdwg.mxu0
      %4310 = vmatpush.msra.mxu0 0.0
      %4311 = vmatpush.msra.mxu0 0.0
      %4312 = vmatpush.msra.mxu0 0.0
      %4313 = vmatpush.msra.mxu0 0.0
      %4314 = vmatpush.msra.mxu0 0.0
      %4315 = vmatpush.msra.mxu0 0.0
      %4316 = vmatpush.msra.mxu0 0.0
      %4317 = vmatpush.msra.mxu0 0.0
      %4318 = vmatpush.msra.mxu0 0.0
      %4319 = vmatpush.msra.mxu0 0.0
      %4320 = vmatpush.msra.mxu0 0.0
      %4321 = vmatpush.msra.mxu0 0.0
      %4322 = vmatpush.msra.mxu0 0.0
      %v4323 = vand.u32 %v3914, 4294901760
      %v4324 = vsub.f32 %v3914, %v4323
      %v4325 = vand.u32 %v4324, 4294901760
      %4326 = vmatpush.msra.mxu0 %v4325
      %v4327 = vand.u32 %v3899, 4294901760
      %v4328 = vsub.f32 %v3899, %v4327
      %v4329 = vand.u32 %v4328, 4294901760
      %4330 = vmatpush.msra.mxu0 %v4329
      %v4331 = vand.u32 %v3895, 4294901760
      %v4332 = vsub.f32 %v3895, %v4331
      %v4333 = vand.u32 %v4332, 4294901760
      %4334 = vmatpush.msra.mxu0 %v4333
      %v4335 = vand.u32 %v743, 4294901760
      %4336 = vmatmul.f32.gmra.mxu0 %v4335
      %v4337 = vpop.f32.mrf.mxu0
      %v4338 = vadd.f32 %v4236, %v4337
      %v4339 = vand.u32 %v746, 4294901760
      %4340 = vmatmul.f32.gmra.mxu0 %v4339
      %v4341 = vpop.f32.mrf.mxu0
      %v4342 = vadd.f32 %v4242, %v4341
      %v4343 = vand.u32 %v749, 4294901760
      %4344 = vmatmul.f32.gmra.mxu0 %v4343
      %v4345 = vpop.f32.mrf.mxu0
      %v4346 = vadd.f32 %v4248, %v4345
      %v4347 = vand.u32 %v752, 4294901760
      %4348 = vmatmul.f32.gmra.mxu0 %v4347
      %v4349 = vpop.f32.mrf.mxu0
      %v4350 = vadd.f32 %v4254, %v4349
      %v4351 = vand.u32 %v755, 4294901760
      %4352 = vmatmul.f32.gmra.mxu0 %v4351
      %v4353 = vpop.f32.mrf.mxu0
      %v4354 = vadd.f32 %v4260, %v4353
      %v4355 = vand.u32 %v758, 4294901760
      %4356 = vmatmul.f32.gmra.mxu0 %v4355
      %v4357 = vpop.f32.mrf.mxu0
      %v4358 = vadd.f32 %v4266, %v4357
      %v4359 = vand.u32 %v761, 4294901760
      %4360 = vmatmul.f32.gmra.mxu0 %v4359
      %v4361 = vpop.f32.mrf.mxu0
      %v4362 = vadd.f32 %v4272, %v4361
      %v4363 = vand.u32 %v764, 4294901760
      %4364 = vmatmul.f32.gmra.mxu0 %v4363
      %v4365 = vpop.f32.mrf.mxu0
      %v4366 = vadd.f32 %v4278, %v4365
      %v4367 = vand.u32 %v767, 4294901760
      %4368 = vmatmul.f32.gmra.mxu0 %v4367
      %v4369 = vpop.f32.mrf.mxu0
      %v4370 = vadd.f32 %v4284, %v4369
      %v4371 = vand.u32 %v770, 4294901760
      %4372 = vmatmul.f32.gmra.mxu0 %v4371
      %v4373 = vpop.f32.mrf.mxu0
      %v4374 = vadd.f32 %v4290, %v4373
      %v4375 = vand.u32 %v773, 4294901760
      %4376 = vmatmul.f32.gmra.mxu0 %v4375
      %v4377 = vpop.f32.mrf.mxu0
      %v4378 = vadd.f32 %v4296, %v4377
      %v4379 = vand.u32 %v776, 4294901760
      %4380 = vmatmul.f32.gmra.mxu0 %v4379
      %v4381 = vpop.f32.mrf.mxu0
      %v4382 = vadd.f32 %v4302, %v4381
      %v4383 = vand.u32 %v779, 4294901760
      %4384 = vmatmul.f32.gmra.mxu0 %v4383
      %v4385 = vpop.f32.mrf.mxu0
      %v4386 = vadd.f32 %v4308, %v4385
      %4387 = vdwg.mxu0
      %4388 = vmatpush.msra.mxu0 0.0
      %4389 = vmatpush.msra.mxu0 0.0
      %4390 = vmatpush.msra.mxu0 0.0
      %4391 = vmatpush.msra.mxu0 0.0
      %4392 = vmatpush.msra.mxu0 0.0
      %4393 = vmatpush.msra.mxu0 0.0
      %4394 = vmatpush.msra.mxu0 0.0
      %4395 = vmatpush.msra.mxu0 0.0
      %4396 = vmatpush.msra.mxu0 0.0
      %4397 = vmatpush.msra.mxu0 0.0
      %4398 = vmatpush.msra.mxu0 0.0
      %4399 = vmatpush.msra.mxu0 0.0
      %4400 = vmatpush.msra.mxu0 0.0
      %v4401 = vand.u32 %v3914, 4294901760
      %4402 = vmatpush.msra.mxu0 %v4401
      %v4403 = vand.u32 %v3899, 4294901760
      %4404 = vmatpush.msra.mxu0 %v4403
      %v4405 = vand.u32 %v3895, 4294901760
      %4406 = vmatpush.msra.mxu0 %v4405
      %v4407 = vand.u32 %v743, 4294901760
      %4408 = vmatmul.f32.gmra.mxu0 %v4407
      %v4409 = vpop.f32.mrf.mxu0
      %v4410 = vadd.f32 %v4338, %v4409
      %v4411 = vand.u32 %v746, 4294901760
      %4412 = vmatmul.f32.gmra.mxu0 %v4411
      %v4413 = vpop.f32.mrf.mxu0
      %v4414 = vadd.f32 %v4342, %v4413
      %v4415 = vand.u32 %v749, 4294901760
      %4416 = vmatmul.f32.gmra.mxu0 %v4415
      %v4417 = vpop.f32.mrf.mxu0
      %v4418 = vadd.f32 %v4346, %v4417
      %v4419 = vand.u32 %v752, 4294901760
      %4420 = vmatmul.f32.gmra.mxu0 %v4419
      %v4421 = vpop.f32.mrf.mxu0
      %v4422 = vadd.f32 %v4350, %v4421
      %v4423 = vand.u32 %v755, 4294901760
      %4424 = vmatmul.f32.gmra.mxu0 %v4423
      %v4425 = vpop.f32.mrf.mxu0
      %v4426 = vadd.f32 %v4354, %v4425
      %v4427 = vand.u32 %v758, 4294901760
      %4428 = vmatmul.f32.gmra.mxu0 %v4427
      %v4429 = vpop.f32.mrf.mxu0
      %v4430 = vadd.f32 %v4358, %v4429
      %v4431 = vand.u32 %v761, 4294901760
      %4432 = vmatmul.f32.gmra.mxu0 %v4431
      %v4433 = vpop.f32.mrf.mxu0
      %v4434 = vadd.f32 %v4362, %v4433
      %v4435 = vand.u32 %v764, 4294901760
      %4436 = vmatmul.f32.gmra.mxu0 %v4435
      %v4437 = vpop.f32.mrf.mxu0
      %v4438 = vadd.f32 %v4366, %v4437
      %v4439 = vand.u32 %v767, 4294901760
      %4440 = vmatmul.f32.gmra.mxu0 %v4439
      %v4441 = vpop.f32.mrf.mxu0
      %v4442 = vadd.f32 %v4370, %v4441
      %v4443 = vand.u32 %v770, 4294901760
      %4444 = vmatmul.f32.gmra.mxu0 %v4443
      %v4445 = vpop.f32.mrf.mxu0
      %v4446 = vadd.f32 %v4374, %v4445
      %v4447 = vand.u32 %v773, 4294901760
      %4448 = vmatmul.f32.gmra.mxu0 %v4447
      %v4449 = vpop.f32.mrf.mxu0
      %v4450 = vadd.f32 %v4378, %v4449
      %v4451 = vand.u32 %v776, 4294901760
      %4452 = vmatmul.f32.gmra.mxu0 %v4451
      %v4453 = vpop.f32.mrf.mxu0
      %v4454 = vadd.f32 %v4382, %v4453
      %v4455 = vand.u32 %v779, 4294901760
      %4456 = vmatmul.f32.gmra.mxu0 %v4455
      %v4457 = vpop.f32.mrf.mxu0
      %v4458 = vadd.f32 %v4386, %v4457
      %4459 = vdwg.mxu0
      %s4460 = scalar_lea.vmem %s227, 1040
      %4461 = vst.msk [vmem:[%s4460] sm:$0xff] %vm307, %v4410
      %4462 = vst.msk [vmem:[%s4460 + $0x8] sm:$0xff] %vm307, %v4414
      %4463 = vst.msk [vmem:[%s4460 + $0x10] sm:$0xff] %vm307, %v4418
      %4464 = vst.msk [vmem:[%s4460 + $0x18] sm:$0xff] %vm307, %v4422
      %4465 = vst.msk [vmem:[%s4460 + $0x20] sm:$0xff] %vm307, %v4426
      %4466 = vst.msk [vmem:[%s4460 + $0x28] sm:$0xff] %vm307, %v4430
      %4467 = vst.msk [vmem:[%s4460 + $0x30] sm:$0xff] %vm307, %v4434
      %4468 = vst.msk [vmem:[%s4460 + $0x38] sm:$0xff] %vm307, %v4438
      %4469 = vst.msk [vmem:[%s4460 + $0x40] sm:$0xff] %vm307, %v4442
      %4470 = vst.msk [vmem:[%s4460 + $0x48] sm:$0xff] %vm307, %v4446
      %4471 = vst.msk [vmem:[%s4460 + $0x50] sm:$0xff] %vm307, %v4450
      %4472 = vst.msk [vmem:[%s4460 + $0x58] sm:$0xff] %vm307, %v4454
      %4473 = vst.msk [vmem:[%s4460 + $0x60] sm:$0xf] %vm320, %v4458
      %v4476 = vrot.slane %v3903, 4
      %v4477 = vrot.slane %v3907, 4
      %v4478 = vsel %vm504, %v4476, %v4477
      %v4479 = vrot.slane %v3911, 4
      %v4480 = vsel %vm504, %v4477, %v4479
      %v4483 = vsel %vm504, %v4479, 0
      %4485 = vmatpush.msra.mxu0 0.0
      %4486 = vmatpush.msra.mxu0 0.0
      %4487 = vmatpush.msra.mxu0 0.0
      %4488 = vmatpush.msra.mxu0 0.0
      %4489 = vmatpush.msra.mxu0 0.0
      %4490 = vmatpush.msra.mxu0 0.0
      %4491 = vmatpush.msra.mxu0 0.0
      %4492 = vmatpush.msra.mxu0 0.0
      %4493 = vmatpush.msra.mxu0 0.0
      %4494 = vmatpush.msra.mxu0 0.0
      %4495 = vmatpush.msra.mxu0 0.0
      %4496 = vmatpush.msra.mxu0 0.0
      %4497 = vmatpush.msra.mxu0 0.0
      %v4498 = vand.u32 %v4483, 4294901760
      %4499 = vmatpush.msra.mxu0 %v4498
      %v4500 = vand.u32 %v4480, 4294901760
      %4501 = vmatpush.msra.mxu0 %v4500
      %v4502 = vand.u32 %v4478, 4294901760
      %4503 = vmatpush.msra.mxu0 %v4502
      %v4504 = vand.u32 %v743, 4294901760
      %v4505 = vsub.f32 %v743, %v4504
      %v4506 = vand.u32 %v4505, 4294901760
      %v4507 = vsub.f32 %v4505, %v4506
      %v4508 = vand.u32 %v4507, 4294901760
      %4509 = vmatmul.f32.gmra.mxu0 %v4508
      %v4510 = vpop.f32.mrf.mxu0
      %v4511 = vadd.f32 0.0, %v4510
      %v4512 = vand.u32 %v746, 4294901760
      %v4513 = vsub.f32 %v746, %v4512
      %v4514 = vand.u32 %v4513, 4294901760
      %v4515 = vsub.f32 %v4513, %v4514
      %v4516 = vand.u32 %v4515, 4294901760
      %4517 = vmatmul.f32.gmra.mxu0 %v4516
      %v4518 = vpop.f32.mrf.mxu0
      %v4519 = vadd.f32 0.0, %v4518
      %v4520 = vand.u32 %v749, 4294901760
      %v4521 = vsub.f32 %v749, %v4520
      %v4522 = vand.u32 %v4521, 4294901760
      %v4523 = vsub.f32 %v4521, %v4522
      %v4524 = vand.u32 %v4523, 4294901760
      %4525 = vmatmul.f32.gmra.mxu0 %v4524
      %v4526 = vpop.f32.mrf.mxu0
      %v4527 = vadd.f32 0.0, %v4526
      %v4528 = vand.u32 %v752, 4294901760
      %v4529 = vsub.f32 %v752, %v4528
      %v4530 = vand.u32 %v4529, 4294901760
      %v4531 = vsub.f32 %v4529, %v4530
      %v4532 = vand.u32 %v4531, 4294901760
      %4533 = vmatmul.f32.gmra.mxu0 %v4532
      %v4534 = vpop.f32.mrf.mxu0
      %v4535 = vadd.f32 0.0, %v4534
      %v4536 = vand.u32 %v755, 4294901760
      %v4537 = vsub.f32 %v755, %v4536
      %v4538 = vand.u32 %v4537, 4294901760
      %v4539 = vsub.f32 %v4537, %v4538
      %v4540 = vand.u32 %v4539, 4294901760
      %4541 = vmatmul.f32.gmra.mxu0 %v4540
      %v4542 = vpop.f32.mrf.mxu0
      %v4543 = vadd.f32 0.0, %v4542
      %v4544 = vand.u32 %v758, 4294901760
      %v4545 = vsub.f32 %v758, %v4544
      %v4546 = vand.u32 %v4545, 4294901760
      %v4547 = vsub.f32 %v4545, %v4546
      %v4548 = vand.u32 %v4547, 4294901760
      %4549 = vmatmul.f32.gmra.mxu0 %v4548
      %v4550 = vpop.f32.mrf.mxu0
      %v4551 = vadd.f32 0.0, %v4550
      %v4552 = vand.u32 %v761, 4294901760
      %v4553 = vsub.f32 %v761, %v4552
      %v4554 = vand.u32 %v4553, 4294901760
      %v4555 = vsub.f32 %v4553, %v4554
      %v4556 = vand.u32 %v4555, 4294901760
      %4557 = vmatmul.f32.gmra.mxu0 %v4556
      %v4558 = vpop.f32.mrf.mxu0
      %v4559 = vadd.f32 0.0, %v4558
      %v4560 = vand.u32 %v764, 4294901760
      %v4561 = vsub.f32 %v764, %v4560
      %v4562 = vand.u32 %v4561, 4294901760
      %v4563 = vsub.f32 %v4561, %v4562
      %v4564 = vand.u32 %v4563, 4294901760
      %4565 = vmatmul.f32.gmra.mxu0 %v4564
      %v4566 = vpop.f32.mrf.mxu0
      %v4567 = vadd.f32 0.0, %v4566
      %v4568 = vand.u32 %v767, 4294901760
      %v4569 = vsub.f32 %v767, %v4568
      %v4570 = vand.u32 %v4569, 4294901760
      %v4571 = vsub.f32 %v4569, %v4570
      %v4572 = vand.u32 %v4571, 4294901760
      %4573 = vmatmul.f32.gmra.mxu0 %v4572
      %v4574 = vpop.f32.mrf.mxu0
      %v4575 = vadd.f32 0.0, %v4574
      %v4576 = vand.u32 %v770, 4294901760
      %v4577 = vsub.f32 %v770, %v4576
      %v4578 = vand.u32 %v4577, 4294901760
      %v4579 = vsub.f32 %v4577, %v4578
      %v4580 = vand.u32 %v4579, 4294901760
      %4581 = vmatmul.f32.gmra.mxu0 %v4580
      %v4582 = vpop.f32.mrf.mxu0
      %v4583 = vadd.f32 0.0, %v4582
      %v4584 = vand.u32 %v773, 4294901760
      %v4585 = vsub.f32 %v773, %v4584
      %v4586 = vand.u32 %v4585, 4294901760
      %v4587 = vsub.f32 %v4585, %v4586
      %v4588 = vand.u32 %v4587, 4294901760
      %4589 = vmatmul.f32.gmra.mxu0 %v4588
      %v4590 = vpop.f32.mrf.mxu0
      %v4591 = vadd.f32 0.0, %v4590
      %v4592 = vand.u32 %v776, 4294901760
      %v4593 = vsub.f32 %v776, %v4592
      %v4594 = vand.u32 %v4593, 4294901760
      %v4595 = vsub.f32 %v4593, %v4594
      %v4596 = vand.u32 %v4595, 4294901760
      %4597 = vmatmul.f32.gmra.mxu0 %v4596
      %v4598 = vpop.f32.mrf.mxu0
      %v4599 = vadd.f32 0.0, %v4598
      %v4600 = vand.u32 %v779, 4294901760
      %v4601 = vsub.f32 %v779, %v4600
      %v4602 = vand.u32 %v4601, 4294901760
      %v4603 = vsub.f32 %v4601, %v4602
      %v4604 = vand.u32 %v4603, 4294901760
      %4605 = vmatmul.f32.gmra.mxu0 %v4604
      %v4606 = vpop.f32.mrf.mxu0
      %v4607 = vadd.f32 0.0, %v4606
      %4608 = vdwg.mxu0
      %4609 = vmatpush.msra.mxu0 0.0
      %4610 = vmatpush.msra.mxu0 0.0
      %4611 = vmatpush.msra.mxu0 0.0
      %4612 = vmatpush.msra.mxu0 0.0
      %4613 = vmatpush.msra.mxu0 0.0
      %4614 = vmatpush.msra.mxu0 0.0
      %4615 = vmatpush.msra.mxu0 0.0
      %4616 = vmatpush.msra.mxu0 0.0
      %4617 = vmatpush.msra.mxu0 0.0
      %4618 = vmatpush.msra.mxu0 0.0
      %4619 = vmatpush.msra.mxu0 0.0
      %4620 = vmatpush.msra.mxu0 0.0
      %4621 = vmatpush.msra.mxu0 0.0
      %v4622 = vand.u32 %v4483, 4294901760
      %v4623 = vsub.f32 %v4483, %v4622
      %v4624 = vand.u32 %v4623, 4294901760
      %v4625 = vsub.f32 %v4623, %v4624
      %v4626 = vand.u32 %v4625, 4294901760
      %4627 = vmatpush.msra.mxu0 %v4626
      %v4628 = vand.u32 %v4480, 4294901760
      %v4629 = vsub.f32 %v4480, %v4628
      %v4630 = vand.u32 %v4629, 4294901760
      %v4631 = vsub.f32 %v4629, %v4630
      %v4632 = vand.u32 %v4631, 4294901760
      %4633 = vmatpush.msra.mxu0 %v4632
      %v4634 = vand.u32 %v4478, 4294901760
      %v4635 = vsub.f32 %v4478, %v4634
      %v4636 = vand.u32 %v4635, 4294901760
      %v4637 = vsub.f32 %v4635, %v4636
      %v4638 = vand.u32 %v4637, 4294901760
      %4639 = vmatpush.msra.mxu0 %v4638
      %v4640 = vand.u32 %v743, 4294901760
      %4641 = vmatmul.f32.gmra.mxu0 %v4640
      %v4642 = vpop.f32.mrf.mxu0
      %v4643 = vadd.f32 %v4511, %v4642
      %v4644 = vand.u32 %v746, 4294901760
      %4645 = vmatmul.f32.gmra.mxu0 %v4644
      %v4646 = vpop.f32.mrf.mxu0
      %v4647 = vadd.f32 %v4519, %v4646
      %v4648 = vand.u32 %v749, 4294901760
      %4649 = vmatmul.f32.gmra.mxu0 %v4648
      %v4650 = vpop.f32.mrf.mxu0
      %v4651 = vadd.f32 %v4527, %v4650
      %v4652 = vand.u32 %v752, 4294901760
      %4653 = vmatmul.f32.gmra.mxu0 %v4652
      %v4654 = vpop.f32.mrf.mxu0
      %v4655 = vadd.f32 %v4535, %v4654
      %v4656 = vand.u32 %v755, 4294901760
      %4657 = vmatmul.f32.gmra.mxu0 %v4656
      %v4658 = vpop.f32.mrf.mxu0
      %v4659 = vadd.f32 %v4543, %v4658
      %v4660 = vand.u32 %v758, 4294901760
      %4661 = vmatmul.f32.gmra.mxu0 %v4660
      %v4662 = vpop.f32.mrf.mxu0
      %v4663 = vadd.f32 %v4551, %v4662
      %v4664 = vand.u32 %v761, 4294901760
      %4665 = vmatmul.f32.gmra.mxu0 %v4664
      %v4666 = vpop.f32.mrf.mxu0
      %v4667 = vadd.f32 %v4559, %v4666
      %v4668 = vand.u32 %v764, 4294901760
      %4669 = vmatmul.f32.gmra.mxu0 %v4668
      %v4670 = vpop.f32.mrf.mxu0
      %v4671 = vadd.f32 %v4567, %v4670
      %v4672 = vand.u32 %v767, 4294901760
      %4673 = vmatmul.f32.gmra.mxu0 %v4672
      %v4674 = vpop.f32.mrf.mxu0
      %v4675 = vadd.f32 %v4575, %v4674
      %v4676 = vand.u32 %v770, 4294901760
      %4677 = vmatmul.f32.gmra.mxu0 %v4676
      %v4678 = vpop.f32.mrf.mxu0
      %v4679 = vadd.f32 %v4583, %v4678
      %v4680 = vand.u32 %v773, 4294901760
      %4681 = vmatmul.f32.gmra.mxu0 %v4680
      %v4682 = vpop.f32.mrf.mxu0
      %v4683 = vadd.f32 %v4591, %v4682
      %v4684 = vand.u32 %v776, 4294901760
      %4685 = vmatmul.f32.gmra.mxu0 %v4684
      %v4686 = vpop.f32.mrf.mxu0
      %v4687 = vadd.f32 %v4599, %v4686
      %v4688 = vand.u32 %v779, 4294901760
      %4689 = vmatmul.f32.gmra.mxu0 %v4688
      %v4690 = vpop.f32.mrf.mxu0
      %v4691 = vadd.f32 %v4607, %v4690
      %4692 = vdwg.mxu0
      %4693 = vmatpush.msra.mxu0 0.0
      %4694 = vmatpush.msra.mxu0 0.0
      %4695 = vmatpush.msra.mxu0 0.0
      %4696 = vmatpush.msra.mxu0 0.0
      %4697 = vmatpush.msra.mxu0 0.0
      %4698 = vmatpush.msra.mxu0 0.0
      %4699 = vmatpush.msra.mxu0 0.0
      %4700 = vmatpush.msra.mxu0 0.0
      %4701 = vmatpush.msra.mxu0 0.0
      %4702 = vmatpush.msra.mxu0 0.0
      %4703 = vmatpush.msra.mxu0 0.0
      %4704 = vmatpush.msra.mxu0 0.0
      %4705 = vmatpush.msra.mxu0 0.0
      %v4706 = vand.u32 %v4483, 4294901760
      %v4707 = vsub.f32 %v4483, %v4706
      %4708 = vmatpush.msra.mxu0 %v4707
      %v4709 = vand.u32 %v4480, 4294901760
      %v4710 = vsub.f32 %v4480, %v4709
      %4711 = vmatpush.msra.mxu0 %v4710
      %v4712 = vand.u32 %v4478, 4294901760
      %v4713 = vsub.f32 %v4478, %v4712
      %4714 = vmatpush.msra.mxu0 %v4713
      %v4715 = vand.u32 %v743, 4294901760
      %v4716 = vsub.f32 %v743, %v4715
      %4717 = vmatmul.f32.gmra.mxu0 %v4716
      %v4718 = vpop.f32.mrf.mxu0
      %v4719 = vadd.f32 %v4643, %v4718
      %v4720 = vand.u32 %v746, 4294901760
      %v4721 = vsub.f32 %v746, %v4720
      %4722 = vmatmul.f32.gmra.mxu0 %v4721
      %v4723 = vpop.f32.mrf.mxu0
      %v4724 = vadd.f32 %v4647, %v4723
      %v4725 = vand.u32 %v749, 4294901760
      %v4726 = vsub.f32 %v749, %v4725
      %4727 = vmatmul.f32.gmra.mxu0 %v4726
      %v4728 = vpop.f32.mrf.mxu0
      %v4729 = vadd.f32 %v4651, %v4728
      %v4730 = vand.u32 %v752, 4294901760
      %v4731 = vsub.f32 %v752, %v4730
      %4732 = vmatmul.f32.gmra.mxu0 %v4731
      %v4733 = vpop.f32.mrf.mxu0
      %v4734 = vadd.f32 %v4655, %v4733
      %v4735 = vand.u32 %v755, 4294901760
      %v4736 = vsub.f32 %v755, %v4735
      %4737 = vmatmul.f32.gmra.mxu0 %v4736
      %v4738 = vpop.f32.mrf.mxu0
      %v4739 = vadd.f32 %v4659, %v4738
      %v4740 = vand.u32 %v758, 4294901760
      %v4741 = vsub.f32 %v758, %v4740
      %4742 = vmatmul.f32.gmra.mxu0 %v4741
      %v4743 = vpop.f32.mrf.mxu0
      %v4744 = vadd.f32 %v4663, %v4743
      %v4745 = vand.u32 %v761, 4294901760
      %v4746 = vsub.f32 %v761, %v4745
      %4747 = vmatmul.f32.gmra.mxu0 %v4746
      %v4748 = vpop.f32.mrf.mxu0
      %v4749 = vadd.f32 %v4667, %v4748
      %v4750 = vand.u32 %v764, 4294901760
      %v4751 = vsub.f32 %v764, %v4750
      %4752 = vmatmul.f32.gmra.mxu0 %v4751
      %v4753 = vpop.f32.mrf.mxu0
      %v4754 = vadd.f32 %v4671, %v4753
      %v4755 = vand.u32 %v767, 4294901760
      %v4756 = vsub.f32 %v767, %v4755
      %4757 = vmatmul.f32.gmra.mxu0 %v4756
      %v4758 = vpop.f32.mrf.mxu0
      %v4759 = vadd.f32 %v4675, %v4758
      %v4760 = vand.u32 %v770, 4294901760
      %v4761 = vsub.f32 %v770, %v4760
      %4762 = vmatmul.f32.gmra.mxu0 %v4761
      %v4763 = vpop.f32.mrf.mxu0
      %v4764 = vadd.f32 %v4679, %v4763
      %v4765 = vand.u32 %v773, 4294901760
      %v4766 = vsub.f32 %v773, %v4765
      %4767 = vmatmul.f32.gmra.mxu0 %v4766
      %v4768 = vpop.f32.mrf.mxu0
      %v4769 = vadd.f32 %v4683, %v4768
      %v4770 = vand.u32 %v776, 4294901760
      %v4771 = vsub.f32 %v776, %v4770
      %4772 = vmatmul.f32.gmra.mxu0 %v4771
      %v4773 = vpop.f32.mrf.mxu0
      %v4774 = vadd.f32 %v4687, %v4773
      %v4775 = vand.u32 %v779, 4294901760
      %v4776 = vsub.f32 %v779, %v4775
      %4777 = vmatmul.f32.gmra.mxu0 %v4776
      %v4778 = vpop.f32.mrf.mxu0
      %v4779 = vadd.f32 %v4691, %v4778
      %4780 = vdwg.mxu0
      %4781 = vmatpush.msra.mxu0 0.0
      %4782 = vmatpush.msra.mxu0 0.0
      %4783 = vmatpush.msra.mxu0 0.0
      %4784 = vmatpush.msra.mxu0 0.0
      %4785 = vmatpush.msra.mxu0 0.0
      %4786 = vmatpush.msra.mxu0 0.0
      %4787 = vmatpush.msra.mxu0 0.0
      %4788 = vmatpush.msra.mxu0 0.0
      %4789 = vmatpush.msra.mxu0 0.0
      %4790 = vmatpush.msra.mxu0 0.0
      %4791 = vmatpush.msra.mxu0 0.0
      %4792 = vmatpush.msra.mxu0 0.0
      %4793 = vmatpush.msra.mxu0 0.0
      %v4794 = vand.u32 %v4483, 4294901760
      %4795 = vmatpush.msra.mxu0 %v4794
      %v4796 = vand.u32 %v4480, 4294901760
      %4797 = vmatpush.msra.mxu0 %v4796
      %v4798 = vand.u32 %v4478, 4294901760
      %4799 = vmatpush.msra.mxu0 %v4798
      %v4800 = vand.u32 %v743, 4294901760
      %v4801 = vsub.f32 %v743, %v4800
      %v4802 = vand.u32 %v4801, 4294901760
      %4803 = vmatmul.f32.gmra.mxu0 %v4802
      %v4804 = vpop.f32.mrf.mxu0
      %v4805 = vadd.f32 %v4719, %v4804
      %v4806 = vand.u32 %v746, 4294901760
      %v4807 = vsub.f32 %v746, %v4806
      %v4808 = vand.u32 %v4807, 4294901760
      %4809 = vmatmul.f32.gmra.mxu0 %v4808
      %v4810 = vpop.f32.mrf.mxu0
      %v4811 = vadd.f32 %v4724, %v4810
      %v4812 = vand.u32 %v749, 4294901760
      %v4813 = vsub.f32 %v749, %v4812
      %v4814 = vand.u32 %v4813, 4294901760
      %4815 = vmatmul.f32.gmra.mxu0 %v4814
      %v4816 = vpop.f32.mrf.mxu0
      %v4817 = vadd.f32 %v4729, %v4816
      %v4818 = vand.u32 %v752, 4294901760
      %v4819 = vsub.f32 %v752, %v4818
      %v4820 = vand.u32 %v4819, 4294901760
      %4821 = vmatmul.f32.gmra.mxu0 %v4820
      %v4822 = vpop.f32.mrf.mxu0
      %v4823 = vadd.f32 %v4734, %v4822
      %v4824 = vand.u32 %v755, 4294901760
      %v4825 = vsub.f32 %v755, %v4824
      %v4826 = vand.u32 %v4825, 4294901760
      %4827 = vmatmul.f32.gmra.mxu0 %v4826
      %v4828 = vpop.f32.mrf.mxu0
      %v4829 = vadd.f32 %v4739, %v4828
      %v4830 = vand.u32 %v758, 4294901760
      %v4831 = vsub.f32 %v758, %v4830
      %v4832 = vand.u32 %v4831, 4294901760
      %4833 = vmatmul.f32.gmra.mxu0 %v4832
      %v4834 = vpop.f32.mrf.mxu0
      %v4835 = vadd.f32 %v4744, %v4834
      %v4836 = vand.u32 %v761, 4294901760
      %v4837 = vsub.f32 %v761, %v4836
      %v4838 = vand.u32 %v4837, 4294901760
      %4839 = vmatmul.f32.gmra.mxu0 %v4838
      %v4840 = vpop.f32.mrf.mxu0
      %v4841 = vadd.f32 %v4749, %v4840
      %v4842 = vand.u32 %v764, 4294901760
      %v4843 = vsub.f32 %v764, %v4842
      %v4844 = vand.u32 %v4843, 4294901760
      %4845 = vmatmul.f32.gmra.mxu0 %v4844
      %v4846 = vpop.f32.mrf.mxu0
      %v4847 = vadd.f32 %v4754, %v4846
      %v4848 = vand.u32 %v767, 4294901760
      %v4849 = vsub.f32 %v767, %v4848
      %v4850 = vand.u32 %v4849, 4294901760
      %4851 = vmatmul.f32.gmra.mxu0 %v4850
      %v4852 = vpop.f32.mrf.mxu0
      %v4853 = vadd.f32 %v4759, %v4852
      %v4854 = vand.u32 %v770, 4294901760
      %v4855 = vsub.f32 %v770, %v4854
      %v4856 = vand.u32 %v4855, 4294901760
      %4857 = vmatmul.f32.gmra.mxu0 %v4856
      %v4858 = vpop.f32.mrf.mxu0
      %v4859 = vadd.f32 %v4764, %v4858
      %v4860 = vand.u32 %v773, 4294901760
      %v4861 = vsub.f32 %v773, %v4860
      %v4862 = vand.u32 %v4861, 4294901760
      %4863 = vmatmul.f32.gmra.mxu0 %v4862
      %v4864 = vpop.f32.mrf.mxu0
      %v4865 = vadd.f32 %v4769, %v4864
      %v4866 = vand.u32 %v776, 4294901760
      %v4867 = vsub.f32 %v776, %v4866
      %v4868 = vand.u32 %v4867, 4294901760
      %4869 = vmatmul.f32.gmra.mxu0 %v4868
      %v4870 = vpop.f32.mrf.mxu0
      %v4871 = vadd.f32 %v4774, %v4870
      %v4872 = vand.u32 %v779, 4294901760
      %v4873 = vsub.f32 %v779, %v4872
      %v4874 = vand.u32 %v4873, 4294901760
      %4875 = vmatmul.f32.gmra.mxu0 %v4874
      %v4876 = vpop.f32.mrf.mxu0
      %v4877 = vadd.f32 %v4779, %v4876
      %4878 = vdwg.mxu0
      %4879 = vmatpush.msra.mxu0 0.0
      %4880 = vmatpush.msra.mxu0 0.0
      %4881 = vmatpush.msra.mxu0 0.0
      %4882 = vmatpush.msra.mxu0 0.0
      %4883 = vmatpush.msra.mxu0 0.0
      %4884 = vmatpush.msra.mxu0 0.0
      %4885 = vmatpush.msra.mxu0 0.0
      %4886 = vmatpush.msra.mxu0 0.0
      %4887 = vmatpush.msra.mxu0 0.0
      %4888 = vmatpush.msra.mxu0 0.0
      %4889 = vmatpush.msra.mxu0 0.0
      %4890 = vmatpush.msra.mxu0 0.0
      %4891 = vmatpush.msra.mxu0 0.0
      %v4892 = vand.u32 %v4483, 4294901760
      %v4893 = vsub.f32 %v4483, %v4892
      %v4894 = vand.u32 %v4893, 4294901760
      %4895 = vmatpush.msra.mxu0 %v4894
      %v4896 = vand.u32 %v4480, 4294901760
      %v4897 = vsub.f32 %v4480, %v4896
      %v4898 = vand.u32 %v4897, 4294901760
      %4899 = vmatpush.msra.mxu0 %v4898
      %v4900 = vand.u32 %v4478, 4294901760
      %v4901 = vsub.f32 %v4478, %v4900
      %v4902 = vand.u32 %v4901, 4294901760
      %4903 = vmatpush.msra.mxu0 %v4902
      %v4904 = vand.u32 %v743, 4294901760
      %4905 = vmatmul.f32.gmra.mxu0 %v4904
      %v4906 = vpop.f32.mrf.mxu0
      %v4907 = vadd.f32 %v4805, %v4906
      %v4908 = vand.u32 %v746, 4294901760
      %4909 = vmatmul.f32.gmra.mxu0 %v4908
      %v4910 = vpop.f32.mrf.mxu0
      %v4911 = vadd.f32 %v4811, %v4910
      %v4912 = vand.u32 %v749, 4294901760
      %4913 = vmatmul.f32.gmra.mxu0 %v4912
      %v4914 = vpop.f32.mrf.mxu0
      %v4915 = vadd.f32 %v4817, %v4914
      %v4916 = vand.u32 %v752, 4294901760
      %4917 = vmatmul.f32.gmra.mxu0 %v4916
      %v4918 = vpop.f32.mrf.mxu0
      %v4919 = vadd.f32 %v4823, %v4918
      %v4920 = vand.u32 %v755, 4294901760
      %4921 = vmatmul.f32.gmra.mxu0 %v4920
      %v4922 = vpop.f32.mrf.mxu0
      %v4923 = vadd.f32 %v4829, %v4922
      %v4924 = vand.u32 %v758, 4294901760
      %4925 = vmatmul.f32.gmra.mxu0 %v4924
      %v4926 = vpop.f32.mrf.mxu0
      %v4927 = vadd.f32 %v4835, %v4926
      %v4928 = vand.u32 %v761, 4294901760
      %4929 = vmatmul.f32.gmra.mxu0 %v4928
      %v4930 = vpop.f32.mrf.mxu0
      %v4931 = vadd.f32 %v4841, %v4930
      %v4932 = vand.u32 %v764, 4294901760
      %4933 = vmatmul.f32.gmra.mxu0 %v4932
      %v4934 = vpop.f32.mrf.mxu0
      %v4935 = vadd.f32 %v4847, %v4934
      %v4936 = vand.u32 %v767, 4294901760
      %4937 = vmatmul.f32.gmra.mxu0 %v4936
      %v4938 = vpop.f32.mrf.mxu0
      %v4939 = vadd.f32 %v4853, %v4938
      %v4940 = vand.u32 %v770, 4294901760
      %4941 = vmatmul.f32.gmra.mxu0 %v4940
      %v4942 = vpop.f32.mrf.mxu0
      %v4943 = vadd.f32 %v4859, %v4942
      %v4944 = vand.u32 %v773, 4294901760
      %4945 = vmatmul.f32.gmra.mxu0 %v4944
      %v4946 = vpop.f32.mrf.mxu0
      %v4947 = vadd.f32 %v4865, %v4946
      %v4948 = vand.u32 %v776, 4294901760
      %4949 = vmatmul.f32.gmra.mxu0 %v4948
      %v4950 = vpop.f32.mrf.mxu0
      %v4951 = vadd.f32 %v4871, %v4950
      %v4952 = vand.u32 %v779, 4294901760
      %4953 = vmatmul.f32.gmra.mxu0 %v4952
      %v4954 = vpop.f32.mrf.mxu0
      %v4955 = vadd.f32 %v4877, %v4954
      %4956 = vdwg.mxu0
      %4957 = vmatpush.msra.mxu0 0.0
      %4958 = vmatpush.msra.mxu0 0.0
      %4959 = vmatpush.msra.mxu0 0.0
      %4960 = vmatpush.msra.mxu0 0.0
      %4961 = vmatpush.msra.mxu0 0.0
      %4962 = vmatpush.msra.mxu0 0.0
      %4963 = vmatpush.msra.mxu0 0.0
      %4964 = vmatpush.msra.mxu0 0.0
      %4965 = vmatpush.msra.mxu0 0.0
      %4966 = vmatpush.msra.mxu0 0.0
      %4967 = vmatpush.msra.mxu0 0.0
      %4968 = vmatpush.msra.mxu0 0.0
      %4969 = vmatpush.msra.mxu0 0.0
      %v4970 = vand.u32 %v4483, 4294901760
      %4971 = vmatpush.msra.mxu0 %v4970
      %v4972 = vand.u32 %v4480, 4294901760
      %4973 = vmatpush.msra.mxu0 %v4972
      %v4974 = vand.u32 %v4478, 4294901760
      %4975 = vmatpush.msra.mxu0 %v4974
      %v4976 = vand.u32 %v743, 4294901760
      %4977 = vmatmul.f32.gmra.mxu0 %v4976
      %v4978 = vpop.f32.mrf.mxu0
      %v4979 = vadd.f32 %v4907, %v4978
      %v4980 = vand.u32 %v746, 4294901760
      %4981 = vmatmul.f32.gmra.mxu0 %v4980
      %v4982 = vpop.f32.mrf.mxu0
      %v4983 = vadd.f32 %v4911, %v4982
      %v4984 = vand.u32 %v749, 4294901760
      %4985 = vmatmul.f32.gmra.mxu0 %v4984
      %v4986 = vpop.f32.mrf.mxu0
      %v4987 = vadd.f32 %v4915, %v4986
      %v4988 = vand.u32 %v752, 4294901760
      %4989 = vmatmul.f32.gmra.mxu0 %v4988
      %v4990 = vpop.f32.mrf.mxu0
      %v4991 = vadd.f32 %v4919, %v4990
      %v4992 = vand.u32 %v755, 4294901760
      %4993 = vmatmul.f32.gmra.mxu0 %v4992
      %v4994 = vpop.f32.mrf.mxu0
      %v4995 = vadd.f32 %v4923, %v4994
      %v4996 = vand.u32 %v758, 4294901760
      %4997 = vmatmul.f32.gmra.mxu0 %v4996
      %v4998 = vpop.f32.mrf.mxu0
      %v4999 = vadd.f32 %v4927, %v4998
      %v5000 = vand.u32 %v761, 4294901760
      %5001 = vmatmul.f32.gmra.mxu0 %v5000
      %v5002 = vpop.f32.mrf.mxu0
      %v5003 = vadd.f32 %v4931, %v5002
      %v5004 = vand.u32 %v764, 4294901760
      %5005 = vmatmul.f32.gmra.mxu0 %v5004
      %v5006 = vpop.f32.mrf.mxu0
      %v5007 = vadd.f32 %v4935, %v5006
      %v5008 = vand.u32 %v767, 4294901760
      %5009 = vmatmul.f32.gmra.mxu0 %v5008
      %v5010 = vpop.f32.mrf.mxu0
      %v5011 = vadd.f32 %v4939, %v5010
      %v5012 = vand.u32 %v770, 4294901760
      %5013 = vmatmul.f32.gmra.mxu0 %v5012
      %v5014 = vpop.f32.mrf.mxu0
      %v5015 = vadd.f32 %v4943, %v5014
      %v5016 = vand.u32 %v773, 4294901760
      %5017 = vmatmul.f32.gmra.mxu0 %v5016
      %v5018 = vpop.f32.mrf.mxu0
      %v5019 = vadd.f32 %v4947, %v5018
      %v5020 = vand.u32 %v776, 4294901760
      %5021 = vmatmul.f32.gmra.mxu0 %v5020
      %v5022 = vpop.f32.mrf.mxu0
      %v5023 = vadd.f32 %v4951, %v5022
      %v5024 = vand.u32 %v779, 4294901760
      %5025 = vmatmul.f32.gmra.mxu0 %v5024
      %v5026 = vpop.f32.mrf.mxu0
      %v5027 = vadd.f32 %v4955, %v5026
      %5028 = vdwg.mxu0
      %s5029 = scalar_lea.vmem %s227, 1144
      %5030 = vst.msk [vmem:[%s5029] sm:$0xff] %vm307, %v4979
      %5031 = vst.msk [vmem:[%s5029 + $0x8] sm:$0xff] %vm307, %v4983
      %5032 = vst.msk [vmem:[%s5029 + $0x10] sm:$0xff] %vm307, %v4987
      %5033 = vst.msk [vmem:[%s5029 + $0x18] sm:$0xff] %vm307, %v4991
      %5034 = vst.msk [vmem:[%s5029 + $0x20] sm:$0xff] %vm307, %v4995
      %5035 = vst.msk [vmem:[%s5029 + $0x28] sm:$0xff] %vm307, %v4999
      %5036 = vst.msk [vmem:[%s5029 + $0x30] sm:$0xff] %vm307, %v5003
      %5037 = vst.msk [vmem:[%s5029 + $0x38] sm:$0xff] %vm307, %v5007
      %5038 = vst.msk [vmem:[%s5029 + $0x40] sm:$0xff] %vm307, %v5011
      %5039 = vst.msk [vmem:[%s5029 + $0x48] sm:$0xff] %vm307, %v5015
      %5040 = vst.msk [vmem:[%s5029 + $0x50] sm:$0xff] %vm307, %v5019
      %5041 = vst.msk [vmem:[%s5029 + $0x58] sm:$0xff] %vm307, %v5023
      %5042 = vst.msk [vmem:[%s5029 + $0x60] sm:$0xf] %vm320, %v5027
      %s5043 = smul.u32 2, %s14
      %p5044 = scmp.lt.s32.totalorder %s5043, 3
      %s5045 = scalar_select %p5044, %s5043, 3
      %s5046 = smul.addr %s5045, 78
      %s5047 = smul.addr %s5046, 8
      %s5048 = scalar_lea.vmem %s3, %s5047
      // Predicated region
      $region33: #{features2task_tensors.1} parent=31 // pred_check
        %p5049 = pneg %p110
      $region34: #{features2task_tensors.1} parent=31 // pred_check_branch
        %5051 = sbr.rel (%p5049) target = $region36
      $region35: #{features2task_tensors.1} parent=31 // pred_region
        %s5052 = smul.u32 2, %s14
      $region36: #{features2task_tensors.1} parent=31 // pred_fallthru
        _
    $region32: #{features2task_tensors.1} parent=5 // pred_fallthru
      _
    %p5053 = scmp.le.s32.totalorder 2, %s9
    // Predicated region
    $region37: #{features2task_tensors.1} parent=5 // pred_check
      %p5054 = pneg %p5053
    $region38: #{features2task_tensors.1} parent=5 // pred_check_branch
      %5056 = sbr.rel (%p5054) target = $region40
    $region39: #{features2task_tensors.1} parent=5 // pred_region
      %s5057 = ssub.s32 %s9, 2
      // Predicated region
      $region41: #{features2task_tensors.1} parent=39 // pred_check
        %p5058 = pneg %p116
      $region42: #{features2task_tensors.1} parent=39 // pred_check_branch
        %5060 = sbr.rel (%p5058) target = $region44
      $region43: #{features2task_tensors.1} parent=39 // pred_region
        %s5061 = smul.u32 2, %s15
        %p5062 = scmp.lt.s32.totalorder %s5061, 3
        %s5063 = scalar_select %p5062, %s5061, 3
        %s5064 = smul.addr %s5063, 78
        %s5065 = smul.addr %s5064, 8
        %s5066 = scalar_lea.vmem %s3, %s5065
      $region44: #{features2task_tensors.1} parent=39 // pred_fallthru
        _
    $region40: #{features2task_tensors.1} parent=5 // pred_fallthru
      _
  $region6: #{features2task_tensors.1} parent=0 // loop_footer
    %s13 = sadd.s32 1, %s9
  $region7: #{features2task_tensors.1} parent=0 // loop_footer_branch
    %8 = sbr.rel target = $region3
  $region8: #{features2task_tensors.1} parent=0 // loop_exit
    _

</llo_original>
